<compile_context>
chip_gen: v7x
topology: tpu7x:2x2x1
jax: 0.10.0
libtpu: 0.0.40
codegen_flags: <defaults>
</compile_context>

<pallas_src>
import functools

import jax
import jax.numpy as jnp
from jax.experimental import pallas as pl
from jax.experimental.pallas import tpu as pltpu


B_TILE = 8  # images per grid step (multiple of 8 -> dense sublane tiles)


# ----------------------------- Pallas kernel -------------------------------
def _conv_gap_head_kernel(xf_ref, w_ref, b_ref, msk_ref, fcw_ref, fcb_ref,
                          o_ref, *, H, W):
    # xf_ref : (1, B, LPAD)  flattened zero-padded images, bf16
    # w_ref  : (C, 9)        conv weights (BN scale folded), taps on lanes, f32
    # b_ref  : (C, 1)        fused bias = conv_bias*bn_scale + bn_shift
    # msk_ref: (1, L)        1.0 for real conv outputs, 0.0 for wrap-around cols
    # fcw_ref: (C, 128)      classifier weights with 1/(H*W) folded, lane-padded
    # fcb_ref: (1, 128)      classifier bias, lane-padded
    # o_ref  : (B, 128)      padded logits for this block of images
    W2 = W + 2
    L = H * W2                                       # flattened tap-window length
    B = o_ref.shape[0]

    x = xf_ref[0].astype(jnp.float32)                # (B, LPAD): f32 for VPU math
    bias = b_ref[...]                                # (C, 1)
    msk = msk_ref[...]                               # (1, L)
    fcw = fcw_ref[...]                               # (C, 128)
    w_cols = [w_ref[:, t:t + 1] for t in range(9)]   # 9 x (C, 1)

    # 9 shifted windows of the flattened padded image, shared by all images in
    # the block (lane-offset slices; no im2col materialisation).
    offs = [di * W2 + dj for di in range(3) for dj in range(3)]
    wins = [x[:, off:off + L] for off in offs]       # 9 x (B, L)

    rows = []
    for b in range(B):                               # static unroll, B = 8
        # Conv as 9 VPU broadcast-FMAs: (C,1) * (1,L) -> (C,L), native bcasts.
        feat = w_cols[0] * wins[0][b:b + 1]
        for t in range(1, 9):
            feat = feat + w_cols[t] * wins[t][b:b + 1]
        feat = jnp.maximum(feat + bias, 0.0) * msk   # fused bias + ReLU + mask
        pooled = jnp.sum(feat, axis=1, keepdims=True)              # (C, 1) GAP sum
        # Head for this image: sum_c pooled[c] * fcw[c, :]  -> (1, 128).
        rows.append(jnp.sum(pooled * fcw, axis=0, keepdims=True))
    logits = jnp.concatenate(rows, axis=0) + fcb_ref[...]          # (B, 128)
    o_ref[...] = logits.astype(o_ref.dtype)


# ------------------------------- wrapper ------------------------------------
def timm_model_simple_forward(img_nchw, params):
    """img_nchw: (N, 1, H, W) float32 (PyTorch layout). Returns (N, num_classes)."""
    w_conv, b_conv, bn_scale, bn_shift, fc_w, fc_b = params
    N, Cin, H, W = img_nchw.shape
    assert Cin == 1, "kernel specialised for in_chans=1 (module default)"
    C = w_conv.shape[-1]
    NCLS = fc_w.shape[-1]
    NCLSP = 128                       # lane-dense classifier width

    W2 = W + 2
    L = H * W2                        # flattened tap-window length
    LP = (H + 2) * W2                 # flattened padded-image length
    LPAD = LP + W2                    # + one zero row so every tap window is in-bounds

    # ---- constant folding (trace time, outside the kernel hot path) -------
    w_kern = (w_conv * bn_scale).T.astype(jnp.float32)              # (C, 9)
    b_kern = (b_conv * bn_scale + bn_shift).reshape(C, 1).astype(jnp.float32)
    fcw_pad = jnp.zeros((C, NCLSP), jnp.float32).at[:, :NCLS].set(
        fc_w.astype(jnp.float32) / float(H * W))                    # fold mean-pool scale
    fcb_pad = jnp.zeros((1, NCLSP), jnp.float32).at[:, :NCLS].set(
        fc_b.astype(jnp.float32).reshape(1, NCLS))
    # Valid-column mask: flattened position l = h*W2 + j is a real conv output
    # iff j < W (columns j in {W, W+1} are wrap-around junk, excluded from GAP).
    col = jnp.arange(L, dtype=jnp.int32) % W2
    msk = (col < W).astype(jnp.float32).reshape(1, L)

    # ---- batch-block, pad once, flatten, stream as bf16 -------------------
    n_blk = pl.cdiv(N, B_TILE)
    n_pad = n_blk * B_TILE
    xp = jnp.pad(img_nchw[:, 0], ((0, n_pad - N), (1, 1), (1, 1)))  # (n_pad, H+2, W+2)
    xf = jnp.pad(xp.reshape(n_pad, LP), ((0, 0), (0, LPAD - LP)))
    xf = xf.astype(jnp.bfloat16).reshape(n_blk, B_TILE, LPAD)       # lane-dense bf16 stream

    # TODO(synk): for real timm inputs (e.g. 224x224) row-tile the spatial axis
    # with a 1-pixel halo and accumulate the pooled sum in a VMEM scratch over
    # an inner "arbitrary" grid axis (pl.when init/finalize); re-derive the
    # tile for v7x's 64 MiB VMEM and raise vmem_limit_bytes on v5e (16 MiB
    # default scoped limit).  At 16x16 one 8-image block fits with huge margin.
    kernel = functools.partial(_conv_gap_head_kernel, H=H, W=W)
    out = pl.pallas_call(
        kernel,
        out_shape=jax.ShapeDtypeStruct((n_pad, NCLSP), jnp.float32),
        grid=(n_blk,),
        in_specs=[
            pl.BlockSpec((1, B_TILE, LPAD), lambda n: (n, 0, 0)),   # flattened images
            pl.BlockSpec((C, 9), lambda n: (0, 0)),                 # folded conv W
            pl.BlockSpec((C, 1), lambda n: (0, 0)),                 # fused bias
            pl.BlockSpec((1, L), lambda n: (0, 0)),                 # valid-column mask
            pl.BlockSpec((C, NCLSP), lambda n: (0, 0)),             # folded fc W
            pl.BlockSpec((1, NCLSP), lambda n: (0, 0)),             # fc bias (padded)
        ],
        out_specs=pl.BlockSpec((B_TILE, NCLSP), lambda n: (n, 0)),
        compiler_params=pltpu.CompilerParams(
            dimension_semantics=("parallel",)),                     # shard steps on v7x
    )(xf, w_kern, b_kern, msk, fcw_pad, fcb_pad)
    return out[:N, :NCLS]


# ----------------------------- parameter init ------------------------------
def init_params(key, in_chans=1, hidden=32, num_classes=3, kh=3, kw=3):
    k1, k2, k3, k4 = jax.random.split(key, 4)
    K = kh * kw * in_chans
    w_conv = (jax.random.normal(k1, (K, hidden), jnp.float32)
              * (1.0 / jnp.sqrt(K)))
    b_conv = jnp.zeros((1, hidden), jnp.float32)
    # BatchNorm in inference mode with deterministic running stats:
    # scale = gamma / sqrt(var + eps), shift = beta - mean * scale
    gamma = jnp.ones((hidden,), jnp.float32)
    beta = jnp.zeros((hidden,), jnp.float32)
    run_mean = 0.01 * jax.random.normal(k2, (hidden,), jnp.float32)
    run_var = jnp.ones((hidden,), jnp.float32)
    eps = 1e-5
    bn_scale = (gamma / jnp.sqrt(run_var + eps)).reshape(1, hidden)
    bn_shift = (beta - run_mean * bn_scale[0]).reshape(1, hidden)
    fc_w = (jax.random.normal(k3, (hidden, num_classes), jnp.float32)
            * (1.0 / jnp.sqrt(hidden)))
    fc_b = jax.random.normal(k4, (1, num_classes), jnp.float32) * 0.01
    return (w_conv, b_conv, bn_scale, bn_shift, fc_w, fc_b)


# ----------------------------- pure-JAX reference --------------------------
def reference_forward(img_nchw, params):
    w_conv, b_conv, bn_scale, bn_shift, fc_w, fc_b = params
    N, Cin, H, W = img_nchw.shape
    xp = jnp.pad(img_nchw[:, 0], ((0, 0), (1, 1), (1, 1)))
    taps = jnp.stack([xp[:, di:di + H, dj:dj + W]
                      for di in range(3) for dj in range(3)], axis=-1)
    patches = taps.reshape(N, H * W, 9 * Cin)
    feat = jnp.einsum('nhk,kc->nhc', patches, w_conv) + b_conv[None]
    feat = feat * bn_scale[None] + bn_shift[None]
    feat = jnp.maximum(feat, 0.0)
    pooled = jnp.mean(feat, axis=1)
    return pooled @ fc_w + fc_b


if __name__ == "__main__":
    # Small shapes consistent with the module: in_chans=1, 16x16 images,
    # hidden=32, num_classes=3; N=16 -> 2 batch-blocked grid steps.
    N, Cin, H, W = 16, 1, 16, 16
    num_classes = 3

    key = jax.random.PRNGKey(0)
    kimg, kparam = jax.random.split(key)
    img = jax.random.normal(kimg, (N, Cin, H, W), jnp.float32)
    params = init_params(kparam, in_chans=Cin, hidden=32,
                         num_classes=num_classes)

    out = jax.block_until_ready(timm_model_simple_forward(img, params))
    ref = reference_forward(img, params)

    assert out.shape == (N, num_classes), out.shape
    # bf16 HBM activation stream -> small, intentional quantisation error vs
    # the f32 reference.
    assert jnp.allclose(out, ref, atol=1e-2, rtol=1e-2), (out, ref)

    print("KERNEL_OK")
</pallas_src>

<mosaic_0001>
module attributes {stable_mosaic.version = 11 : i64} {
  func.func @_conv_gap_head_kernel(%arg0: i32, %arg1: memref<1x8x342xbf16, #tpu.memory_space<vmem>>, %arg2: memref<32x9xf32, #tpu.memory_space<vmem>>, %arg3: memref<32x1xf32, #tpu.memory_space<vmem>>, %arg4: memref<1x288xf32, #tpu.memory_space<vmem>>, %arg5: memref<32x128xf32, #tpu.memory_space<vmem>>, %arg6: memref<1x128xf32, #tpu.memory_space<vmem>>, %arg7: memref<8x128xf32, #tpu.memory_space<vmem>>) attributes {dimension_semantics = [#tpu.dimension_semantics<parallel>], iteration_bounds = array<i64: 2>, scalar_prefetch = 0 : i64, scratch_operands = 0 : i64, tpu.core_type = #tpu.core_type<tc>, window_params = [{transform_indices = @transform_0, window_bounds = array<i64: 1, 8, 342>}, {pipeline_mode = #tpu.pipeline_mode<synchronous>, transform_indices = @transform_1, window_bounds = array<i64: 32, 9>}, {pipeline_mode = #tpu.pipeline_mode<synchronous>, transform_indices = @transform_2, window_bounds = array<i64: 32, 1>}, {pipeline_mode = #tpu.pipeline_mode<synchronous>, transform_indices = @transform_3, window_bounds = array<i64: 1, 288>}, {pipeline_mode = #tpu.pipeline_mode<synchronous>, transform_indices = @transform_4, window_bounds = array<i64: 32, 128>}, {pipeline_mode = #tpu.pipeline_mode<synchronous>, transform_indices = @transform_5, window_bounds = array<i64: 1, 128>}, {transform_indices = @transform_6, window_bounds = array<i64: 8, 128>}]} {
    %c0 = arith.constant 0 : index
    %c0_0 = arith.constant 0 : index
    %c0_1 = arith.constant 0 : index
    %0 = vector.load %arg1[%c0, %c0_0, %c0_1] : memref<1x8x342xbf16, #tpu.memory_space<vmem>>, vector<1x8x342xbf16>
    %1 = vector.shape_cast %0 : vector<1x8x342xbf16> to vector<8x342xbf16>
    %2 = arith.extf %1 : vector<8x342xbf16> to vector<8x342xf32>
    %c0_2 = arith.constant 0 : index
    %c0_3 = arith.constant 0 : index
    %3 = vector.load %arg3[%c0_2, %c0_3] : memref<32x1xf32, #tpu.memory_space<vmem>>, vector<32x1xf32>
    %c0_4 = arith.constant 0 : index
    %c0_5 = arith.constant 0 : index
    %4 = vector.load %arg4[%c0_4, %c0_5] : memref<1x288xf32, #tpu.memory_space<vmem>>, vector<1x288xf32>
    %c0_6 = arith.constant 0 : index
    %c0_7 = arith.constant 0 : index
    %5 = vector.load %arg5[%c0_6, %c0_7] : memref<32x128xf32, #tpu.memory_space<vmem>>, vector<32x128xf32>
    %c0_8 = arith.constant 0 : index
    %c0_9 = arith.constant 0 : index
    %6 = vector.load %arg2[%c0_8, %c0_9] : memref<32x9xf32, #tpu.memory_space<vmem>>, vector<32x1xf32>
    %c0_10 = arith.constant 0 : index
    %c1 = arith.constant 1 : index
    %7 = vector.load %arg2[%c0_10, %c1] : memref<32x9xf32, #tpu.memory_space<vmem>>, vector<32x1xf32>
    %c0_11 = arith.constant 0 : index
    %c2 = arith.constant 2 : index
    %8 = vector.load %arg2[%c0_11, %c2] : memref<32x9xf32, #tpu.memory_space<vmem>>, vector<32x1xf32>
    %c0_12 = arith.constant 0 : index
    %c3 = arith.constant 3 : index
    %9 = vector.load %arg2[%c0_12, %c3] : memref<32x9xf32, #tpu.memory_space<vmem>>, vector<32x1xf32>
    %c0_13 = arith.constant 0 : index
    %c4 = arith.constant 4 : index
    %10 = vector.load %arg2[%c0_13, %c4] : memref<32x9xf32, #tpu.memory_space<vmem>>, vector<32x1xf32>
    %c0_14 = arith.constant 0 : index
    %c5 = arith.constant 5 : index
    %11 = vector.load %arg2[%c0_14, %c5] : memref<32x9xf32, #tpu.memory_space<vmem>>, vector<32x1xf32>
    %c0_15 = arith.constant 0 : index
    %c6 = arith.constant 6 : index
    %12 = vector.load %arg2[%c0_15, %c6] : memref<32x9xf32, #tpu.memory_space<vmem>>, vector<32x1xf32>
    %c0_16 = arith.constant 0 : index
    %c7 = arith.constant 7 : index
    %13 = vector.load %arg2[%c0_16, %c7] : memref<32x9xf32, #tpu.memory_space<vmem>>, vector<32x1xf32>
    %c0_17 = arith.constant 0 : index
    %c8 = arith.constant 8 : index
    %14 = vector.load %arg2[%c0_17, %c8] : memref<32x9xf32, #tpu.memory_space<vmem>>, vector<32x1xf32>
    %15 = vector.extract_strided_slice %2 {offsets = [0, 0], sizes = [8, 288], strides = [1, 1]} : vector<8x342xf32> to vector<8x288xf32>
    %16 = vector.extract_strided_slice %2 {offsets = [0, 1], sizes = [8, 288], strides = [1, 1]} : vector<8x342xf32> to vector<8x288xf32>
    %17 = vector.extract_strided_slice %2 {offsets = [0, 2], sizes = [8, 288], strides = [1, 1]} : vector<8x342xf32> to vector<8x288xf32>
    %18 = vector.extract_strided_slice %2 {offsets = [0, 18], sizes = [8, 288], strides = [1, 1]} : vector<8x342xf32> to vector<8x288xf32>
    %19 = vector.extract_strided_slice %2 {offsets = [0, 19], sizes = [8, 288], strides = [1, 1]} : vector<8x342xf32> to vector<8x288xf32>
    %20 = vector.extract_strided_slice %2 {offsets = [0, 20], sizes = [8, 288], strides = [1, 1]} : vector<8x342xf32> to vector<8x288xf32>
    %21 = vector.extract_strided_slice %2 {offsets = [0, 36], sizes = [8, 288], strides = [1, 1]} : vector<8x342xf32> to vector<8x288xf32>
    %22 = vector.extract_strided_slice %2 {offsets = [0, 37], sizes = [8, 288], strides = [1, 1]} : vector<8x342xf32> to vector<8x288xf32>
    %23 = vector.extract_strided_slice %2 {offsets = [0, 38], sizes = [8, 288], strides = [1, 1]} : vector<8x342xf32> to vector<8x288xf32>
    %24 = vector.extract_strided_slice %15 {offsets = [0, 0], sizes = [1, 288], strides = [1, 1]} : vector<8x288xf32> to vector<1x288xf32>
    %25 = vector.broadcast %6 : vector<32x1xf32> to vector<32x288xf32>
    %26 = vector.broadcast %24 : vector<1x288xf32> to vector<32x288xf32>
    %27 = arith.mulf %25, %26 : vector<32x288xf32>
    %28 = vector.extract_strided_slice %16 {offsets = [0, 0], sizes = [1, 288], strides = [1, 1]} : vector<8x288xf32> to vector<1x288xf32>
    %29 = vector.broadcast %7 : vector<32x1xf32> to vector<32x288xf32>
    %30 = vector.broadcast %28 : vector<1x288xf32> to vector<32x288xf32>
    %31 = arith.mulf %29, %30 : vector<32x288xf32>
    %32 = arith.addf %27, %31 : vector<32x288xf32>
    %33 = vector.extract_strided_slice %17 {offsets = [0, 0], sizes = [1, 288], strides = [1, 1]} : vector<8x288xf32> to vector<1x288xf32>
    %34 = vector.broadcast %8 : vector<32x1xf32> to vector<32x288xf32>
    %35 = vector.broadcast %33 : vector<1x288xf32> to vector<32x288xf32>
    %36 = arith.mulf %34, %35 : vector<32x288xf32>
    %37 = arith.addf %32, %36 : vector<32x288xf32>
    %38 = vector.extract_strided_slice %18 {offsets = [0, 0], sizes = [1, 288], strides = [1, 1]} : vector<8x288xf32> to vector<1x288xf32>
    %39 = vector.broadcast %9 : vector<32x1xf32> to vector<32x288xf32>
    %40 = vector.broadcast %38 : vector<1x288xf32> to vector<32x288xf32>
    %41 = arith.mulf %39, %40 : vector<32x288xf32>
    %42 = arith.addf %37, %41 : vector<32x288xf32>
    %43 = vector.extract_strided_slice %19 {offsets = [0, 0], sizes = [1, 288], strides = [1, 1]} : vector<8x288xf32> to vector<1x288xf32>
    %44 = vector.broadcast %10 : vector<32x1xf32> to vector<32x288xf32>
    %45 = vector.broadcast %43 : vector<1x288xf32> to vector<32x288xf32>
    %46 = arith.mulf %44, %45 : vector<32x288xf32>
    %47 = arith.addf %42, %46 : vector<32x288xf32>
    %48 = vector.extract_strided_slice %20 {offsets = [0, 0], sizes = [1, 288], strides = [1, 1]} : vector<8x288xf32> to vector<1x288xf32>
    %49 = vector.broadcast %11 : vector<32x1xf32> to vector<32x288xf32>
    %50 = vector.broadcast %48 : vector<1x288xf32> to vector<32x288xf32>
    %51 = arith.mulf %49, %50 : vector<32x288xf32>
    %52 = arith.addf %47, %51 : vector<32x288xf32>
    %53 = vector.extract_strided_slice %21 {offsets = [0, 0], sizes = [1, 288], strides = [1, 1]} : vector<8x288xf32> to vector<1x288xf32>
    %54 = vector.broadcast %12 : vector<32x1xf32> to vector<32x288xf32>
    %55 = vector.broadcast %53 : vector<1x288xf32> to vector<32x288xf32>
    %56 = arith.mulf %54, %55 : vector<32x288xf32>
    %57 = arith.addf %52, %56 : vector<32x288xf32>
    %58 = vector.extract_strided_slice %22 {offsets = [0, 0], sizes = [1, 288], strides = [1, 1]} : vector<8x288xf32> to vector<1x288xf32>
    %59 = vector.broadcast %13 : vector<32x1xf32> to vector<32x288xf32>
    %60 = vector.broadcast %58 : vector<1x288xf32> to vector<32x288xf32>
    %61 = arith.mulf %59, %60 : vector<32x288xf32>
    %62 = arith.addf %57, %61 : vector<32x288xf32>
    %63 = vector.extract_strided_slice %23 {offsets = [0, 0], sizes = [1, 288], strides = [1, 1]} : vector<8x288xf32> to vector<1x288xf32>
    %64 = vector.broadcast %14 : vector<32x1xf32> to vector<32x288xf32>
    %65 = vector.broadcast %63 : vector<1x288xf32> to vector<32x288xf32>
    %66 = arith.mulf %64, %65 : vector<32x288xf32>
    %67 = arith.addf %62, %66 : vector<32x288xf32>
    %68 = vector.broadcast %3 : vector<32x1xf32> to vector<32x288xf32>
    %69 = arith.addf %67, %68 : vector<32x288xf32>
    %cst = arith.constant 0.000000e+00 : f32
    %70 = vector.broadcast %cst : f32 to vector<32x288xf32>
    %71 = arith.maximumf %69, %70 : vector<32x288xf32>
    %72 = vector.broadcast %4 : vector<1x288xf32> to vector<32x288xf32>
    %73 = arith.mulf %71, %72 : vector<32x288xf32>
    %cst_18 = arith.constant dense<0.000000e+00> : vector<32xf32>
    %74 = vector.multi_reduction <add>, %73, %cst_18 [1] : vector<32x288xf32> to vector<32xf32>
    %75 = vector.shape_cast %74 : vector<32xf32> to vector<32x1xf32>
    %76 = vector.broadcast %75 : vector<32x1xf32> to vector<32x128xf32>
    %77 = arith.mulf %76, %5 : vector<32x128xf32>
    %cst_19 = arith.constant dense<0.000000e+00> : vector<128xf32>
    %78 = vector.multi_reduction <add>, %77, %cst_19 [0] : vector<32x128xf32> to vector<128xf32>
    %79 = vector.shape_cast %78 : vector<128xf32> to vector<1x128xf32>
    %80 = vector.extract_strided_slice %15 {offsets = [1, 0], sizes = [1, 288], strides = [1, 1]} : vector<8x288xf32> to vector<1x288xf32>
    %81 = vector.broadcast %6 : vector<32x1xf32> to vector<32x288xf32>
    %82 = vector.broadcast %80 : vector<1x288xf32> to vector<32x288xf32>
    %83 = arith.mulf %81, %82 : vector<32x288xf32>
    %84 = vector.extract_strided_slice %16 {offsets = [1, 0], sizes = [1, 288], strides = [1, 1]} : vector<8x288xf32> to vector<1x288xf32>
    %85 = vector.broadcast %7 : vector<32x1xf32> to vector<32x288xf32>
    %86 = vector.broadcast %84 : vector<1x288xf32> to vector<32x288xf32>
    %87 = arith.mulf %85, %86 : vector<32x288xf32>
    %88 = arith.addf %83, %87 : vector<32x288xf32>
    %89 = vector.extract_strided_slice %17 {offsets = [1, 0], sizes = [1, 288], strides = [1, 1]} : vector<8x288xf32> to vector<1x288xf32>
    %90 = vector.broadcast %8 : vector<32x1xf32> to vector<32x288xf32>
    %91 = vector.broadcast %89 : vector<1x288xf32> to vector<32x288xf32>
    %92 = arith.mulf %90, %91 : vector<32x288xf32>
    %93 = arith.addf %88, %92 : vector<32x288xf32>
    %94 = vector.extract_strided_slice %18 {offsets = [1, 0], sizes = [1, 288], strides = [1, 1]} : vector<8x288xf32> to vector<1x288xf32>
    %95 = vector.broadcast %9 : vector<32x1xf32> to vector<32x288xf32>
    %96 = vector.broadcast %94 : vector<1x288xf32> to vector<32x288xf32>
    %97 = arith.mulf %95, %96 : vector<32x288xf32>
    %98 = arith.addf %93, %97 : vector<32x288xf32>
    %99 = vector.extract_strided_slice %19 {offsets = [1, 0], sizes = [1, 288], strides = [1, 1]} : vector<8x288xf32> to vector<1x288xf32>
    %100 = vector.broadcast %10 : vector<32x1xf32> to vector<32x288xf32>
    %101 = vector.broadcast %99 : vector<1x288xf32> to vector<32x288xf32>
    %102 = arith.mulf %100, %101 : vector<32x288xf32>
    %103 = arith.addf %98, %102 : vector<32x288xf32>
    %104 = vector.extract_strided_slice %20 {offsets = [1, 0], sizes = [1, 288], strides = [1, 1]} : vector<8x288xf32> to vector<1x288xf32>
    %105 = vector.broadcast %11 : vector<32x1xf32> to vector<32x288xf32>
    %106 = vector.broadcast %104 : vector<1x288xf32> to vector<32x288xf32>
    %107 = arith.mulf %105, %106 : vector<32x288xf32>
    %108 = arith.addf %103, %107 : vector<32x288xf32>
    %109 = vector.extract_strided_slice %21 {offsets = [1, 0], sizes = [1, 288], strides = [1, 1]} : vector<8x288xf32> to vector<1x288xf32>
    %110 = vector.broadcast %12 : vector<32x1xf32> to vector<32x288xf32>
    %111 = vector.broadcast %109 : vector<1x288xf32> to vector<32x288xf32>
    %112 = arith.mulf %110, %111 : vector<32x288xf32>
    %113 = arith.addf %108, %112 : vector<32x288xf32>
    %114 = vector.extract_strided_slice %22 {offsets = [1, 0], sizes = [1, 288], strides = [1, 1]} : vector<8x288xf32> to vector<1x288xf32>
    %115 = vector.broadcast %13 : vector<32x1xf32> to vector<32x288xf32>
    %116 = vector.broadcast %114 : vector<1x288xf32> to vector<32x288xf32>
    %117 = arith.mulf %115, %116 : vector<32x288xf32>
    %118 = arith.addf %113, %117 : vector<32x288xf32>
    %119 = vector.extract_strided_slice %23 {offsets = [1, 0], sizes = [1, 288], strides = [1, 1]} : vector<8x288xf32> to vector<1x288xf32>
    %120 = vector.broadcast %14 : vector<32x1xf32> to vector<32x288xf32>
    %121 = vector.broadcast %119 : vector<1x288xf32> to vector<32x288xf32>
    %122 = arith.mulf %120, %121 : vector<32x288xf32>
    %123 = arith.addf %118, %122 : vector<32x288xf32>
    %124 = vector.broadcast %3 : vector<32x1xf32> to vector<32x288xf32>
    %125 = arith.addf %123, %124 : vector<32x288xf32>
    %cst_20 = arith.constant 0.000000e+00 : f32
    %126 = vector.broadcast %cst_20 : f32 to vector<32x288xf32>
    %127 = arith.maximumf %125, %126 : vector<32x288xf32>
    %128 = vector.broadcast %4 : vector<1x288xf32> to vector<32x288xf32>
    %129 = arith.mulf %127, %128 : vector<32x288xf32>
    %cst_21 = arith.constant dense<0.000000e+00> : vector<32xf32>
    %130 = vector.multi_reduction <add>, %129, %cst_21 [1] : vector<32x288xf32> to vector<32xf32>
    %131 = vector.shape_cast %130 : vector<32xf32> to vector<32x1xf32>
    %132 = vector.broadcast %131 : vector<32x1xf32> to vector<32x128xf32>
    %133 = arith.mulf %132, %5 : vector<32x128xf32>
    %cst_22 = arith.constant dense<0.000000e+00> : vector<128xf32>
    %134 = vector.multi_reduction <add>, %133, %cst_22 [0] : vector<32x128xf32> to vector<128xf32>
    %135 = vector.shape_cast %134 : vector<128xf32> to vector<1x128xf32>
    %136 = vector.extract_strided_slice %15 {offsets = [2, 0], sizes = [1, 288], strides = [1, 1]} : vector<8x288xf32> to vector<1x288xf32>
    %137 = vector.broadcast %6 : vector<32x1xf32> to vector<32x288xf32>
    %138 = vector.broadcast %136 : vector<1x288xf32> to vector<32x288xf32>
    %139 = arith.mulf %137, %138 : vector<32x288xf32>
    %140 = vector.extract_strided_slice %16 {offsets = [2, 0], sizes = [1, 288], strides = [1, 1]} : vector<8x288xf32> to vector<1x288xf32>
    %141 = vector.broadcast %7 : vector<32x1xf32> to vector<32x288xf32>
    %142 = vector.broadcast %140 : vector<1x288xf32> to vector<32x288xf32>
    %143 = arith.mulf %141, %142 : vector<32x288xf32>
    %144 = arith.addf %139, %143 : vector<32x288xf32>
    %145 = vector.extract_strided_slice %17 {offsets = [2, 0], sizes = [1, 288], strides = [1, 1]} : vector<8x288xf32> to vector<1x288xf32>
    %146 = vector.broadcast %8 : vector<32x1xf32> to vector<32x288xf32>
    %147 = vector.broadcast %145 : vector<1x288xf32> to vector<32x288xf32>
    %148 = arith.mulf %146, %147 : vector<32x288xf32>
    %149 = arith.addf %144, %148 : vector<32x288xf32>
    %150 = vector.extract_strided_slice %18 {offsets = [2, 0], sizes = [1, 288], strides = [1, 1]} : vector<8x288xf32> to vector<1x288xf32>
    %151 = vector.broadcast %9 : vector<32x1xf32> to vector<32x288xf32>
    %152 = vector.broadcast %150 : vector<1x288xf32> to vector<32x288xf32>
    %153 = arith.mulf %151, %152 : vector<32x288xf32>
    %154 = arith.addf %149, %153 : vector<32x288xf32>
    %155 = vector.extract_strided_slice %19 {offsets = [2, 0], sizes = [1, 288], strides = [1, 1]} : vector<8x288xf32> to vector<1x288xf32>
    %156 = vector.broadcast %10 : vector<32x1xf32> to vector<32x288xf32>
    %157 = vector.broadcast %155 : vector<1x288xf32> to vector<32x288xf32>
    %158 = arith.mulf %156, %157 : vector<32x288xf32>
    %159 = arith.addf %154, %158 : vector<32x288xf32>
    %160 = vector.extract_strided_slice %20 {offsets = [2, 0], sizes = [1, 288], strides = [1, 1]} : vector<8x288xf32> to vector<1x288xf32>
    %161 = vector.broadcast %11 : vector<32x1xf32> to vector<32x288xf32>
    %162 = vector.broadcast %160 : vector<1x288xf32> to vector<32x288xf32>
    %163 = arith.mulf %161, %162 : vector<32x288xf32>
    %164 = arith.addf %159, %163 : vector<32x288xf32>
    %165 = vector.extract_strided_slice %21 {offsets = [2, 0], sizes = [1, 288], strides = [1, 1]} : vector<8x288xf32> to vector<1x288xf32>
    %166 = vector.broadcast %12 : vector<32x1xf32> to vector<32x288xf32>
    %167 = vector.broadcast %165 : vector<1x288xf32> to vector<32x288xf32>
    %168 = arith.mulf %166, %167 : vector<32x288xf32>
    %169 = arith.addf %164, %168 : vector<32x288xf32>
    %170 = vector.extract_strided_slice %22 {offsets = [2, 0], sizes = [1, 288], strides = [1, 1]} : vector<8x288xf32> to vector<1x288xf32>
    %171 = vector.broadcast %13 : vector<32x1xf32> to vector<32x288xf32>
    %172 = vector.broadcast %170 : vector<1x288xf32> to vector<32x288xf32>
    %173 = arith.mulf %171, %172 : vector<32x288xf32>
    %174 = arith.addf %169, %173 : vector<32x288xf32>
    %175 = vector.extract_strided_slice %23 {offsets = [2, 0], sizes = [1, 288], strides = [1, 1]} : vector<8x288xf32> to vector<1x288xf32>
    %176 = vector.broadcast %14 : vector<32x1xf32> to vector<32x288xf32>
    %177 = vector.broadcast %175 : vector<1x288xf32> to vector<32x288xf32>
    %178 = arith.mulf %176, %177 : vector<32x288xf32>
    %179 = arith.addf %174, %178 : vector<32x288xf32>
    %180 = vector.broadcast %3 : vector<32x1xf32> to vector<32x288xf32>
    %181 = arith.addf %179, %180 : vector<32x288xf32>
    %cst_23 = arith.constant 0.000000e+00 : f32
    %182 = vector.broadcast %cst_23 : f32 to vector<32x288xf32>
    %183 = arith.maximumf %181, %182 : vector<32x288xf32>
    %184 = vector.broadcast %4 : vector<1x288xf32> to vector<32x288xf32>
    %185 = arith.mulf %183, %184 : vector<32x288xf32>
    %cst_24 = arith.constant dense<0.000000e+00> : vector<32xf32>
    %186 = vector.multi_reduction <add>, %185, %cst_24 [1] : vector<32x288xf32> to vector<32xf32>
    %187 = vector.shape_cast %186 : vector<32xf32> to vector<32x1xf32>
    %188 = vector.broadcast %187 : vector<32x1xf32> to vector<32x128xf32>
    %189 = arith.mulf %188, %5 : vector<32x128xf32>
    %cst_25 = arith.constant dense<0.000000e+00> : vector<128xf32>
    %190 = vector.multi_reduction <add>, %189, %cst_25 [0] : vector<32x128xf32> to vector<128xf32>
    %191 = vector.shape_cast %190 : vector<128xf32> to vector<1x128xf32>
    %192 = vector.extract_strided_slice %15 {offsets = [3, 0], sizes = [1, 288], strides = [1, 1]} : vector<8x288xf32> to vector<1x288xf32>
    %193 = vector.broadcast %6 : vector<32x1xf32> to vector<32x288xf32>
    %194 = vector.broadcast %192 : vector<1x288xf32> to vector<32x288xf32>
    %195 = arith.mulf %193, %194 : vector<32x288xf32>
    %196 = vector.extract_strided_slice %16 {offsets = [3, 0], sizes = [1, 288], strides = [1, 1]} : vector<8x288xf32> to vector<1x288xf32>
    %197 = vector.broadcast %7 : vector<32x1xf32> to vector<32x288xf32>
    %198 = vector.broadcast %196 : vector<1x288xf32> to vector<32x288xf32>
    %199 = arith.mulf %197, %198 : vector<32x288xf32>
    %200 = arith.addf %195, %199 : vector<32x288xf32>
    %201 = vector.extract_strided_slice %17 {offsets = [3, 0], sizes = [1, 288], strides = [1, 1]} : vector<8x288xf32> to vector<1x288xf32>
    %202 = vector.broadcast %8 : vector<32x1xf32> to vector<32x288xf32>
    %203 = vector.broadcast %201 : vector<1x288xf32> to vector<32x288xf32>
    %204 = arith.mulf %202, %203 : vector<32x288xf32>
    %205 = arith.addf %200, %204 : vector<32x288xf32>
    %206 = vector.extract_strided_slice %18 {offsets = [3, 0], sizes = [1, 288], strides = [1, 1]} : vector<8x288xf32> to vector<1x288xf32>
    %207 = vector.broadcast %9 : vector<32x1xf32> to vector<32x288xf32>
    %208 = vector.broadcast %206 : vector<1x288xf32> to vector<32x288xf32>
    %209 = arith.mulf %207, %208 : vector<32x288xf32>
    %210 = arith.addf %205, %209 : vector<32x288xf32>
    %211 = vector.extract_strided_slice %19 {offsets = [3, 0], sizes = [1, 288], strides = [1, 1]} : vector<8x288xf32> to vector<1x288xf32>
    %212 = vector.broadcast %10 : vector<32x1xf32> to vector<32x288xf32>
    %213 = vector.broadcast %211 : vector<1x288xf32> to vector<32x288xf32>
    %214 = arith.mulf %212, %213 : vector<32x288xf32>
    %215 = arith.addf %210, %214 : vector<32x288xf32>
    %216 = vector.extract_strided_slice %20 {offsets = [3, 0], sizes = [1, 288], strides = [1, 1]} : vector<8x288xf32> to vector<1x288xf32>
    %217 = vector.broadcast %11 : vector<32x1xf32> to vector<32x288xf32>
    %218 = vector.broadcast %216 : vector<1x288xf32> to vector<32x288xf32>
    %219 = arith.mulf %217, %218 : vector<32x288xf32>
    %220 = arith.addf %215, %219 : vector<32x288xf32>
    %221 = vector.extract_strided_slice %21 {offsets = [3, 0], sizes = [1, 288], strides = [1, 1]} : vector<8x288xf32> to vector<1x288xf32>
    %222 = vector.broadcast %12 : vector<32x1xf32> to vector<32x288xf32>
    %223 = vector.broadcast %221 : vector<1x288xf32> to vector<32x288xf32>
    %224 = arith.mulf %222, %223 : vector<32x288xf32>
    %225 = arith.addf %220, %224 : vector<32x288xf32>
    %226 = vector.extract_strided_slice %22 {offsets = [3, 0], sizes = [1, 288], strides = [1, 1]} : vector<8x288xf32> to vector<1x288xf32>
    %227 = vector.broadcast %13 : vector<32x1xf32> to vector<32x288xf32>
    %228 = vector.broadcast %226 : vector<1x288xf32> to vector<32x288xf32>
    %229 = arith.mulf %227, %228 : vector<32x288xf32>
    %230 = arith.addf %225, %229 : vector<32x288xf32>
    %231 = vector.extract_strided_slice %23 {offsets = [3, 0], sizes = [1, 288], strides = [1, 1]} : vector<8x288xf32> to vector<1x288xf32>
    %232 = vector.broadcast %14 : vector<32x1xf32> to vector<32x288xf32>
    %233 = vector.broadcast %231 : vector<1x288xf32> to vector<32x288xf32>
    %234 = arith.mulf %232, %233 : vector<32x288xf32>
    %235 = arith.addf %230, %234 : vector<32x288xf32>
    %236 = vector.broadcast %3 : vector<32x1xf32> to vector<32x288xf32>
    %237 = arith.addf %235, %236 : vector<32x288xf32>
    %cst_26 = arith.constant 0.000000e+00 : f32
    %238 = vector.broadcast %cst_26 : f32 to vector<32x288xf32>
    %239 = arith.maximumf %237, %238 : vector<32x288xf32>
    %240 = vector.broadcast %4 : vector<1x288xf32> to vector<32x288xf32>
    %241 = arith.mulf %239, %240 : vector<32x288xf32>
    %cst_27 = arith.constant dense<0.000000e+00> : vector<32xf32>
    %242 = vector.multi_reduction <add>, %241, %cst_27 [1] : vector<32x288xf32> to vector<32xf32>
    %243 = vector.shape_cast %242 : vector<32xf32> to vector<32x1xf32>
    %244 = vector.broadcast %243 : vector<32x1xf32> to vector<32x128xf32>
    %245 = arith.mulf %244, %5 : vector<32x128xf32>
    %cst_28 = arith.constant dense<0.000000e+00> : vector<128xf32>
    %246 = vector.multi_reduction <add>, %245, %cst_28 [0] : vector<32x128xf32> to vector<128xf32>
    %247 = vector.shape_cast %246 : vector<128xf32> to vector<1x128xf32>
    %248 = vector.extract_strided_slice %15 {offsets = [4, 0], sizes = [1, 288], strides = [1, 1]} : vector<8x288xf32> to vector<1x288xf32>
    %249 = vector.broadcast %6 : vector<32x1xf32> to vector<32x288xf32>
    %250 = vector.broadcast %248 : vector<1x288xf32> to vector<32x288xf32>
    %251 = arith.mulf %249, %250 : vector<32x288xf32>
    %252 = vector.extract_strided_slice %16 {offsets = [4, 0], sizes = [1, 288], strides = [1, 1]} : vector<8x288xf32> to vector<1x288xf32>
    %253 = vector.broadcast %7 : vector<32x1xf32> to vector<32x288xf32>
    %254 = vector.broadcast %252 : vector<1x288xf32> to vector<32x288xf32>
    %255 = arith.mulf %253, %254 : vector<32x288xf32>
    %256 = arith.addf %251, %255 : vector<32x288xf32>
    %257 = vector.extract_strided_slice %17 {offsets = [4, 0], sizes = [1, 288], strides = [1, 1]} : vector<8x288xf32> to vector<1x288xf32>
    %258 = vector.broadcast %8 : vector<32x1xf32> to vector<32x288xf32>
    %259 = vector.broadcast %257 : vector<1x288xf32> to vector<32x288xf32>
    %260 = arith.mulf %258, %259 : vector<32x288xf32>
    %261 = arith.addf %256, %260 : vector<32x288xf32>
    %262 = vector.extract_strided_slice %18 {offsets = [4, 0], sizes = [1, 288], strides = [1, 1]} : vector<8x288xf32> to vector<1x288xf32>
    %263 = vector.broadcast %9 : vector<32x1xf32> to vector<32x288xf32>
    %264 = vector.broadcast %262 : vector<1x288xf32> to vector<32x288xf32>
    %265 = arith.mulf %263, %264 : vector<32x288xf32>
    %266 = arith.addf %261, %265 : vector<32x288xf32>
    %267 = vector.extract_strided_slice %19 {offsets = [4, 0], sizes = [1, 288], strides = [1, 1]} : vector<8x288xf32> to vector<1x288xf32>
    %268 = vector.broadcast %10 : vector<32x1xf32> to vector<32x288xf32>
    %269 = vector.broadcast %267 : vector<1x288xf32> to vector<32x288xf32>
    %270 = arith.mulf %268, %269 : vector<32x288xf32>
    %271 = arith.addf %266, %270 : vector<32x288xf32>
    %272 = vector.extract_strided_slice %20 {offsets = [4, 0], sizes = [1, 288], strides = [1, 1]} : vector<8x288xf32> to vector<1x288xf32>
    %273 = vector.broadcast %11 : vector<32x1xf32> to vector<32x288xf32>
    %274 = vector.broadcast %272 : vector<1x288xf32> to vector<32x288xf32>
    %275 = arith.mulf %273, %274 : vector<32x288xf32>
    %276 = arith.addf %271, %275 : vector<32x288xf32>
    %277 = vector.extract_strided_slice %21 {offsets = [4, 0], sizes = [1, 288], strides = [1, 1]} : vector<8x288xf32> to vector<1x288xf32>
    %278 = vector.broadcast %12 : vector<32x1xf32> to vector<32x288xf32>
    %279 = vector.broadcast %277 : vector<1x288xf32> to vector<32x288xf32>
    %280 = arith.mulf %278, %279 : vector<32x288xf32>
    %281 = arith.addf %276, %280 : vector<32x288xf32>
    %282 = vector.extract_strided_slice %22 {offsets = [4, 0], sizes = [1, 288], strides = [1, 1]} : vector<8x288xf32> to vector<1x288xf32>
    %283 = vector.broadcast %13 : vector<32x1xf32> to vector<32x288xf32>
    %284 = vector.broadcast %282 : vector<1x288xf32> to vector<32x288xf32>
    %285 = arith.mulf %283, %284 : vector<32x288xf32>
    %286 = arith.addf %281, %285 : vector<32x288xf32>
    %287 = vector.extract_strided_slice %23 {offsets = [4, 0], sizes = [1, 288], strides = [1, 1]} : vector<8x288xf32> to vector<1x288xf32>
    %288 = vector.broadcast %14 : vector<32x1xf32> to vector<32x288xf32>
    %289 = vector.broadcast %287 : vector<1x288xf32> to vector<32x288xf32>
    %290 = arith.mulf %288, %289 : vector<32x288xf32>
    %291 = arith.addf %286, %290 : vector<32x288xf32>
    %292 = vector.broadcast %3 : vector<32x1xf32> to vector<32x288xf32>
    %293 = arith.addf %291, %292 : vector<32x288xf32>
    %cst_29 = arith.constant 0.000000e+00 : f32
    %294 = vector.broadcast %cst_29 : f32 to vector<32x288xf32>
    %295 = arith.maximumf %293, %294 : vector<32x288xf32>
    %296 = vector.broadcast %4 : vector<1x288xf32> to vector<32x288xf32>
    %297 = arith.mulf %295, %296 : vector<32x288xf32>
    %cst_30 = arith.constant dense<0.000000e+00> : vector<32xf32>
    %298 = vector.multi_reduction <add>, %297, %cst_30 [1] : vector<32x288xf32> to vector<32xf32>
    %299 = vector.shape_cast %298 : vector<32xf32> to vector<32x1xf32>
    %300 = vector.broadcast %299 : vector<32x1xf32> to vector<32x128xf32>
    %301 = arith.mulf %300, %5 : vector<32x128xf32>
    %cst_31 = arith.constant dense<0.000000e+00> : vector<128xf32>
    %302 = vector.multi_reduction <add>, %301, %cst_31 [0] : vector<32x128xf32> to vector<128xf32>
    %303 = vector.shape_cast %302 : vector<128xf32> to vector<1x128xf32>
    %304 = vector.extract_strided_slice %15 {offsets = [5, 0], sizes = [1, 288], strides = [1, 1]} : vector<8x288xf32> to vector<1x288xf32>
    %305 = vector.broadcast %6 : vector<32x1xf32> to vector<32x288xf32>
    %306 = vector.broadcast %304 : vector<1x288xf32> to vector<32x288xf32>
    %307 = arith.mulf %305, %306 : vector<32x288xf32>
    %308 = vector.extract_strided_slice %16 {offsets = [5, 0], sizes = [1, 288], strides = [1, 1]} : vector<8x288xf32> to vector<1x288xf32>
    %309 = vector.broadcast %7 : vector<32x1xf32> to vector<32x288xf32>
    %310 = vector.broadcast %308 : vector<1x288xf32> to vector<32x288xf32>
    %311 = arith.mulf %309, %310 : vector<32x288xf32>
    %312 = arith.addf %307, %311 : vector<32x288xf32>
    %313 = vector.extract_strided_slice %17 {offsets = [5, 0], sizes = [1, 288], strides = [1, 1]} : vector<8x288xf32> to vector<1x288xf32>
    %314 = vector.broadcast %8 : vector<32x1xf32> to vector<32x288xf32>
    %315 = vector.broadcast %313 : vector<1x288xf32> to vector<32x288xf32>
    %316 = arith.mulf %314, %315 : vector<32x288xf32>
    %317 = arith.addf %312, %316 : vector<32x288xf32>
    %318 = vector.extract_strided_slice %18 {offsets = [5, 0], sizes = [1, 288], strides = [1, 1]} : vector<8x288xf32> to vector<1x288xf32>
    %319 = vector.broadcast %9 : vector<32x1xf32> to vector<32x288xf32>
    %320 = vector.broadcast %318 : vector<1x288xf32> to vector<32x288xf32>
    %321 = arith.mulf %319, %320 : vector<32x288xf32>
    %322 = arith.addf %317, %321 : vector<32x288xf32>
    %323 = vector.extract_strided_slice %19 {offsets = [5, 0], sizes = [1, 288], strides = [1, 1]} : vector<8x288xf32> to vector<1x288xf32>
    %324 = vector.broadcast %10 : vector<32x1xf32> to vector<32x288xf32>
    %325 = vector.broadcast %323 : vector<1x288xf32> to vector<32x288xf32>
    %326 = arith.mulf %324, %325 : vector<32x288xf32>
    %327 = arith.addf %322, %326 : vector<32x288xf32>
    %328 = vector.extract_strided_slice %20 {offsets = [5, 0], sizes = [1, 288], strides = [1, 1]} : vector<8x288xf32> to vector<1x288xf32>
    %329 = vector.broadcast %11 : vector<32x1xf32> to vector<32x288xf32>
    %330 = vector.broadcast %328 : vector<1x288xf32> to vector<32x288xf32>
    %331 = arith.mulf %329, %330 : vector<32x288xf32>
    %332 = arith.addf %327, %331 : vector<32x288xf32>
    %333 = vector.extract_strided_slice %21 {offsets = [5, 0], sizes = [1, 288], strides = [1, 1]} : vector<8x288xf32> to vector<1x288xf32>
    %334 = vector.broadcast %12 : vector<32x1xf32> to vector<32x288xf32>
    %335 = vector.broadcast %333 : vector<1x288xf32> to vector<32x288xf32>
    %336 = arith.mulf %334, %335 : vector<32x288xf32>
    %337 = arith.addf %332, %336 : vector<32x288xf32>
    %338 = vector.extract_strided_slice %22 {offsets = [5, 0], sizes = [1, 288], strides = [1, 1]} : vector<8x288xf32> to vector<1x288xf32>
    %339 = vector.broadcast %13 : vector<32x1xf32> to vector<32x288xf32>
    %340 = vector.broadcast %338 : vector<1x288xf32> to vector<32x288xf32>
    %341 = arith.mulf %339, %340 : vector<32x288xf32>
    %342 = arith.addf %337, %341 : vector<32x288xf32>
    %343 = vector.extract_strided_slice %23 {offsets = [5, 0], sizes = [1, 288], strides = [1, 1]} : vector<8x288xf32> to vector<1x288xf32>
    %344 = vector.broadcast %14 : vector<32x1xf32> to vector<32x288xf32>
    %345 = vector.broadcast %343 : vector<1x288xf32> to vector<32x288xf32>
    %346 = arith.mulf %344, %345 : vector<32x288xf32>
    %347 = arith.addf %342, %346 : vector<32x288xf32>
    %348 = vector.broadcast %3 : vector<32x1xf32> to vector<32x288xf32>
    %349 = arith.addf %347, %348 : vector<32x288xf32>
    %cst_32 = arith.constant 0.000000e+00 : f32
    %350 = vector.broadcast %cst_32 : f32 to vector<32x288xf32>
    %351 = arith.maximumf %349, %350 : vector<32x288xf32>
    %352 = vector.broadcast %4 : vector<1x288xf32> to vector<32x288xf32>
    %353 = arith.mulf %351, %352 : vector<32x288xf32>
    %cst_33 = arith.constant dense<0.000000e+00> : vector<32xf32>
    %354 = vector.multi_reduction <add>, %353, %cst_33 [1] : vector<32x288xf32> to vector<32xf32>
    %355 = vector.shape_cast %354 : vector<32xf32> to vector<32x1xf32>
    %356 = vector.broadcast %355 : vector<32x1xf32> to vector<32x128xf32>
    %357 = arith.mulf %356, %5 : vector<32x128xf32>
    %cst_34 = arith.constant dense<0.000000e+00> : vector<128xf32>
    %358 = vector.multi_reduction <add>, %357, %cst_34 [0] : vector<32x128xf32> to vector<128xf32>
    %359 = vector.shape_cast %358 : vector<128xf32> to vector<1x128xf32>
    %360 = vector.extract_strided_slice %15 {offsets = [6, 0], sizes = [1, 288], strides = [1, 1]} : vector<8x288xf32> to vector<1x288xf32>
    %361 = vector.broadcast %6 : vector<32x1xf32> to vector<32x288xf32>
    %362 = vector.broadcast %360 : vector<1x288xf32> to vector<32x288xf32>
    %363 = arith.mulf %361, %362 : vector<32x288xf32>
    %364 = vector.extract_strided_slice %16 {offsets = [6, 0], sizes = [1, 288], strides = [1, 1]} : vector<8x288xf32> to vector<1x288xf32>
    %365 = vector.broadcast %7 : vector<32x1xf32> to vector<32x288xf32>
    %366 = vector.broadcast %364 : vector<1x288xf32> to vector<32x288xf32>
    %367 = arith.mulf %365, %366 : vector<32x288xf32>
    %368 = arith.addf %363, %367 : vector<32x288xf32>
    %369 = vector.extract_strided_slice %17 {offsets = [6, 0], sizes = [1, 288], strides = [1, 1]} : vector<8x288xf32> to vector<1x288xf32>
    %370 = vector.broadcast %8 : vector<32x1xf32> to vector<32x288xf32>
    %371 = vector.broadcast %369 : vector<1x288xf32> to vector<32x288xf32>
    %372 = arith.mulf %370, %371 : vector<32x288xf32>
    %373 = arith.addf %368, %372 : vector<32x288xf32>
    %374 = vector.extract_strided_slice %18 {offsets = [6, 0], sizes = [1, 288], strides = [1, 1]} : vector<8x288xf32> to vector<1x288xf32>
    %375 = vector.broadcast %9 : vector<32x1xf32> to vector<32x288xf32>
    %376 = vector.broadcast %374 : vector<1x288xf32> to vector<32x288xf32>
    %377 = arith.mulf %375, %376 : vector<32x288xf32>
    %378 = arith.addf %373, %377 : vector<32x288xf32>
    %379 = vector.extract_strided_slice %19 {offsets = [6, 0], sizes = [1, 288], strides = [1, 1]} : vector<8x288xf32> to vector<1x288xf32>
    %380 = vector.broadcast %10 : vector<32x1xf32> to vector<32x288xf32>
    %381 = vector.broadcast %379 : vector<1x288xf32> to vector<32x288xf32>
    %382 = arith.mulf %380, %381 : vector<32x288xf32>
    %383 = arith.addf %378, %382 : vector<32x288xf32>
    %384 = vector.extract_strided_slice %20 {offsets = [6, 0], sizes = [1, 288], strides = [1, 1]} : vector<8x288xf32> to vector<1x288xf32>
    %385 = vector.broadcast %11 : vector<32x1xf32> to vector<32x288xf32>
    %386 = vector.broadcast %384 : vector<1x288xf32> to vector<32x288xf32>
    %387 = arith.mulf %385, %386 : vector<32x288xf32>
    %388 = arith.addf %383, %387 : vector<32x288xf32>
    %389 = vector.extract_strided_slice %21 {offsets = [6, 0], sizes = [1, 288], strides = [1, 1]} : vector<8x288xf32> to vector<1x288xf32>
    %390 = vector.broadcast %12 : vector<32x1xf32> to vector<32x288xf32>
    %391 = vector.broadcast %389 : vector<1x288xf32> to vector<32x288xf32>
    %392 = arith.mulf %390, %391 : vector<32x288xf32>
    %393 = arith.addf %388, %392 : vector<32x288xf32>
    %394 = vector.extract_strided_slice %22 {offsets = [6, 0], sizes = [1, 288], strides = [1, 1]} : vector<8x288xf32> to vector<1x288xf32>
    %395 = vector.broadcast %13 : vector<32x1xf32> to vector<32x288xf32>
    %396 = vector.broadcast %394 : vector<1x288xf32> to vector<32x288xf32>
    %397 = arith.mulf %395, %396 : vector<32x288xf32>
    %398 = arith.addf %393, %397 : vector<32x288xf32>
    %399 = vector.extract_strided_slice %23 {offsets = [6, 0], sizes = [1, 288], strides = [1, 1]} : vector<8x288xf32> to vector<1x288xf32>
    %400 = vector.broadcast %14 : vector<32x1xf32> to vector<32x288xf32>
    %401 = vector.broadcast %399 : vector<1x288xf32> to vector<32x288xf32>
    %402 = arith.mulf %400, %401 : vector<32x288xf32>
    %403 = arith.addf %398, %402 : vector<32x288xf32>
    %404 = vector.broadcast %3 : vector<32x1xf32> to vector<32x288xf32>
    %405 = arith.addf %403, %404 : vector<32x288xf32>
    %cst_35 = arith.constant 0.000000e+00 : f32
    %406 = vector.broadcast %cst_35 : f32 to vector<32x288xf32>
    %407 = arith.maximumf %405, %406 : vector<32x288xf32>
    %408 = vector.broadcast %4 : vector<1x288xf32> to vector<32x288xf32>
    %409 = arith.mulf %407, %408 : vector<32x288xf32>
    %cst_36 = arith.constant dense<0.000000e+00> : vector<32xf32>
    %410 = vector.multi_reduction <add>, %409, %cst_36 [1] : vector<32x288xf32> to vector<32xf32>
    %411 = vector.shape_cast %410 : vector<32xf32> to vector<32x1xf32>
    %412 = vector.broadcast %411 : vector<32x1xf32> to vector<32x128xf32>
    %413 = arith.mulf %412, %5 : vector<32x128xf32>
    %cst_37 = arith.constant dense<0.000000e+00> : vector<128xf32>
    %414 = vector.multi_reduction <add>, %413, %cst_37 [0] : vector<32x128xf32> to vector<128xf32>
    %415 = vector.shape_cast %414 : vector<128xf32> to vector<1x128xf32>
    %416 = vector.extract_strided_slice %15 {offsets = [7, 0], sizes = [1, 288], strides = [1, 1]} : vector<8x288xf32> to vector<1x288xf32>
    %417 = vector.broadcast %6 : vector<32x1xf32> to vector<32x288xf32>
    %418 = vector.broadcast %416 : vector<1x288xf32> to vector<32x288xf32>
    %419 = arith.mulf %417, %418 : vector<32x288xf32>
    %420 = vector.extract_strided_slice %16 {offsets = [7, 0], sizes = [1, 288], strides = [1, 1]} : vector<8x288xf32> to vector<1x288xf32>
    %421 = vector.broadcast %7 : vector<32x1xf32> to vector<32x288xf32>
    %422 = vector.broadcast %420 : vector<1x288xf32> to vector<32x288xf32>
    %423 = arith.mulf %421, %422 : vector<32x288xf32>
    %424 = arith.addf %419, %423 : vector<32x288xf32>
    %425 = vector.extract_strided_slice %17 {offsets = [7, 0], sizes = [1, 288], strides = [1, 1]} : vector<8x288xf32> to vector<1x288xf32>
    %426 = vector.broadcast %8 : vector<32x1xf32> to vector<32x288xf32>
    %427 = vector.broadcast %425 : vector<1x288xf32> to vector<32x288xf32>
    %428 = arith.mulf %426, %427 : vector<32x288xf32>
    %429 = arith.addf %424, %428 : vector<32x288xf32>
    %430 = vector.extract_strided_slice %18 {offsets = [7, 0], sizes = [1, 288], strides = [1, 1]} : vector<8x288xf32> to vector<1x288xf32>
    %431 = vector.broadcast %9 : vector<32x1xf32> to vector<32x288xf32>
    %432 = vector.broadcast %430 : vector<1x288xf32> to vector<32x288xf32>
    %433 = arith.mulf %431, %432 : vector<32x288xf32>
    %434 = arith.addf %429, %433 : vector<32x288xf32>
    %435 = vector.extract_strided_slice %19 {offsets = [7, 0], sizes = [1, 288], strides = [1, 1]} : vector<8x288xf32> to vector<1x288xf32>
    %436 = vector.broadcast %10 : vector<32x1xf32> to vector<32x288xf32>
    %437 = vector.broadcast %435 : vector<1x288xf32> to vector<32x288xf32>
    %438 = arith.mulf %436, %437 : vector<32x288xf32>
    %439 = arith.addf %434, %438 : vector<32x288xf32>
    %440 = vector.extract_strided_slice %20 {offsets = [7, 0], sizes = [1, 288], strides = [1, 1]} : vector<8x288xf32> to vector<1x288xf32>
    %441 = vector.broadcast %11 : vector<32x1xf32> to vector<32x288xf32>
    %442 = vector.broadcast %440 : vector<1x288xf32> to vector<32x288xf32>
    %443 = arith.mulf %441, %442 : vector<32x288xf32>
    %444 = arith.addf %439, %443 : vector<32x288xf32>
    %445 = vector.extract_strided_slice %21 {offsets = [7, 0], sizes = [1, 288], strides = [1, 1]} : vector<8x288xf32> to vector<1x288xf32>
    %446 = vector.broadcast %12 : vector<32x1xf32> to vector<32x288xf32>
    %447 = vector.broadcast %445 : vector<1x288xf32> to vector<32x288xf32>
    %448 = arith.mulf %446, %447 : vector<32x288xf32>
    %449 = arith.addf %444, %448 : vector<32x288xf32>
    %450 = vector.extract_strided_slice %22 {offsets = [7, 0], sizes = [1, 288], strides = [1, 1]} : vector<8x288xf32> to vector<1x288xf32>
    %451 = vector.broadcast %13 : vector<32x1xf32> to vector<32x288xf32>
    %452 = vector.broadcast %450 : vector<1x288xf32> to vector<32x288xf32>
    %453 = arith.mulf %451, %452 : vector<32x288xf32>
    %454 = arith.addf %449, %453 : vector<32x288xf32>
    %455 = vector.extract_strided_slice %23 {offsets = [7, 0], sizes = [1, 288], strides = [1, 1]} : vector<8x288xf32> to vector<1x288xf32>
    %456 = vector.broadcast %14 : vector<32x1xf32> to vector<32x288xf32>
    %457 = vector.broadcast %455 : vector<1x288xf32> to vector<32x288xf32>
    %458 = arith.mulf %456, %457 : vector<32x288xf32>
    %459 = arith.addf %454, %458 : vector<32x288xf32>
    %460 = vector.broadcast %3 : vector<32x1xf32> to vector<32x288xf32>
    %461 = arith.addf %459, %460 : vector<32x288xf32>
    %cst_38 = arith.constant 0.000000e+00 : f32
    %462 = vector.broadcast %cst_38 : f32 to vector<32x288xf32>
    %463 = arith.maximumf %461, %462 : vector<32x288xf32>
    %464 = vector.broadcast %4 : vector<1x288xf32> to vector<32x288xf32>
    %465 = arith.mulf %463, %464 : vector<32x288xf32>
    %cst_39 = arith.constant dense<0.000000e+00> : vector<32xf32>
    %466 = vector.multi_reduction <add>, %465, %cst_39 [1] : vector<32x288xf32> to vector<32xf32>
    %467 = vector.shape_cast %466 : vector<32xf32> to vector<32x1xf32>
    %468 = vector.broadcast %467 : vector<32x1xf32> to vector<32x128xf32>
    %469 = arith.mulf %468, %5 : vector<32x128xf32>
    %cst_40 = arith.constant dense<0.000000e+00> : vector<128xf32>
    %470 = vector.multi_reduction <add>, %469, %cst_40 [0] : vector<32x128xf32> to vector<128xf32>
    %471 = vector.shape_cast %470 : vector<128xf32> to vector<1x128xf32>
    %472 = tpu.concatenate %79, %135, %191, %247, %303, %359, %415, %471 in 0 : vector<1x128xf32>, vector<1x128xf32>, vector<1x128xf32>, vector<1x128xf32>, vector<1x128xf32>, vector<1x128xf32>, vector<1x128xf32>, vector<1x128xf32> -> vector<8x128xf32>
    %c0_41 = arith.constant 0 : index
    %c0_42 = arith.constant 0 : index
    %473 = vector.load %arg6[%c0_41, %c0_42] : memref<1x128xf32, #tpu.memory_space<vmem>>, vector<1x128xf32>
    %474 = vector.broadcast %473 : vector<1x128xf32> to vector<8x128xf32>
    %475 = arith.addf %472, %474 : vector<8x128xf32>
    %c0_43 = arith.constant 0 : index
    %c0_44 = arith.constant 0 : index
    %476 = vector.load %arg7[%c0_43, %c0_44] : memref<8x128xf32, #tpu.memory_space<vmem>>, vector<8x128xf32>
    tpu.vector_store %arg7[%c0_43, %c0_44], %475 {strides = array<i32>} : memref<8x128xf32, #tpu.memory_space<vmem>>, vector<8x128xf32>,
    return
  }
  func.func @transform_0(%arg0: i32) -> (i32, i32, i32) {
    %c0_i32 = arith.constant 0 : i32
    %c0_i32_0 = arith.constant 0 : i32
    %c0_i32_1 = arith.constant 0 : i32
    return %arg0, %c0_i32, %c0_i32_0 : i32, i32, i32
  }
  func.func @transform_1(%arg0: i32) -> (i32, i32) {
    %c0_i32 = arith.constant 0 : i32
    %c0_i32_0 = arith.constant 0 : i32
    %c0_i32_1 = arith.constant 0 : i32
    return %c0_i32, %c0_i32_0 : i32, i32
  }
  func.func @transform_2(%arg0: i32) -> (i32, i32) {
    %c0_i32 = arith.constant 0 : i32
    %c0_i32_0 = arith.constant 0 : i32
    %c0_i32_1 = arith.constant 0 : i32
    return %c0_i32, %c0_i32_0 : i32, i32
  }
  func.func @transform_3(%arg0: i32) -> (i32, i32) {
    %c0_i32 = arith.constant 0 : i32
    %c0_i32_0 = arith.constant 0 : i32
    %c0_i32_1 = arith.constant 0 : i32
    return %c0_i32, %c0_i32_0 : i32, i32
  }
  func.func @transform_4(%arg0: i32) -> (i32, i32) {
    %c0_i32 = arith.constant 0 : i32
    %c0_i32_0 = arith.constant 0 : i32
    %c0_i32_1 = arith.constant 0 : i32
    return %c0_i32, %c0_i32_0 : i32, i32
  }
  func.func @transform_5(%arg0: i32) -> (i32, i32) {
    %c0_i32 = arith.constant 0 : i32
    %c0_i32_0 = arith.constant 0 : i32
    %c0_i32_1 = arith.constant 0 : i32
    return %c0_i32, %c0_i32_0 : i32, i32
  }
  func.func @transform_6(%arg0: i32) -> (i32, i32) {
    %c0_i32 = arith.constant 0 : i32
    %c0_i32_0 = arith.constant 0 : i32
    return %arg0, %c0_i32 : i32, i32
  }
}

</mosaic_0001>

<llo_original>
// kernel: tpu_custom_call.1
$region0: #{tpu_custom_call.1}
  #allocation0 [shape = 'u32[]', space=smem, size = 0x4, offset = 0x4, fixed_abs, tag = 'smem constant byte address 0x4 - core index']
  #allocation1 [shape = 'u32[144,128]{1,0:T(1,128)}', space=vmem, size = 0x12000, scoped, tag = 'internal scratch']
  %s0 = inlined_call_operand.vmem [shape: bf16[2,8,342], index: 0, kind: input, shape index: {}]
  %s1 = inlined_call_operand.vmem [shape: f32[32,9], index: 1, kind: input, shape index: {}]
  %s2 = inlined_call_operand.vmem [shape: f32[32,1], index: 2, kind: input, shape index: {}]
  %s3 = inlined_call_operand.vmem [shape: f32[1,288], index: 3, kind: input, shape index: {}]
  %s4 = inlined_call_operand.vmem [shape: f32[32,128], index: 4, kind: input, shape index: {}]
  %s5 = inlined_call_operand.vmem [shape: f32[1,128], index: 5, kind: input, shape index: {}]
  %s6 = inlined_call_operand.hbm [shape: f32[16,128], index: 6, kind: output, shape index: {}]
  %s7 = sld [smem:[#allocation0]]
  $region57: #{tpu_custom_call.1} parent=0
    _
  %s9 = ssub.s32 1, %s7
  %s10 = scalar_select 0, %s9, %s7
  $region1: #{tpu_custom_call.1} parent=0
    #allocation2 [shape = 'u8[8192]{0}', space=vmem, size = 0x2000, scoped, tag = 'output window, operand 0']
    #allocation3 [shape = 's32[2]{0}', space=sflag, size = 0x8, scoped, tag = 'scoped memory for tpu_custom_call.1']
    %11 = vsyncpa [#allocation3], 0
    %s12 = scalar_lea.sflag [#allocation3], 1
    %13 = vsyncpa %s12, 0
    loop: start=0, step=1, limit=4
    $region2: #{tpu_custom_call.1} parent=1 // loop_pre_header
      _
    $region3: #{tpu_custom_call.1} parent=1 // loop_header
      %s15 = sphi 0, %s19
      %p16 = scmp.ge.s32.totalorder %s15, 4
      %s25 = sphi 0, %s27
      %s28 = sphi 0, %s25
      %s29 = sphi 0, %s28
      %s45 = sphi 0, %s29
      %s49 = sphi 0, %s49
      %s51 = sphi 0, %s49
      %s52 = sphi 0, %s51
      %s66 = sphi 0, %s52
      %s70 = sphi 0, %s70
      %s72 = sphi 0, %s70
      %s73 = sphi 0, %s72
      %s87 = sphi 0, %s73
      %s91 = sphi 0, %s91
      %s93 = sphi 0, %s91
      %s94 = sphi 0, %s93
      %s108 = sphi 0, %s94
      %s112 = sphi 0, %s112
      %s114 = sphi 0, %s112
      %s115 = sphi 0, %s114
      %s129 = sphi 0, %s115
      %s133 = sphi 0, %s133
      %s135 = sphi 0, %s133
      %s136 = sphi 0, %s135
      %s150 = sphi 0, %s136
      %s156 = sphi 0, %s158
      %s159 = sphi 0, %s156
      %s160 = sphi 0, %s159
      %s176 = sphi 0, %s160
    $region4: #{tpu_custom_call.1} parent=1 // loop_header_branch
      %18 = sbr.rel (%p16) target = $region8
    $region5: #{tpu_custom_call.1} parent=1 // loop_body
      %s20 = ssub.s32 %s15, 1
      %s21 = ssub.s32 %s15, 2
      %s22 = sadd.s32 %s15, 1
      %s23 = ssub.s32 %s15, %s22
      %p24 = scmp.eq.s32.totalorder %s23, 0
      %s26 = sadd.s32 %s25, 1
      %s27 = scalar_select %p24, %s25, %s26
      %p30 = pneg %p24
      %p31 = scmp.eq.s32.totalorder %s15, 1
      %p32 = por %p30, %p31
      %p33 = scmp.ne.s32.totalorder %s25, %s28
      %p34 = scmp.eq.s32.totalorder %s15, 0
      %p35 = por %p33, %p34
      %p36 = scmp.ne.s32.totalorder %s25, %s28
      %p37 = scmp.eq.s32.totalorder %s20, 1
      %p38 = por %p36, %p37
      %p39 = scmp.ne.s32.totalorder %s28, %s29
      %p40 = scmp.eq.s32.totalorder %s20, 0
      %p41 = por %p39, %p40
      %p42 = scmp.ne.s32.totalorder %s28, %s29
      %p43 = scmp.eq.s32.totalorder %s21, 1
      %p44 = por %p42, %p43
      %p46 = scmp.ne.s32.totalorder %s29, %s45
      %p47 = scmp.eq.s32.totalorder %s21, 0
      %p48 = por %p46, %p47
      %s50 = sadd.s32 %s49, 1
      %p53 = scmp.eq.s32.totalorder %s15, 1
      %p54 = scmp.ne.s32.totalorder %s49, %s51
      %p55 = scmp.eq.s32.totalorder %s15, 0
      %p56 = por %p54, %p55
      %p57 = scmp.ne.s32.totalorder %s49, %s51
      %p58 = scmp.eq.s32.totalorder %s20, 1
      %p59 = por %p57, %p58
      %p60 = scmp.ne.s32.totalorder %s51, %s52
      %p61 = scmp.eq.s32.totalorder %s20, 0
      %p62 = por %p60, %p61
      %p63 = scmp.ne.s32.totalorder %s51, %s52
      %p64 = scmp.eq.s32.totalorder %s21, 1
      %p65 = por %p63, %p64
      %p67 = scmp.ne.s32.totalorder %s52, %s66
      %p68 = scmp.eq.s32.totalorder %s21, 0
      %p69 = por %p67, %p68
      %s71 = sadd.s32 %s70, 1
      %p74 = scmp.eq.s32.totalorder %s15, 1
      %p75 = scmp.ne.s32.totalorder %s70, %s72
      %p76 = scmp.eq.s32.totalorder %s15, 0
      %p77 = por %p75, %p76
      %p78 = scmp.ne.s32.totalorder %s70, %s72
      %p79 = scmp.eq.s32.totalorder %s20, 1
      %p80 = por %p78, %p79
      %p81 = scmp.ne.s32.totalorder %s72, %s73
      %p82 = scmp.eq.s32.totalorder %s20, 0
      %p83 = por %p81, %p82
      %p84 = scmp.ne.s32.totalorder %s72, %s73
      %p85 = scmp.eq.s32.totalorder %s21, 1
      %p86 = por %p84, %p85
      %p88 = scmp.ne.s32.totalorder %s73, %s87
      %p89 = scmp.eq.s32.totalorder %s21, 0
      %p90 = por %p88, %p89
      %s92 = sadd.s32 %s91, 1
      %p95 = scmp.eq.s32.totalorder %s15, 1
      %p96 = scmp.ne.s32.totalorder %s91, %s93
      %p97 = scmp.eq.s32.totalorder %s15, 0
      %p98 = por %p96, %p97
      %p99 = scmp.ne.s32.totalorder %s91, %s93
      %p100 = scmp.eq.s32.totalorder %s20, 1
      %p101 = por %p99, %p100
      %p102 = scmp.ne.s32.totalorder %s93, %s94
      %p103 = scmp.eq.s32.totalorder %s20, 0
      %p104 = por %p102, %p103
      %p105 = scmp.ne.s32.totalorder %s93, %s94
      %p106 = scmp.eq.s32.totalorder %s21, 1
      %p107 = por %p105, %p106
      %p109 = scmp.ne.s32.totalorder %s94, %s108
      %p110 = scmp.eq.s32.totalorder %s21, 0
      %p111 = por %p109, %p110
      %s113 = sadd.s32 %s112, 1
      %p116 = scmp.eq.s32.totalorder %s15, 1
      %p117 = scmp.ne.s32.totalorder %s112, %s114
      %p118 = scmp.eq.s32.totalorder %s15, 0
      %p119 = por %p117, %p118
      %p120 = scmp.ne.s32.totalorder %s112, %s114
      %p121 = scmp.eq.s32.totalorder %s20, 1
      %p122 = por %p120, %p121
      %p123 = scmp.ne.s32.totalorder %s114, %s115
      %p124 = scmp.eq.s32.totalorder %s20, 0
      %p125 = por %p123, %p124
      %p126 = scmp.ne.s32.totalorder %s114, %s115
      %p127 = scmp.eq.s32.totalorder %s21, 1
      %p128 = por %p126, %p127
      %p130 = scmp.ne.s32.totalorder %s115, %s129
      %p131 = scmp.eq.s32.totalorder %s21, 0
      %p132 = por %p130, %p131
      %s134 = sadd.s32 %s133, 1
      %p137 = scmp.eq.s32.totalorder %s15, 1
      %p138 = scmp.ne.s32.totalorder %s133, %s135
      %p139 = scmp.eq.s32.totalorder %s15, 0
      %p140 = por %p138, %p139
      %p141 = scmp.ne.s32.totalorder %s133, %s135
      %p142 = scmp.eq.s32.totalorder %s20, 1
      %p143 = por %p141, %p142
      %p144 = scmp.ne.s32.totalorder %s135, %s136
      %p145 = scmp.eq.s32.totalorder %s20, 0
      %p146 = por %p144, %p145
      %p147 = scmp.ne.s32.totalorder %s135, %s136
      %p148 = scmp.eq.s32.totalorder %s21, 1
      %p149 = por %p147, %p148
      %p151 = scmp.ne.s32.totalorder %s136, %s150
      %p152 = scmp.eq.s32.totalorder %s21, 0
      %p153 = por %p151, %p152
      %s154 = ssub.s32 %s15, %s22
      %p155 = scmp.eq.s32.totalorder %s154, 0
      %s157 = sadd.s32 %s156, 1
      %s158 = scalar_select %p155, %s156, %s157
      %p161 = pneg %p155
      %p162 = scmp.eq.s32.totalorder %s15, 1
      %p163 = por %p161, %p162
      %p164 = scmp.ne.s32.totalorder %s156, %s159
      %p165 = scmp.eq.s32.totalorder %s15, 0
      %p166 = por %p164, %p165
      %p167 = scmp.ne.s32.totalorder %s156, %s159
      %p168 = scmp.eq.s32.totalorder %s20, 1
      %p169 = por %p167, %p168
      %p170 = scmp.ne.s32.totalorder %s159, %s160
      %p171 = scmp.eq.s32.totalorder %s20, 0
      %p172 = por %p170, %p171
      %p173 = scmp.ne.s32.totalorder %s159, %s160
      %p174 = scmp.eq.s32.totalorder %s21, 1
      %p175 = por %p173, %p174
      %p177 = scmp.ne.s32.totalorder %s160, %s176
      %p178 = scmp.eq.s32.totalorder %s21, 0
      %p179 = por %p177, %p178
      %p180 = scmp.le.s32.totalorder 1, %s15
      %p181 = scmp.lt.s32.totalorder %s15, 3
      %p182 = pnand %p180, %p181
      %p183 = pneg %p182
      // Predicated region
      $region9: #{tpu_custom_call.1} parent=5 // pred_check
        _
      $region10: #{tpu_custom_call.1} parent=5 // pred_check_branch
        %185 = sbr.rel (%p182) target = $region12
      $region11: #{tpu_custom_call.1} parent=5 // pred_region
        %s186 = ssub.s32 %s15, 1
        // Predicated region
        $region13: #{tpu_custom_call.1} parent=11 // pred_check
          %p187 = pneg %p62
        $region14: #{tpu_custom_call.1} parent=11 // pred_check_branch
          %189 = sbr.rel (%p187) target = $region16
        $region15: #{tpu_custom_call.1} parent=11 // pred_region
          _
        $region16: #{tpu_custom_call.1} parent=11 // pred_fallthru
          _
        // Predicated region
        $region17: #{tpu_custom_call.1} parent=11 // pred_check
          %p190 = pneg %p83
        $region18: #{tpu_custom_call.1} parent=11 // pred_check_branch
          %192 = sbr.rel (%p190) target = $region20
        $region19: #{tpu_custom_call.1} parent=11 // pred_region
          _
        $region20: #{tpu_custom_call.1} parent=11 // pred_fallthru
          _
        // Predicated region
        $region21: #{tpu_custom_call.1} parent=11 // pred_check
          %p193 = pneg %p104
        $region22: #{tpu_custom_call.1} parent=11 // pred_check_branch
          %195 = sbr.rel (%p193) target = $region24
        $region23: #{tpu_custom_call.1} parent=11 // pred_region
          _
        $region24: #{tpu_custom_call.1} parent=11 // pred_fallthru
          _
        // Predicated region
        $region25: #{tpu_custom_call.1} parent=11 // pred_check
          %p196 = pneg %p125
        $region26: #{tpu_custom_call.1} parent=11 // pred_check_branch
          %198 = sbr.rel (%p196) target = $region28
        $region27: #{tpu_custom_call.1} parent=11 // pred_region
          _
        $region28: #{tpu_custom_call.1} parent=11 // pred_fallthru
          _
        // Predicated region
        $region29: #{tpu_custom_call.1} parent=11 // pred_check
          %p199 = pneg %p146
        $region30: #{tpu_custom_call.1} parent=11 // pred_check_branch
          %201 = sbr.rel (%p199) target = $region32
        $region31: #{tpu_custom_call.1} parent=11 // pred_region
          _
        $region32: #{tpu_custom_call.1} parent=11 // pred_fallthru
          _
      $region12: #{tpu_custom_call.1} parent=5 // pred_fallthru
        _
      %p202 = scmp.lt.s32.totalorder %s15, 2
      // Predicated region
      $region33: #{tpu_custom_call.1} parent=5 // pred_check
        %p203 = pneg %p202
      $region34: #{tpu_custom_call.1} parent=5 // pred_check_branch
        %205 = sbr.rel (%p203) target = $region36
      $region35: #{tpu_custom_call.1} parent=5 // pred_region
        // Predicated region
        $region37: #{tpu_custom_call.1} parent=35 // pred_check
          %p206 = pneg %p35
        $region38: #{tpu_custom_call.1} parent=35 // pred_check_branch
          %208 = sbr.rel (%p206) target = $region40
        $region39: #{tpu_custom_call.1} parent=35 // pred_region
          %p209 = scmp.lt.s32.totalorder %s15, 1
          %s210 = scalar_select %p209, %s15, 1
          %s211 = smul.addr %s210, 3
          %s212 = smul.addr %s211, 4
          %s213 = scalar_lea.vmem %s0, %s212
        $region40: #{tpu_custom_call.1} parent=35 // pred_fallthru
          _
      $region36: #{tpu_custom_call.1} parent=5 // pred_fallthru
        _
      %p214 = scmp.le.s32.totalorder 1, %s15
      %p215 = scmp.lt.s32.totalorder %s15, 3
      %p216 = pnand %p214, %p215
      %p217 = pneg %p216
      // Predicated region
      $region41: #{tpu_custom_call.1} parent=5 // pred_check
        _
      $region42: #{tpu_custom_call.1} parent=5 // pred_check_branch
        %219 = sbr.rel (%p216) target = $region44
      $region43: #{tpu_custom_call.1} parent=5 // pred_region
        %s220 = ssub.s32 %s15, 1
        %p221 = scmp.lt.s32.totalorder %s20, 1
        %s222 = scalar_select %p221, %s20, 1
        %s223 = smul.addr %s222, 3
        %s224 = smul.addr %s223, 4
        %s225 = scalar_lea.vmem %s0, %s224
        %p226 = pneg %p41
        %p227 = pneg %p38
        %p228 = pneg %p62
        %p229 = pneg %p59
        %p230 = pneg %p83
        %p231 = pneg %p80
        %p232 = pneg %p104
        %p233 = pneg %p101
        %p234 = pneg %p125
        %p235 = pneg %p122
        %p236 = pneg %p146
        %p237 = pneg %p143
        %p238 = pneg %p172
        %p239 = pneg %p169
        %s240 = sand.u32 %s159, 1
        %s241 = scalar_lea.sflag [#allocation3], %s240
        %s242 = sand.u32 %s159, 1
        %s243 = smul.addr %s242, 8
        %s244 = scalar_lea.vmem [#allocation2], %s243
        %p245 = scmp.lt.s32.totalorder %s20, 1
        %s246 = scalar_select %p245, %s20, 1
        %s247 = smul.addr %s246, 3
        %s248 = smul.addr %s247, 4
        %s249 = scalar_lea.vmem %s0, %s248
        %v250 = vld [vmem:[%s249] sm:$0xff]
        %v251 = vld [vmem:[%s249 + $0x8] sm:$0xf]
        %v252 = vunpack.c.l.bf16 %v250
        %v253 = vunpack.c.h.bf16 %v250
        %v254 = vunpack.c.l.bf16 %v251
        %v255 = vld [vmem:[%s2] sm:$0xff]
        %v256 = vld [vmem:[%s2 + $0x8] sm:$0xff]
        %v257 = vld [vmem:[%s2 + $0x10] sm:$0xff]
        %v258 = vld [vmem:[%s2 + $0x18] sm:$0xff]
        %v259 = vld [vmem:[%s3] sm:$0x7]
        %v260 = vld [vmem:[%s4] sm:$0xff]
        %v261 = vld [vmem:[%s4 + $0x8] sm:$0xff]
        %v262 = vld [vmem:[%s4 + $0x10] sm:$0xff]
        %v263 = vld [vmem:[%s4 + $0x18] sm:$0xff]
        %v264 = vld [vmem:[%s1] sm:$0xff]
        %v265 = vld [vmem:[%s1 + $0x8] sm:$0xff]
        %v266 = vld [vmem:[%s1 + $0x10] sm:$0xff]
        %v267 = vld [vmem:[%s1 + $0x18] sm:$0xff]
        %269 = vset.pattern.permute.xlu0 0
        %270 = vperm.xlu0 %269, %v264
        %v271 = vpop.permute.xlu0 %270
        %274 = vset.pattern.permute.xlu0 0
        %275 = vperm.xlu0 %274, %v265
        %v276 = vpop.permute.xlu0 %275
        %279 = vset.pattern.permute.xlu0 0
        %280 = vperm.xlu0 %279, %v266
        %v281 = vpop.permute.xlu0 %280
        %284 = vset.pattern.permute.xlu0 0
        %285 = vperm.xlu0 %284, %v267
        %v286 = vpop.permute.xlu0 %285
        %v288 = vlaneseq
        %v289 = vshrl.u32 %v288, 7
        %v290 = vsub.s32 0, %v289
        %v291 = vrot.slane %v252, %v290
        %v292 = vlaneseq
        %v293 = vshrl.u32 %v292, 7
        %v294 = vsub.s32 0, %v293
        %v295 = vrot.slane %v253, %v294
        %v296 = vlaneseq
        %v297 = vshrl.u32 %v296, 7
        %v298 = vsub.s32 0, %v297
        %v299 = vrot.slane %v254, %v298
        %v300 = vmul.f32 %v271, %v291
        %v301 = vmul.f32 %v271, %v295
        %v302 = vmul.f32 %v271, %v299
        %v303 = vmul.f32 %v276, %v291
        %v304 = vmul.f32 %v276, %v295
        %v305 = vmul.f32 %v276, %v299
        %v306 = vmul.f32 %v281, %v291
        %v307 = vmul.f32 %v281, %v295
        %v308 = vmul.f32 %v281, %v299
        %v309 = vmul.f32 %v286, %v291
        %v310 = vmul.f32 %v286, %v295
        %v311 = vmul.f32 %v286, %v299
        %312 = vset.pattern.permute.xlu0 1
        %313 = vperm.xlu0 %312, %v264
        %v314 = vpop.permute.xlu0 %313
        %316 = vset.pattern.permute.xlu0 1
        %317 = vperm.xlu0 %316, %v265
        %v318 = vpop.permute.xlu0 %317
        %320 = vset.pattern.permute.xlu0 1
        %321 = vperm.xlu0 %320, %v266
        %v322 = vpop.permute.xlu0 %321
        %324 = vset.pattern.permute.xlu0 1
        %325 = vperm.xlu0 %324, %v267
        %v326 = vpop.permute.xlu0 %325
        %v328 = vmul.f32 %v314, %v291
        %v329 = vmul.f32 %v314, %v295
        %v330 = vmul.f32 %v314, %v299
        %v331 = vmul.f32 %v318, %v291
        %v332 = vmul.f32 %v318, %v295
        %v333 = vmul.f32 %v318, %v299
        %v334 = vmul.f32 %v322, %v291
        %v335 = vmul.f32 %v322, %v295
        %v336 = vmul.f32 %v322, %v299
        %v337 = vmul.f32 %v326, %v291
        %v338 = vmul.f32 %v326, %v295
        %v339 = vmul.f32 %v326, %v299
        %352 = vrot.lane.b32.xlu0 %v328, 127
        %v353 = vpop.permute.xlu0 %352
        %354 = vrot.lane.b32.xlu0 %v329, 127
        %v355 = vpop.permute.xlu0 %354
        %356 = vrot.lane.b32.xlu0 %v330, 127
        %v357 = vpop.permute.xlu0 %356
        %358 = vrot.lane.b32.xlu0 %v331, 127
        %v359 = vpop.permute.xlu0 %358
        %360 = vrot.lane.b32.xlu0 %v332, 127
        %v361 = vpop.permute.xlu0 %360
        %362 = vrot.lane.b32.xlu0 %v333, 127
        %v363 = vpop.permute.xlu0 %362
        %364 = vrot.lane.b32.xlu0 %v334, 127
        %v365 = vpop.permute.xlu0 %364
        %366 = vrot.lane.b32.xlu0 %v335, 127
        %v367 = vpop.permute.xlu0 %366
        %368 = vrot.lane.b32.xlu0 %v336, 127
        %v369 = vpop.permute.xlu0 %368
        %370 = vrot.lane.b32.xlu0 %v337, 127
        %v371 = vpop.permute.xlu0 %370
        %372 = vrot.lane.b32.xlu0 %v338, 127
        %v373 = vpop.permute.xlu0 %372
        %374 = vrot.lane.b32.xlu0 %v339, 127
        %v375 = vpop.permute.xlu0 %374
        %vm376 = vcmask 1039360
        %v377 = vsel %vm376, %v353, %v355
        %v378 = vsel %vm376, %v355, %v357
        %v379 = vsel %vm376, %v359, %v361
        %v380 = vsel %vm376, %v361, %v363
        %v381 = vsel %vm376, %v365, %v367
        %v382 = vsel %vm376, %v367, %v369
        %v383 = vsel %vm376, %v371, %v373
        %v384 = vsel %vm376, %v373, %v375
        %v397 = vadd.f32 %v300, %v377
        %v398 = vadd.f32 %v301, %v378
        %v399 = vadd.f32 %v302, %v357
        %v400 = vadd.f32 %v303, %v379
        %v401 = vadd.f32 %v304, %v380
        %v402 = vadd.f32 %v305, %v363
        %v403 = vadd.f32 %v306, %v381
        %v404 = vadd.f32 %v307, %v382
        %v405 = vadd.f32 %v308, %v369
        %v406 = vadd.f32 %v309, %v383
        %v407 = vadd.f32 %v310, %v384
        %v408 = vadd.f32 %v311, %v375
        %409 = vset.pattern.permute.xlu0 2
        %410 = vperm.xlu0 %409, %v264
        %v411 = vpop.permute.xlu0 %410
        %413 = vset.pattern.permute.xlu0 2
        %414 = vperm.xlu0 %413, %v265
        %v415 = vpop.permute.xlu0 %414
        %417 = vset.pattern.permute.xlu0 2
        %418 = vperm.xlu0 %417, %v266
        %v419 = vpop.permute.xlu0 %418
        %421 = vset.pattern.permute.xlu0 2
        %422 = vperm.xlu0 %421, %v267
        %v423 = vpop.permute.xlu0 %422
        %v425 = vmul.f32 %v411, %v291
        %v426 = vmul.f32 %v411, %v295
        %v427 = vmul.f32 %v411, %v299
        %v428 = vmul.f32 %v415, %v291
        %v429 = vmul.f32 %v415, %v295
        %v430 = vmul.f32 %v415, %v299
        %v431 = vmul.f32 %v419, %v291
        %v432 = vmul.f32 %v419, %v295
        %v433 = vmul.f32 %v419, %v299
        %v434 = vmul.f32 %v423, %v291
        %v435 = vmul.f32 %v423, %v295
        %v436 = vmul.f32 %v423, %v299
        %449 = vrot.lane.b32.xlu0 %v425, 126
        %v450 = vpop.permute.xlu0 %449
        %451 = vrot.lane.b32.xlu0 %v426, 126
        %v452 = vpop.permute.xlu0 %451
        %453 = vrot.lane.b32.xlu0 %v427, 126
        %v454 = vpop.permute.xlu0 %453
        %455 = vrot.lane.b32.xlu0 %v428, 126
        %v456 = vpop.permute.xlu0 %455
        %457 = vrot.lane.b32.xlu0 %v429, 126
        %v458 = vpop.permute.xlu0 %457
        %459 = vrot.lane.b32.xlu0 %v430, 126
        %v460 = vpop.permute.xlu0 %459
        %461 = vrot.lane.b32.xlu0 %v431, 126
        %v462 = vpop.permute.xlu0 %461
        %463 = vrot.lane.b32.xlu0 %v432, 126
        %v464 = vpop.permute.xlu0 %463
        %465 = vrot.lane.b32.xlu0 %v433, 126
        %v466 = vpop.permute.xlu0 %465
        %467 = vrot.lane.b32.xlu0 %v434, 126
        %v468 = vpop.permute.xlu0 %467
        %469 = vrot.lane.b32.xlu0 %v435, 126
        %v470 = vpop.permute.xlu0 %469
        %471 = vrot.lane.b32.xlu0 %v436, 126
        %v472 = vpop.permute.xlu0 %471
        %vm473 = vcmask 1031168
        %v474 = vsel %vm473, %v450, %v452
        %v475 = vsel %vm473, %v452, %v454
        %v476 = vsel %vm473, %v456, %v458
        %v477 = vsel %vm473, %v458, %v460
        %v478 = vsel %vm473, %v462, %v464
        %v479 = vsel %vm473, %v464, %v466
        %v480 = vsel %vm473, %v468, %v470
        %v481 = vsel %vm473, %v470, %v472
        %v494 = vadd.f32 %v397, %v474
        %v495 = vadd.f32 %v398, %v475
        %v496 = vadd.f32 %v399, %v454
        %v497 = vadd.f32 %v400, %v476
        %v498 = vadd.f32 %v401, %v477
        %v499 = vadd.f32 %v402, %v460
        %v500 = vadd.f32 %v403, %v478
        %v501 = vadd.f32 %v404, %v479
        %v502 = vadd.f32 %v405, %v466
        %v503 = vadd.f32 %v406, %v480
        %v504 = vadd.f32 %v407, %v481
        %v505 = vadd.f32 %v408, %v472
        %506 = vset.pattern.permute.xlu0 3
        %507 = vperm.xlu0 %506, %v264
        %v508 = vpop.permute.xlu0 %507
        %510 = vset.pattern.permute.xlu0 3
        %511 = vperm.xlu0 %510, %v265
        %v512 = vpop.permute.xlu0 %511
        %514 = vset.pattern.permute.xlu0 3
        %515 = vperm.xlu0 %514, %v266
        %v516 = vpop.permute.xlu0 %515
        %518 = vset.pattern.permute.xlu0 3
        %519 = vperm.xlu0 %518, %v267
        %v520 = vpop.permute.xlu0 %519
        %v522 = vmul.f32 %v508, %v291
        %v523 = vmul.f32 %v508, %v295
        %v524 = vmul.f32 %v508, %v299
        %v525 = vmul.f32 %v512, %v291
        %v526 = vmul.f32 %v512, %v295
        %v527 = vmul.f32 %v512, %v299
        %v528 = vmul.f32 %v516, %v291
        %v529 = vmul.f32 %v516, %v295
        %v530 = vmul.f32 %v516, %v299
        %v531 = vmul.f32 %v520, %v291
        %v532 = vmul.f32 %v520, %v295
        %v533 = vmul.f32 %v520, %v299
        %546 = vrot.lane.b32.xlu0 %v522, 110
        %v547 = vpop.permute.xlu0 %546
        %548 = vrot.lane.b32.xlu0 %v523, 110
        %v549 = vpop.permute.xlu0 %548
        %550 = vrot.lane.b32.xlu0 %v524, 110
        %v551 = vpop.permute.xlu0 %550
        %552 = vrot.lane.b32.xlu0 %v525, 110
        %v553 = vpop.permute.xlu0 %552
        %554 = vrot.lane.b32.xlu0 %v526, 110
        %v555 = vpop.permute.xlu0 %554
        %556 = vrot.lane.b32.xlu0 %v527, 110
        %v557 = vpop.permute.xlu0 %556
        %558 = vrot.lane.b32.xlu0 %v528, 110
        %v559 = vpop.permute.xlu0 %558
        %560 = vrot.lane.b32.xlu0 %v529, 110
        %v561 = vpop.permute.xlu0 %560
        %562 = vrot.lane.b32.xlu0 %v530, 110
        %v563 = vpop.permute.xlu0 %562
        %564 = vrot.lane.b32.xlu0 %v531, 110
        %v565 = vpop.permute.xlu0 %564
        %566 = vrot.lane.b32.xlu0 %v532, 110
        %v567 = vpop.permute.xlu0 %566
        %568 = vrot.lane.b32.xlu0 %v533, 110
        %v569 = vpop.permute.xlu0 %568
        %vm570 = vcmask 900096
        %v571 = vsel %vm570, %v547, %v549
        %v572 = vsel %vm570, %v549, %v551
        %v573 = vsel %vm570, %v553, %v555
        %v574 = vsel %vm570, %v555, %v557
        %v575 = vsel %vm570, %v559, %v561
        %v576 = vsel %vm570, %v561, %v563
        %v577 = vsel %vm570, %v565, %v567
        %v578 = vsel %vm570, %v567, %v569
        %v591 = vadd.f32 %v494, %v571
        %v592 = vadd.f32 %v495, %v572
        %v593 = vadd.f32 %v496, %v551
        %v594 = vadd.f32 %v497, %v573
        %v595 = vadd.f32 %v498, %v574
        %v596 = vadd.f32 %v499, %v557
        %v597 = vadd.f32 %v500, %v575
        %v598 = vadd.f32 %v501, %v576
        %v599 = vadd.f32 %v502, %v563
        %v600 = vadd.f32 %v503, %v577
        %v601 = vadd.f32 %v504, %v578
        %v602 = vadd.f32 %v505, %v569
        %603 = vset.pattern.permute.xlu0 4
        %604 = vperm.xlu0 %603, %v264
        %v605 = vpop.permute.xlu0 %604
        %607 = vset.pattern.permute.xlu0 4
        %608 = vperm.xlu0 %607, %v265
        %v609 = vpop.permute.xlu0 %608
        %611 = vset.pattern.permute.xlu0 4
        %612 = vperm.xlu0 %611, %v266
        %v613 = vpop.permute.xlu0 %612
        %615 = vset.pattern.permute.xlu0 4
        %616 = vperm.xlu0 %615, %v267
        %v617 = vpop.permute.xlu0 %616
        %v619 = vmul.f32 %v605, %v291
        %v620 = vmul.f32 %v605, %v295
        %v621 = vmul.f32 %v605, %v299
        %v622 = vmul.f32 %v609, %v291
        %v623 = vmul.f32 %v609, %v295
        %v624 = vmul.f32 %v609, %v299
        %v625 = vmul.f32 %v613, %v291
        %v626 = vmul.f32 %v613, %v295
        %v627 = vmul.f32 %v613, %v299
        %v628 = vmul.f32 %v617, %v291
        %v629 = vmul.f32 %v617, %v295
        %v630 = vmul.f32 %v617, %v299
        %643 = vrot.lane.b32.xlu0 %v619, 109
        %v644 = vpop.permute.xlu0 %643
        %645 = vrot.lane.b32.xlu0 %v620, 109
        %v646 = vpop.permute.xlu0 %645
        %647 = vrot.lane.b32.xlu0 %v621, 109
        %v648 = vpop.permute.xlu0 %647
        %649 = vrot.lane.b32.xlu0 %v622, 109
        %v650 = vpop.permute.xlu0 %649
        %651 = vrot.lane.b32.xlu0 %v623, 109
        %v652 = vpop.permute.xlu0 %651
        %653 = vrot.lane.b32.xlu0 %v624, 109
        %v654 = vpop.permute.xlu0 %653
        %655 = vrot.lane.b32.xlu0 %v625, 109
        %v656 = vpop.permute.xlu0 %655
        %657 = vrot.lane.b32.xlu0 %v626, 109
        %v658 = vpop.permute.xlu0 %657
        %659 = vrot.lane.b32.xlu0 %v627, 109
        %v660 = vpop.permute.xlu0 %659
        %661 = vrot.lane.b32.xlu0 %v628, 109
        %v662 = vpop.permute.xlu0 %661
        %663 = vrot.lane.b32.xlu0 %v629, 109
        %v664 = vpop.permute.xlu0 %663
        %665 = vrot.lane.b32.xlu0 %v630, 109
        %v666 = vpop.permute.xlu0 %665
        %vm667 = vcmask 891904
        %v668 = vsel %vm667, %v644, %v646
        %v669 = vsel %vm667, %v646, %v648
        %v670 = vsel %vm667, %v650, %v652
        %v671 = vsel %vm667, %v652, %v654
        %v672 = vsel %vm667, %v656, %v658
        %v673 = vsel %vm667, %v658, %v660
        %v674 = vsel %vm667, %v662, %v664
        %v675 = vsel %vm667, %v664, %v666
        %v688 = vadd.f32 %v591, %v668
        %v689 = vadd.f32 %v592, %v669
        %v690 = vadd.f32 %v593, %v648
        %v691 = vadd.f32 %v594, %v670
        %v692 = vadd.f32 %v595, %v671
        %v693 = vadd.f32 %v596, %v654
        %v694 = vadd.f32 %v597, %v672
        %v695 = vadd.f32 %v598, %v673
        %v696 = vadd.f32 %v599, %v660
        %v697 = vadd.f32 %v600, %v674
        %v698 = vadd.f32 %v601, %v675
        %v699 = vadd.f32 %v602, %v666
        %700 = vset.pattern.permute.xlu0 5
        %701 = vperm.xlu0 %700, %v264
        %v702 = vpop.permute.xlu0 %701
        %704 = vset.pattern.permute.xlu0 5
        %705 = vperm.xlu0 %704, %v265
        %v706 = vpop.permute.xlu0 %705
        %708 = vset.pattern.permute.xlu0 5
        %709 = vperm.xlu0 %708, %v266
        %v710 = vpop.permute.xlu0 %709
        %712 = vset.pattern.permute.xlu0 5
        %713 = vperm.xlu0 %712, %v267
        %v714 = vpop.permute.xlu0 %713
        %v716 = vmul.f32 %v702, %v291
        %v717 = vmul.f32 %v702, %v295
        %v718 = vmul.f32 %v702, %v299
        %v719 = vmul.f32 %v706, %v291
        %v720 = vmul.f32 %v706, %v295
        %v721 = vmul.f32 %v706, %v299
        %v722 = vmul.f32 %v710, %v291
        %v723 = vmul.f32 %v710, %v295
        %v724 = vmul.f32 %v710, %v299
        %v725 = vmul.f32 %v714, %v291
        %v726 = vmul.f32 %v714, %v295
        %v727 = vmul.f32 %v714, %v299
        %740 = vrot.lane.b32.xlu0 %v716, 108
        %v741 = vpop.permute.xlu0 %740
        %742 = vrot.lane.b32.xlu0 %v717, 108
        %v743 = vpop.permute.xlu0 %742
        %744 = vrot.lane.b32.xlu0 %v718, 108
        %v745 = vpop.permute.xlu0 %744
        %746 = vrot.lane.b32.xlu0 %v719, 108
        %v747 = vpop.permute.xlu0 %746
        %748 = vrot.lane.b32.xlu0 %v720, 108
        %v749 = vpop.permute.xlu0 %748
        %750 = vrot.lane.b32.xlu0 %v721, 108
        %v751 = vpop.permute.xlu0 %750
        %752 = vrot.lane.b32.xlu0 %v722, 108
        %v753 = vpop.permute.xlu0 %752
        %754 = vrot.lane.b32.xlu0 %v723, 108
        %v755 = vpop.permute.xlu0 %754
        %756 = vrot.lane.b32.xlu0 %v724, 108
        %v757 = vpop.permute.xlu0 %756
        %758 = vrot.lane.b32.xlu0 %v725, 108
        %v759 = vpop.permute.xlu0 %758
        %760 = vrot.lane.b32.xlu0 %v726, 108
        %v761 = vpop.permute.xlu0 %760
        %762 = vrot.lane.b32.xlu0 %v727, 108
        %v763 = vpop.permute.xlu0 %762
        %vm764 = vcmask 883712
        %v765 = vsel %vm764, %v741, %v743
        %v766 = vsel %vm764, %v743, %v745
        %v767 = vsel %vm764, %v747, %v749
        %v768 = vsel %vm764, %v749, %v751
        %v769 = vsel %vm764, %v753, %v755
        %v770 = vsel %vm764, %v755, %v757
        %v771 = vsel %vm764, %v759, %v761
        %v772 = vsel %vm764, %v761, %v763
        %v785 = vadd.f32 %v688, %v765
        %v786 = vadd.f32 %v689, %v766
        %v787 = vadd.f32 %v690, %v745
        %v788 = vadd.f32 %v691, %v767
        %v789 = vadd.f32 %v692, %v768
        %v790 = vadd.f32 %v693, %v751
        %v791 = vadd.f32 %v694, %v769
        %v792 = vadd.f32 %v695, %v770
        %v793 = vadd.f32 %v696, %v757
        %v794 = vadd.f32 %v697, %v771
        %v795 = vadd.f32 %v698, %v772
        %v796 = vadd.f32 %v699, %v763
        %797 = vset.pattern.permute.xlu0 6
        %798 = vperm.xlu0 %797, %v264
        %v799 = vpop.permute.xlu0 %798
        %801 = vset.pattern.permute.xlu0 6
        %802 = vperm.xlu0 %801, %v265
        %v803 = vpop.permute.xlu0 %802
        %805 = vset.pattern.permute.xlu0 6
        %806 = vperm.xlu0 %805, %v266
        %v807 = vpop.permute.xlu0 %806
        %809 = vset.pattern.permute.xlu0 6
        %810 = vperm.xlu0 %809, %v267
        %v811 = vpop.permute.xlu0 %810
        %v813 = vmul.f32 %v799, %v291
        %v814 = vmul.f32 %v799, %v295
        %v815 = vmul.f32 %v799, %v299
        %v816 = vmul.f32 %v803, %v291
        %v817 = vmul.f32 %v803, %v295
        %v818 = vmul.f32 %v803, %v299
        %v819 = vmul.f32 %v807, %v291
        %v820 = vmul.f32 %v807, %v295
        %v821 = vmul.f32 %v807, %v299
        %v822 = vmul.f32 %v811, %v291
        %v823 = vmul.f32 %v811, %v295
        %v824 = vmul.f32 %v811, %v299
        %837 = vrot.lane.b32.xlu0 %v813, 92
        %v838 = vpop.permute.xlu0 %837
        %839 = vrot.lane.b32.xlu0 %v814, 92
        %v840 = vpop.permute.xlu0 %839
        %841 = vrot.lane.b32.xlu0 %v815, 92
        %v842 = vpop.permute.xlu0 %841
        %843 = vrot.lane.b32.xlu0 %v816, 92
        %v844 = vpop.permute.xlu0 %843
        %845 = vrot.lane.b32.xlu0 %v817, 92
        %v846 = vpop.permute.xlu0 %845
        %847 = vrot.lane.b32.xlu0 %v818, 92
        %v848 = vpop.permute.xlu0 %847
        %849 = vrot.lane.b32.xlu0 %v819, 92
        %v850 = vpop.permute.xlu0 %849
        %851 = vrot.lane.b32.xlu0 %v820, 92
        %v852 = vpop.permute.xlu0 %851
        %853 = vrot.lane.b32.xlu0 %v821, 92
        %v854 = vpop.permute.xlu0 %853
        %855 = vrot.lane.b32.xlu0 %v822, 92
        %v856 = vpop.permute.xlu0 %855
        %857 = vrot.lane.b32.xlu0 %v823, 92
        %v858 = vpop.permute.xlu0 %857
        %859 = vrot.lane.b32.xlu0 %v824, 92
        %v860 = vpop.permute.xlu0 %859
        %vm861 = vcmask 752640
        %v862 = vsel %vm861, %v838, %v840
        %v863 = vsel %vm861, %v840, %v842
        %v864 = vsel %vm861, %v844, %v846
        %v865 = vsel %vm861, %v846, %v848
        %v866 = vsel %vm861, %v850, %v852
        %v867 = vsel %vm861, %v852, %v854
        %v868 = vsel %vm861, %v856, %v858
        %v869 = vsel %vm861, %v858, %v860
        %v882 = vadd.f32 %v785, %v862
        %v883 = vadd.f32 %v786, %v863
        %v884 = vadd.f32 %v787, %v842
        %v885 = vadd.f32 %v788, %v864
        %v886 = vadd.f32 %v789, %v865
        %v887 = vadd.f32 %v790, %v848
        %v888 = vadd.f32 %v791, %v866
        %v889 = vadd.f32 %v792, %v867
        %v890 = vadd.f32 %v793, %v854
        %v891 = vadd.f32 %v794, %v868
        %v892 = vadd.f32 %v795, %v869
        %v893 = vadd.f32 %v796, %v860
        %894 = vset.pattern.permute.xlu0 7
        %895 = vperm.xlu0 %894, %v264
        %v896 = vpop.permute.xlu0 %895
        %898 = vset.pattern.permute.xlu0 7
        %899 = vperm.xlu0 %898, %v265
        %v900 = vpop.permute.xlu0 %899
        %902 = vset.pattern.permute.xlu0 7
        %903 = vperm.xlu0 %902, %v266
        %v904 = vpop.permute.xlu0 %903
        %906 = vset.pattern.permute.xlu0 7
        %907 = vperm.xlu0 %906, %v267
        %v908 = vpop.permute.xlu0 %907
        %v910 = vmul.f32 %v896, %v291
        %v911 = vmul.f32 %v896, %v295
        %v912 = vmul.f32 %v896, %v299
        %v913 = vmul.f32 %v900, %v291
        %v914 = vmul.f32 %v900, %v295
        %v915 = vmul.f32 %v900, %v299
        %v916 = vmul.f32 %v904, %v291
        %v917 = vmul.f32 %v904, %v295
        %v918 = vmul.f32 %v904, %v299
        %v919 = vmul.f32 %v908, %v291
        %v920 = vmul.f32 %v908, %v295
        %v921 = vmul.f32 %v908, %v299
        %934 = vrot.lane.b32.xlu0 %v910, 91
        %v935 = vpop.permute.xlu0 %934
        %936 = vrot.lane.b32.xlu0 %v911, 91
        %v937 = vpop.permute.xlu0 %936
        %938 = vrot.lane.b32.xlu0 %v912, 91
        %v939 = vpop.permute.xlu0 %938
        %940 = vrot.lane.b32.xlu0 %v913, 91
        %v941 = vpop.permute.xlu0 %940
        %942 = vrot.lane.b32.xlu0 %v914, 91
        %v943 = vpop.permute.xlu0 %942
        %944 = vrot.lane.b32.xlu0 %v915, 91
        %v945 = vpop.permute.xlu0 %944
        %946 = vrot.lane.b32.xlu0 %v916, 91
        %v947 = vpop.permute.xlu0 %946
        %948 = vrot.lane.b32.xlu0 %v917, 91
        %v949 = vpop.permute.xlu0 %948
        %950 = vrot.lane.b32.xlu0 %v918, 91
        %v951 = vpop.permute.xlu0 %950
        %952 = vrot.lane.b32.xlu0 %v919, 91
        %v953 = vpop.permute.xlu0 %952
        %954 = vrot.lane.b32.xlu0 %v920, 91
        %v955 = vpop.permute.xlu0 %954
        %956 = vrot.lane.b32.xlu0 %v921, 91
        %v957 = vpop.permute.xlu0 %956
        %vm958 = vcmask 744448
        %v959 = vsel %vm958, %v935, %v937
        %v960 = vsel %vm958, %v937, %v939
        %v961 = vsel %vm958, %v941, %v943
        %v962 = vsel %vm958, %v943, %v945
        %v963 = vsel %vm958, %v947, %v949
        %v964 = vsel %vm958, %v949, %v951
        %v965 = vsel %vm958, %v953, %v955
        %v966 = vsel %vm958, %v955, %v957
        %v979 = vadd.f32 %v882, %v959
        %v980 = vadd.f32 %v883, %v960
        %v981 = vadd.f32 %v884, %v939
        %v982 = vadd.f32 %v885, %v961
        %v983 = vadd.f32 %v886, %v962
        %v984 = vadd.f32 %v887, %v945
        %v985 = vadd.f32 %v888, %v963
        %v986 = vadd.f32 %v889, %v964
        %v987 = vadd.f32 %v890, %v951
        %v988 = vadd.f32 %v891, %v965
        %v989 = vadd.f32 %v892, %v966
        %v990 = vadd.f32 %v893, %v957
        %991 = vset.pattern.permute.xlu0 8
        %992 = vperm.xlu0 %991, %v264
        %v993 = vpop.permute.xlu0 %992
        %995 = vset.pattern.permute.xlu0 8
        %996 = vperm.xlu0 %995, %v265
        %v997 = vpop.permute.xlu0 %996
        %999 = vset.pattern.permute.xlu0 8
        %1000 = vperm.xlu0 %999, %v266
        %v1001 = vpop.permute.xlu0 %1000
        %1003 = vset.pattern.permute.xlu0 8
        %1004 = vperm.xlu0 %1003, %v267
        %v1005 = vpop.permute.xlu0 %1004
        %v1007 = vmul.f32 %v993, %v291
        %v1008 = vmul.f32 %v993, %v295
        %v1009 = vmul.f32 %v993, %v299
        %v1010 = vmul.f32 %v997, %v291
        %v1011 = vmul.f32 %v997, %v295
        %v1012 = vmul.f32 %v997, %v299
        %v1013 = vmul.f32 %v1001, %v291
        %v1014 = vmul.f32 %v1001, %v295
        %v1015 = vmul.f32 %v1001, %v299
        %v1016 = vmul.f32 %v1005, %v291
        %v1017 = vmul.f32 %v1005, %v295
        %v1018 = vmul.f32 %v1005, %v299
        %1031 = vrot.lane.b32.xlu0 %v1007, 90
        %v1032 = vpop.permute.xlu0 %1031
        %1033 = vrot.lane.b32.xlu0 %v1008, 90
        %v1034 = vpop.permute.xlu0 %1033
        %1035 = vrot.lane.b32.xlu0 %v1009, 90
        %v1036 = vpop.permute.xlu0 %1035
        %1037 = vrot.lane.b32.xlu0 %v1010, 90
        %v1038 = vpop.permute.xlu0 %1037
        %1039 = vrot.lane.b32.xlu0 %v1011, 90
        %v1040 = vpop.permute.xlu0 %1039
        %1041 = vrot.lane.b32.xlu0 %v1012, 90
        %v1042 = vpop.permute.xlu0 %1041
        %1043 = vrot.lane.b32.xlu0 %v1013, 90
        %v1044 = vpop.permute.xlu0 %1043
        %1045 = vrot.lane.b32.xlu0 %v1014, 90
        %v1046 = vpop.permute.xlu0 %1045
        %1047 = vrot.lane.b32.xlu0 %v1015, 90
        %v1048 = vpop.permute.xlu0 %1047
        %1049 = vrot.lane.b32.xlu0 %v1016, 90
        %v1050 = vpop.permute.xlu0 %1049
        %1051 = vrot.lane.b32.xlu0 %v1017, 90
        %v1052 = vpop.permute.xlu0 %1051
        %1053 = vrot.lane.b32.xlu0 %v1018, 90
        %v1054 = vpop.permute.xlu0 %1053
        %vm1055 = vcmask 736256
        %v1056 = vsel %vm1055, %v1032, %v1034
        %v1057 = vsel %vm1055, %v1034, %v1036
        %v1058 = vsel %vm1055, %v1038, %v1040
        %v1059 = vsel %vm1055, %v1040, %v1042
        %v1060 = vsel %vm1055, %v1044, %v1046
        %v1061 = vsel %vm1055, %v1046, %v1048
        %v1062 = vsel %vm1055, %v1050, %v1052
        %v1063 = vsel %vm1055, %v1052, %v1054
        %v1076 = vadd.f32 %v979, %v1056
        %v1077 = vadd.f32 %v980, %v1057
        %v1078 = vadd.f32 %v981, %v1036
        %v1079 = vadd.f32 %v982, %v1058
        %v1080 = vadd.f32 %v983, %v1059
        %v1081 = vadd.f32 %v984, %v1042
        %v1082 = vadd.f32 %v985, %v1060
        %v1083 = vadd.f32 %v986, %v1061
        %v1084 = vadd.f32 %v987, %v1048
        %v1085 = vadd.f32 %v988, %v1062
        %v1086 = vadd.f32 %v989, %v1063
        %v1087 = vadd.f32 %v990, %v1054
        %1089 = vset.pattern.permute.xlu0 0
        %1090 = vperm.xlu0 %1089, %v255
        %v1091 = vpop.permute.xlu0 %1090
        %1094 = vset.pattern.permute.xlu0 0
        %1095 = vperm.xlu0 %1094, %v256
        %v1096 = vpop.permute.xlu0 %1095
        %1099 = vset.pattern.permute.xlu0 0
        %1100 = vperm.xlu0 %1099, %v257
        %v1101 = vpop.permute.xlu0 %1100
        %1104 = vset.pattern.permute.xlu0 0
        %1105 = vperm.xlu0 %1104, %v258
        %v1106 = vpop.permute.xlu0 %1105
        %v1108 = vadd.f32 %v1076, %v1091
        %v1109 = vadd.f32 %v1077, %v1091
        %v1110 = vadd.f32 %v1078, %v1091
        %v1111 = vadd.f32 %v1079, %v1096
        %v1112 = vadd.f32 %v1080, %v1096
        %v1113 = vadd.f32 %v1081, %v1096
        %v1114 = vadd.f32 %v1082, %v1101
        %v1115 = vadd.f32 %v1083, %v1101
        %v1116 = vadd.f32 %v1084, %v1101
        %v1117 = vadd.f32 %v1085, %v1106
        %v1118 = vadd.f32 %v1086, %v1106
        %v1119 = vadd.f32 %v1087, %v1106
        %v1120 = vmax.f32 %v1108, 0.0
        %v1121 = vmax.f32 %v1109, 0.0
        %v1122 = vmax.f32 %v1110, 0.0
        %v1123 = vmax.f32 %v1111, 0.0
        %v1124 = vmax.f32 %v1112, 0.0
        %v1125 = vmax.f32 %v1113, 0.0
        %v1126 = vmax.f32 %v1114, 0.0
        %v1127 = vmax.f32 %v1115, 0.0
        %v1128 = vmax.f32 %v1116, 0.0
        %v1129 = vmax.f32 %v1117, 0.0
        %v1130 = vmax.f32 %v1118, 0.0
        %v1131 = vmax.f32 %v1119, 0.0
        %v1133 = vlaneseq
        %v1134 = vshrl.u32 %v1133, 7
        %v1135 = vsub.s32 0, %v1134
        %v1136 = vrot.slane %v259, %v1135
        %v1137 = vlaneseq
        %v1138 = vshrl.u32 %v1137, 7
        %v1139 = vsub.s32 1, %v1138
        %v1140 = vrot.slane %v259, %v1139
        %v1141 = vlaneseq
        %v1142 = vshrl.u32 %v1141, 7
        %v1143 = vsub.s32 2, %v1142
        %v1144 = vrot.slane %v259, %v1143
        %v1148 = vmul.f32 %v1120, %v1136
        %v1149 = vmul.f32 %v1121, %v1140
        %v1150 = vmul.f32 %v1122, %v1144
        %v1151 = vmul.f32 %v1123, %v1136
        %v1152 = vmul.f32 %v1124, %v1140
        %v1153 = vmul.f32 %v1125, %v1144
        %v1154 = vmul.f32 %v1126, %v1136
        %v1155 = vmul.f32 %v1127, %v1140
        %v1156 = vmul.f32 %v1128, %v1144
        %v1157 = vmul.f32 %v1129, %v1136
        %v1158 = vmul.f32 %v1130, %v1140
        %v1159 = vmul.f32 %v1131, %v1144
        %v1160 = vadd.f32 %v1148, %v1149
        %vm1161 = vcmask 261120
        %v1162 = vsel %vm1161, %v1150, 0.0
        %v1163 = vadd.f32 %v1160, %v1162
        %1164 = vadd.xlane.f32.xlu0 %v1163
        %v1165 = vpop.xlane.xlu0 %1164
        %v1166 = vadd.f32 %v1151, %v1152
        %v1167 = vsel %vm1161, %v1153, 0.0
        %v1168 = vadd.f32 %v1166, %v1167
        %1169 = vadd.xlane.f32.xlu0 %v1168
        %v1170 = vpop.xlane.xlu0 %1169
        %v1171 = vadd.f32 %v1154, %v1155
        %v1172 = vsel %vm1161, %v1156, 0.0
        %v1173 = vadd.f32 %v1171, %v1172
        %1174 = vadd.xlane.f32.xlu0 %v1173
        %v1175 = vpop.xlane.xlu0 %1174
        %v1176 = vadd.f32 %v1157, %v1158
        %v1177 = vsel %vm1161, %v1159, 0.0
        %v1178 = vadd.f32 %v1176, %v1177
        %1179 = vadd.xlane.f32.xlu0 %v1178
        %v1180 = vpop.xlane.xlu0 %1179
        %v1181 = vmul.f32 %v1165, %v260
        %v1182 = vmul.f32 %v1170, %v261
        %v1183 = vmul.f32 %v1175, %v262
        %v1184 = vmul.f32 %v1180, %v263
        %v1185 = vadd.f32 %v1181, %v1182
        %v1186 = vadd.f32 %v1185, %v1183
        %v1187 = vadd.f32 %v1186, %v1184
        %v1188 = vrot.slane %v1187, 4
        %v1189 = vadd.f32 %v1187, %v1188
        %v1190 = vrot.slane %v1189, 2
        %v1191 = vadd.f32 %v1189, %v1190
        %v1192 = vrot.slane %v1191, 1
        %v1193 = vadd.f32 %v1191, %v1192
        %v1194 = vlaneseq
        %v1195 = vshrl.u32 %v1194, 7
        %v1196 = vsub.s32 1, %v1195
        %v1197 = vrot.slane %v252, %v1196
        %v1198 = vlaneseq
        %v1199 = vshrl.u32 %v1198, 7
        %v1200 = vsub.s32 1, %v1199
        %v1201 = vrot.slane %v253, %v1200
        %v1202 = vlaneseq
        %v1203 = vshrl.u32 %v1202, 7
        %v1204 = vsub.s32 1, %v1203
        %v1205 = vrot.slane %v254, %v1204
        %v1206 = vmul.f32 %v271, %v1197
        %v1207 = vmul.f32 %v271, %v1201
        %v1208 = vmul.f32 %v271, %v1205
        %v1209 = vmul.f32 %v276, %v1197
        %v1210 = vmul.f32 %v276, %v1201
        %v1211 = vmul.f32 %v276, %v1205
        %v1212 = vmul.f32 %v281, %v1197
        %v1213 = vmul.f32 %v281, %v1201
        %v1214 = vmul.f32 %v281, %v1205
        %v1215 = vmul.f32 %v286, %v1197
        %v1216 = vmul.f32 %v286, %v1201
        %v1217 = vmul.f32 %v286, %v1205
        %v1218 = vmul.f32 %v314, %v1197
        %v1219 = vmul.f32 %v314, %v1201
        %v1220 = vmul.f32 %v314, %v1205
        %v1221 = vmul.f32 %v318, %v1197
        %v1222 = vmul.f32 %v318, %v1201
        %v1223 = vmul.f32 %v318, %v1205
        %v1224 = vmul.f32 %v322, %v1197
        %v1225 = vmul.f32 %v322, %v1201
        %v1226 = vmul.f32 %v322, %v1205
        %v1227 = vmul.f32 %v326, %v1197
        %v1228 = vmul.f32 %v326, %v1201
        %v1229 = vmul.f32 %v326, %v1205
        %1242 = vrot.lane.b32.xlu0 %v1218, 127
        %v1243 = vpop.permute.xlu0 %1242
        %1244 = vrot.lane.b32.xlu0 %v1219, 127
        %v1245 = vpop.permute.xlu0 %1244
        %1246 = vrot.lane.b32.xlu0 %v1220, 127
        %v1247 = vpop.permute.xlu0 %1246
        %1248 = vrot.lane.b32.xlu0 %v1221, 127
        %v1249 = vpop.permute.xlu0 %1248
        %1250 = vrot.lane.b32.xlu0 %v1222, 127
        %v1251 = vpop.permute.xlu0 %1250
        %1252 = vrot.lane.b32.xlu0 %v1223, 127
        %v1253 = vpop.permute.xlu0 %1252
        %1254 = vrot.lane.b32.xlu0 %v1224, 127
        %v1255 = vpop.permute.xlu0 %1254
        %1256 = vrot.lane.b32.xlu0 %v1225, 127
        %v1257 = vpop.permute.xlu0 %1256
        %1258 = vrot.lane.b32.xlu0 %v1226, 127
        %v1259 = vpop.permute.xlu0 %1258
        %1260 = vrot.lane.b32.xlu0 %v1227, 127
        %v1261 = vpop.permute.xlu0 %1260
        %1262 = vrot.lane.b32.xlu0 %v1228, 127
        %v1263 = vpop.permute.xlu0 %1262
        %1264 = vrot.lane.b32.xlu0 %v1229, 127
        %v1265 = vpop.permute.xlu0 %1264
        %v1266 = vsel %vm376, %v1243, %v1245
        %v1267 = vsel %vm376, %v1245, %v1247
        %v1268 = vsel %vm376, %v1249, %v1251
        %v1269 = vsel %vm376, %v1251, %v1253
        %v1270 = vsel %vm376, %v1255, %v1257
        %v1271 = vsel %vm376, %v1257, %v1259
        %v1272 = vsel %vm376, %v1261, %v1263
        %v1273 = vsel %vm376, %v1263, %v1265
        %v1286 = vadd.f32 %v1206, %v1266
        %v1287 = vadd.f32 %v1207, %v1267
        %v1288 = vadd.f32 %v1208, %v1247
        %v1289 = vadd.f32 %v1209, %v1268
        %v1290 = vadd.f32 %v1210, %v1269
        %v1291 = vadd.f32 %v1211, %v1253
        %v1292 = vadd.f32 %v1212, %v1270
        %v1293 = vadd.f32 %v1213, %v1271
        %v1294 = vadd.f32 %v1214, %v1259
        %v1295 = vadd.f32 %v1215, %v1272
        %v1296 = vadd.f32 %v1216, %v1273
        %v1297 = vadd.f32 %v1217, %v1265
        %v1298 = vmul.f32 %v411, %v1197
        %v1299 = vmul.f32 %v411, %v1201
        %v1300 = vmul.f32 %v411, %v1205
        %v1301 = vmul.f32 %v415, %v1197
        %v1302 = vmul.f32 %v415, %v1201
        %v1303 = vmul.f32 %v415, %v1205
        %v1304 = vmul.f32 %v419, %v1197
        %v1305 = vmul.f32 %v419, %v1201
        %v1306 = vmul.f32 %v419, %v1205
        %v1307 = vmul.f32 %v423, %v1197
        %v1308 = vmul.f32 %v423, %v1201
        %v1309 = vmul.f32 %v423, %v1205
        %1322 = vrot.lane.b32.xlu0 %v1298, 126
        %v1323 = vpop.permute.xlu0 %1322
        %1324 = vrot.lane.b32.xlu0 %v1299, 126
        %v1325 = vpop.permute.xlu0 %1324
        %1326 = vrot.lane.b32.xlu0 %v1300, 126
        %v1327 = vpop.permute.xlu0 %1326
        %1328 = vrot.lane.b32.xlu0 %v1301, 126
        %v1329 = vpop.permute.xlu0 %1328
        %1330 = vrot.lane.b32.xlu0 %v1302, 126
        %v1331 = vpop.permute.xlu0 %1330
        %1332 = vrot.lane.b32.xlu0 %v1303, 126
        %v1333 = vpop.permute.xlu0 %1332
        %1334 = vrot.lane.b32.xlu0 %v1304, 126
        %v1335 = vpop.permute.xlu0 %1334
        %1336 = vrot.lane.b32.xlu0 %v1305, 126
        %v1337 = vpop.permute.xlu0 %1336
        %1338 = vrot.lane.b32.xlu0 %v1306, 126
        %v1339 = vpop.permute.xlu0 %1338
        %1340 = vrot.lane.b32.xlu0 %v1307, 126
        %v1341 = vpop.permute.xlu0 %1340
        %1342 = vrot.lane.b32.xlu0 %v1308, 126
        %v1343 = vpop.permute.xlu0 %1342
        %1344 = vrot.lane.b32.xlu0 %v1309, 126
        %v1345 = vpop.permute.xlu0 %1344
        %v1346 = vsel %vm473, %v1323, %v1325
        %v1347 = vsel %vm473, %v1325, %v1327
        %v1348 = vsel %vm473, %v1329, %v1331
        %v1349 = vsel %vm473, %v1331, %v1333
        %v1350 = vsel %vm473, %v1335, %v1337
        %v1351 = vsel %vm473, %v1337, %v1339
        %v1352 = vsel %vm473, %v1341, %v1343
        %v1353 = vsel %vm473, %v1343, %v1345
        %v1366 = vadd.f32 %v1286, %v1346
        %v1367 = vadd.f32 %v1287, %v1347
        %v1368 = vadd.f32 %v1288, %v1327
        %v1369 = vadd.f32 %v1289, %v1348
        %v1370 = vadd.f32 %v1290, %v1349
        %v1371 = vadd.f32 %v1291, %v1333
        %v1372 = vadd.f32 %v1292, %v1350
        %v1373 = vadd.f32 %v1293, %v1351
        %v1374 = vadd.f32 %v1294, %v1339
        %v1375 = vadd.f32 %v1295, %v1352
        %v1376 = vadd.f32 %v1296, %v1353
        %v1377 = vadd.f32 %v1297, %v1345
        %v1378 = vmul.f32 %v508, %v1197
        %v1379 = vmul.f32 %v508, %v1201
        %v1380 = vmul.f32 %v508, %v1205
        %v1381 = vmul.f32 %v512, %v1197
        %v1382 = vmul.f32 %v512, %v1201
        %v1383 = vmul.f32 %v512, %v1205
        %v1384 = vmul.f32 %v516, %v1197
        %v1385 = vmul.f32 %v516, %v1201
        %v1386 = vmul.f32 %v516, %v1205
        %v1387 = vmul.f32 %v520, %v1197
        %v1388 = vmul.f32 %v520, %v1201
        %v1389 = vmul.f32 %v520, %v1205
        %1402 = vrot.lane.b32.xlu0 %v1378, 110
        %v1403 = vpop.permute.xlu0 %1402
        %1404 = vrot.lane.b32.xlu0 %v1379, 110
        %v1405 = vpop.permute.xlu0 %1404
        %1406 = vrot.lane.b32.xlu0 %v1380, 110
        %v1407 = vpop.permute.xlu0 %1406
        %1408 = vrot.lane.b32.xlu0 %v1381, 110
        %v1409 = vpop.permute.xlu0 %1408
        %1410 = vrot.lane.b32.xlu0 %v1382, 110
        %v1411 = vpop.permute.xlu0 %1410
        %1412 = vrot.lane.b32.xlu0 %v1383, 110
        %v1413 = vpop.permute.xlu0 %1412
        %1414 = vrot.lane.b32.xlu0 %v1384, 110
        %v1415 = vpop.permute.xlu0 %1414
        %1416 = vrot.lane.b32.xlu0 %v1385, 110
        %v1417 = vpop.permute.xlu0 %1416
        %1418 = vrot.lane.b32.xlu0 %v1386, 110
        %v1419 = vpop.permute.xlu0 %1418
        %1420 = vrot.lane.b32.xlu0 %v1387, 110
        %v1421 = vpop.permute.xlu0 %1420
        %1422 = vrot.lane.b32.xlu0 %v1388, 110
        %v1423 = vpop.permute.xlu0 %1422
        %1424 = vrot.lane.b32.xlu0 %v1389, 110
        %v1425 = vpop.permute.xlu0 %1424
        %v1426 = vsel %vm570, %v1403, %v1405
        %v1427 = vsel %vm570, %v1405, %v1407
        %v1428 = vsel %vm570, %v1409, %v1411
        %v1429 = vsel %vm570, %v1411, %v1413
        %v1430 = vsel %vm570, %v1415, %v1417
        %v1431 = vsel %vm570, %v1417, %v1419
        %v1432 = vsel %vm570, %v1421, %v1423
        %v1433 = vsel %vm570, %v1423, %v1425
        %v1446 = vadd.f32 %v1366, %v1426
        %v1447 = vadd.f32 %v1367, %v1427
        %v1448 = vadd.f32 %v1368, %v1407
        %v1449 = vadd.f32 %v1369, %v1428
        %v1450 = vadd.f32 %v1370, %v1429
        %v1451 = vadd.f32 %v1371, %v1413
        %v1452 = vadd.f32 %v1372, %v1430
        %v1453 = vadd.f32 %v1373, %v1431
        %v1454 = vadd.f32 %v1374, %v1419
        %v1455 = vadd.f32 %v1375, %v1432
        %v1456 = vadd.f32 %v1376, %v1433
        %v1457 = vadd.f32 %v1377, %v1425
        %v1458 = vmul.f32 %v605, %v1197
        %v1459 = vmul.f32 %v605, %v1201
        %v1460 = vmul.f32 %v605, %v1205
        %v1461 = vmul.f32 %v609, %v1197
        %v1462 = vmul.f32 %v609, %v1201
        %v1463 = vmul.f32 %v609, %v1205
        %v1464 = vmul.f32 %v613, %v1197
        %v1465 = vmul.f32 %v613, %v1201
        %v1466 = vmul.f32 %v613, %v1205
        %v1467 = vmul.f32 %v617, %v1197
        %v1468 = vmul.f32 %v617, %v1201
        %v1469 = vmul.f32 %v617, %v1205
        %1482 = vrot.lane.b32.xlu0 %v1458, 109
        %v1483 = vpop.permute.xlu0 %1482
        %1484 = vrot.lane.b32.xlu0 %v1459, 109
        %v1485 = vpop.permute.xlu0 %1484
        %1486 = vrot.lane.b32.xlu0 %v1460, 109
        %v1487 = vpop.permute.xlu0 %1486
        %1488 = vrot.lane.b32.xlu0 %v1461, 109
        %v1489 = vpop.permute.xlu0 %1488
        %1490 = vrot.lane.b32.xlu0 %v1462, 109
        %v1491 = vpop.permute.xlu0 %1490
        %1492 = vrot.lane.b32.xlu0 %v1463, 109
        %v1493 = vpop.permute.xlu0 %1492
        %1494 = vrot.lane.b32.xlu0 %v1464, 109
        %v1495 = vpop.permute.xlu0 %1494
        %1496 = vrot.lane.b32.xlu0 %v1465, 109
        %v1497 = vpop.permute.xlu0 %1496
        %1498 = vrot.lane.b32.xlu0 %v1466, 109
        %v1499 = vpop.permute.xlu0 %1498
        %1500 = vrot.lane.b32.xlu0 %v1467, 109
        %v1501 = vpop.permute.xlu0 %1500
        %1502 = vrot.lane.b32.xlu0 %v1468, 109
        %v1503 = vpop.permute.xlu0 %1502
        %1504 = vrot.lane.b32.xlu0 %v1469, 109
        %v1505 = vpop.permute.xlu0 %1504
        %v1506 = vsel %vm667, %v1483, %v1485
        %v1507 = vsel %vm667, %v1485, %v1487
        %v1508 = vsel %vm667, %v1489, %v1491
        %v1509 = vsel %vm667, %v1491, %v1493
        %v1510 = vsel %vm667, %v1495, %v1497
        %v1511 = vsel %vm667, %v1497, %v1499
        %v1512 = vsel %vm667, %v1501, %v1503
        %v1513 = vsel %vm667, %v1503, %v1505
        %v1526 = vadd.f32 %v1446, %v1506
        %v1527 = vadd.f32 %v1447, %v1507
        %v1528 = vadd.f32 %v1448, %v1487
        %v1529 = vadd.f32 %v1449, %v1508
        %v1530 = vadd.f32 %v1450, %v1509
        %v1531 = vadd.f32 %v1451, %v1493
        %v1532 = vadd.f32 %v1452, %v1510
        %v1533 = vadd.f32 %v1453, %v1511
        %v1534 = vadd.f32 %v1454, %v1499
        %v1535 = vadd.f32 %v1455, %v1512
        %v1536 = vadd.f32 %v1456, %v1513
        %v1537 = vadd.f32 %v1457, %v1505
        %v1538 = vmul.f32 %v702, %v1197
        %v1539 = vmul.f32 %v702, %v1201
        %v1540 = vmul.f32 %v702, %v1205
        %v1541 = vmul.f32 %v706, %v1197
        %v1542 = vmul.f32 %v706, %v1201
        %v1543 = vmul.f32 %v706, %v1205
        %v1544 = vmul.f32 %v710, %v1197
        %v1545 = vmul.f32 %v710, %v1201
        %v1546 = vmul.f32 %v710, %v1205
        %v1547 = vmul.f32 %v714, %v1197
        %v1548 = vmul.f32 %v714, %v1201
        %v1549 = vmul.f32 %v714, %v1205
        %1562 = vrot.lane.b32.xlu0 %v1538, 108
        %v1563 = vpop.permute.xlu0 %1562
        %1564 = vrot.lane.b32.xlu0 %v1539, 108
        %v1565 = vpop.permute.xlu0 %1564
        %1566 = vrot.lane.b32.xlu0 %v1540, 108
        %v1567 = vpop.permute.xlu0 %1566
        %1568 = vrot.lane.b32.xlu0 %v1541, 108
        %v1569 = vpop.permute.xlu0 %1568
        %1570 = vrot.lane.b32.xlu0 %v1542, 108
        %v1571 = vpop.permute.xlu0 %1570
        %1572 = vrot.lane.b32.xlu0 %v1543, 108
        %v1573 = vpop.permute.xlu0 %1572
        %1574 = vrot.lane.b32.xlu0 %v1544, 108
        %v1575 = vpop.permute.xlu0 %1574
        %1576 = vrot.lane.b32.xlu0 %v1545, 108
        %v1577 = vpop.permute.xlu0 %1576
        %1578 = vrot.lane.b32.xlu0 %v1546, 108
        %v1579 = vpop.permute.xlu0 %1578
        %1580 = vrot.lane.b32.xlu0 %v1547, 108
        %v1581 = vpop.permute.xlu0 %1580
        %1582 = vrot.lane.b32.xlu0 %v1548, 108
        %v1583 = vpop.permute.xlu0 %1582
        %1584 = vrot.lane.b32.xlu0 %v1549, 108
        %v1585 = vpop.permute.xlu0 %1584
        %v1586 = vsel %vm764, %v1563, %v1565
        %v1587 = vsel %vm764, %v1565, %v1567
        %v1588 = vsel %vm764, %v1569, %v1571
        %v1589 = vsel %vm764, %v1571, %v1573
        %v1590 = vsel %vm764, %v1575, %v1577
        %v1591 = vsel %vm764, %v1577, %v1579
        %v1592 = vsel %vm764, %v1581, %v1583
        %v1593 = vsel %vm764, %v1583, %v1585
        %v1606 = vadd.f32 %v1526, %v1586
        %v1607 = vadd.f32 %v1527, %v1587
        %v1608 = vadd.f32 %v1528, %v1567
        %v1609 = vadd.f32 %v1529, %v1588
        %v1610 = vadd.f32 %v1530, %v1589
        %v1611 = vadd.f32 %v1531, %v1573
        %v1612 = vadd.f32 %v1532, %v1590
        %v1613 = vadd.f32 %v1533, %v1591
        %v1614 = vadd.f32 %v1534, %v1579
        %v1615 = vadd.f32 %v1535, %v1592
        %v1616 = vadd.f32 %v1536, %v1593
        %v1617 = vadd.f32 %v1537, %v1585
        %v1618 = vmul.f32 %v799, %v1197
        %v1619 = vmul.f32 %v799, %v1201
        %v1620 = vmul.f32 %v799, %v1205
        %v1621 = vmul.f32 %v803, %v1197
        %v1622 = vmul.f32 %v803, %v1201
        %v1623 = vmul.f32 %v803, %v1205
        %v1624 = vmul.f32 %v807, %v1197
        %v1625 = vmul.f32 %v807, %v1201
        %v1626 = vmul.f32 %v807, %v1205
        %v1627 = vmul.f32 %v811, %v1197
        %v1628 = vmul.f32 %v811, %v1201
        %v1629 = vmul.f32 %v811, %v1205
        %1642 = vrot.lane.b32.xlu0 %v1618, 92
        %v1643 = vpop.permute.xlu0 %1642
        %1644 = vrot.lane.b32.xlu0 %v1619, 92
        %v1645 = vpop.permute.xlu0 %1644
        %1646 = vrot.lane.b32.xlu0 %v1620, 92
        %v1647 = vpop.permute.xlu0 %1646
        %1648 = vrot.lane.b32.xlu0 %v1621, 92
        %v1649 = vpop.permute.xlu0 %1648
        %1650 = vrot.lane.b32.xlu0 %v1622, 92
        %v1651 = vpop.permute.xlu0 %1650
        %1652 = vrot.lane.b32.xlu0 %v1623, 92
        %v1653 = vpop.permute.xlu0 %1652
        %1654 = vrot.lane.b32.xlu0 %v1624, 92
        %v1655 = vpop.permute.xlu0 %1654
        %1656 = vrot.lane.b32.xlu0 %v1625, 92
        %v1657 = vpop.permute.xlu0 %1656
        %1658 = vrot.lane.b32.xlu0 %v1626, 92
        %v1659 = vpop.permute.xlu0 %1658
        %1660 = vrot.lane.b32.xlu0 %v1627, 92
        %v1661 = vpop.permute.xlu0 %1660
        %1662 = vrot.lane.b32.xlu0 %v1628, 92
        %v1663 = vpop.permute.xlu0 %1662
        %1664 = vrot.lane.b32.xlu0 %v1629, 92
        %v1665 = vpop.permute.xlu0 %1664
        %v1666 = vsel %vm861, %v1643, %v1645
        %v1667 = vsel %vm861, %v1645, %v1647
        %v1668 = vsel %vm861, %v1649, %v1651
        %v1669 = vsel %vm861, %v1651, %v1653
        %v1670 = vsel %vm861, %v1655, %v1657
        %v1671 = vsel %vm861, %v1657, %v1659
        %v1672 = vsel %vm861, %v1661, %v1663
        %v1673 = vsel %vm861, %v1663, %v1665
        %v1686 = vadd.f32 %v1606, %v1666
        %v1687 = vadd.f32 %v1607, %v1667
        %v1688 = vadd.f32 %v1608, %v1647
        %v1689 = vadd.f32 %v1609, %v1668
        %v1690 = vadd.f32 %v1610, %v1669
        %v1691 = vadd.f32 %v1611, %v1653
        %v1692 = vadd.f32 %v1612, %v1670
        %v1693 = vadd.f32 %v1613, %v1671
        %v1694 = vadd.f32 %v1614, %v1659
        %v1695 = vadd.f32 %v1615, %v1672
        %v1696 = vadd.f32 %v1616, %v1673
        %v1697 = vadd.f32 %v1617, %v1665
        %v1698 = vmul.f32 %v896, %v1197
        %v1699 = vmul.f32 %v896, %v1201
        %v1700 = vmul.f32 %v896, %v1205
        %v1701 = vmul.f32 %v900, %v1197
        %v1702 = vmul.f32 %v900, %v1201
        %v1703 = vmul.f32 %v900, %v1205
        %v1704 = vmul.f32 %v904, %v1197
        %v1705 = vmul.f32 %v904, %v1201
        %v1706 = vmul.f32 %v904, %v1205
        %v1707 = vmul.f32 %v908, %v1197
        %v1708 = vmul.f32 %v908, %v1201
        %v1709 = vmul.f32 %v908, %v1205
        %1722 = vrot.lane.b32.xlu0 %v1698, 91
        %v1723 = vpop.permute.xlu0 %1722
        %1724 = vrot.lane.b32.xlu0 %v1699, 91
        %v1725 = vpop.permute.xlu0 %1724
        %1726 = vrot.lane.b32.xlu0 %v1700, 91
        %v1727 = vpop.permute.xlu0 %1726
        %1728 = vrot.lane.b32.xlu0 %v1701, 91
        %v1729 = vpop.permute.xlu0 %1728
        %1730 = vrot.lane.b32.xlu0 %v1702, 91
        %v1731 = vpop.permute.xlu0 %1730
        %1732 = vrot.lane.b32.xlu0 %v1703, 91
        %v1733 = vpop.permute.xlu0 %1732
        %1734 = vrot.lane.b32.xlu0 %v1704, 91
        %v1735 = vpop.permute.xlu0 %1734
        %1736 = vrot.lane.b32.xlu0 %v1705, 91
        %v1737 = vpop.permute.xlu0 %1736
        %1738 = vrot.lane.b32.xlu0 %v1706, 91
        %v1739 = vpop.permute.xlu0 %1738
        %1740 = vrot.lane.b32.xlu0 %v1707, 91
        %v1741 = vpop.permute.xlu0 %1740
        %1742 = vrot.lane.b32.xlu0 %v1708, 91
        %v1743 = vpop.permute.xlu0 %1742
        %1744 = vrot.lane.b32.xlu0 %v1709, 91
        %v1745 = vpop.permute.xlu0 %1744
        %v1746 = vsel %vm958, %v1723, %v1725
        %v1747 = vsel %vm958, %v1725, %v1727
        %v1748 = vsel %vm958, %v1729, %v1731
        %v1749 = vsel %vm958, %v1731, %v1733
        %v1750 = vsel %vm958, %v1735, %v1737
        %v1751 = vsel %vm958, %v1737, %v1739
        %v1752 = vsel %vm958, %v1741, %v1743
        %v1753 = vsel %vm958, %v1743, %v1745
        %v1766 = vadd.f32 %v1686, %v1746
        %v1767 = vadd.f32 %v1687, %v1747
        %v1768 = vadd.f32 %v1688, %v1727
        %v1769 = vadd.f32 %v1689, %v1748
        %v1770 = vadd.f32 %v1690, %v1749
        %v1771 = vadd.f32 %v1691, %v1733
        %v1772 = vadd.f32 %v1692, %v1750
        %v1773 = vadd.f32 %v1693, %v1751
        %v1774 = vadd.f32 %v1694, %v1739
        %v1775 = vadd.f32 %v1695, %v1752
        %v1776 = vadd.f32 %v1696, %v1753
        %v1777 = vadd.f32 %v1697, %v1745
        %v1778 = vmul.f32 %v993, %v1197
        %v1779 = vmul.f32 %v993, %v1201
        %v1780 = vmul.f32 %v993, %v1205
        %v1781 = vmul.f32 %v997, %v1197
        %v1782 = vmul.f32 %v997, %v1201
        %v1783 = vmul.f32 %v997, %v1205
        %v1784 = vmul.f32 %v1001, %v1197
        %v1785 = vmul.f32 %v1001, %v1201
        %v1786 = vmul.f32 %v1001, %v1205
        %v1787 = vmul.f32 %v1005, %v1197
        %v1788 = vmul.f32 %v1005, %v1201
        %v1789 = vmul.f32 %v1005, %v1205
        %1802 = vrot.lane.b32.xlu0 %v1778, 90
        %v1803 = vpop.permute.xlu0 %1802
        %1804 = vrot.lane.b32.xlu0 %v1779, 90
        %v1805 = vpop.permute.xlu0 %1804
        %1806 = vrot.lane.b32.xlu0 %v1780, 90
        %v1807 = vpop.permute.xlu0 %1806
        %1808 = vrot.lane.b32.xlu0 %v1781, 90
        %v1809 = vpop.permute.xlu0 %1808
        %1810 = vrot.lane.b32.xlu0 %v1782, 90
        %v1811 = vpop.permute.xlu0 %1810
        %1812 = vrot.lane.b32.xlu0 %v1783, 90
        %v1813 = vpop.permute.xlu0 %1812
        %1814 = vrot.lane.b32.xlu0 %v1784, 90
        %v1815 = vpop.permute.xlu0 %1814
        %1816 = vrot.lane.b32.xlu0 %v1785, 90
        %v1817 = vpop.permute.xlu0 %1816
        %1818 = vrot.lane.b32.xlu0 %v1786, 90
        %v1819 = vpop.permute.xlu0 %1818
        %1820 = vrot.lane.b32.xlu0 %v1787, 90
        %v1821 = vpop.permute.xlu0 %1820
        %1822 = vrot.lane.b32.xlu0 %v1788, 90
        %v1823 = vpop.permute.xlu0 %1822
        %1824 = vrot.lane.b32.xlu0 %v1789, 90
        %v1825 = vpop.permute.xlu0 %1824
        %v1826 = vsel %vm1055, %v1803, %v1805
        %v1827 = vsel %vm1055, %v1805, %v1807
        %v1828 = vsel %vm1055, %v1809, %v1811
        %v1829 = vsel %vm1055, %v1811, %v1813
        %v1830 = vsel %vm1055, %v1815, %v1817
        %v1831 = vsel %vm1055, %v1817, %v1819
        %v1832 = vsel %vm1055, %v1821, %v1823
        %v1833 = vsel %vm1055, %v1823, %v1825
        %v1846 = vadd.f32 %v1766, %v1826
        %v1847 = vadd.f32 %v1767, %v1827
        %v1848 = vadd.f32 %v1768, %v1807
        %v1849 = vadd.f32 %v1769, %v1828
        %v1850 = vadd.f32 %v1770, %v1829
        %v1851 = vadd.f32 %v1771, %v1813
        %v1852 = vadd.f32 %v1772, %v1830
        %v1853 = vadd.f32 %v1773, %v1831
        %v1854 = vadd.f32 %v1774, %v1819
        %v1855 = vadd.f32 %v1775, %v1832
        %v1856 = vadd.f32 %v1776, %v1833
        %v1857 = vadd.f32 %v1777, %v1825
        %v1858 = vadd.f32 %v1846, %v1091
        %v1859 = vadd.f32 %v1847, %v1091
        %v1860 = vadd.f32 %v1848, %v1091
        %v1861 = vadd.f32 %v1849, %v1096
        %v1862 = vadd.f32 %v1850, %v1096
        %v1863 = vadd.f32 %v1851, %v1096
        %v1864 = vadd.f32 %v1852, %v1101
        %v1865 = vadd.f32 %v1853, %v1101
        %v1866 = vadd.f32 %v1854, %v1101
        %v1867 = vadd.f32 %v1855, %v1106
        %v1868 = vadd.f32 %v1856, %v1106
        %v1869 = vadd.f32 %v1857, %v1106
        %v1870 = vmax.f32 %v1858, 0.0
        %v1871 = vmax.f32 %v1859, 0.0
        %v1872 = vmax.f32 %v1860, 0.0
        %v1873 = vmax.f32 %v1861, 0.0
        %v1874 = vmax.f32 %v1862, 0.0
        %v1875 = vmax.f32 %v1863, 0.0
        %v1876 = vmax.f32 %v1864, 0.0
        %v1877 = vmax.f32 %v1865, 0.0
        %v1878 = vmax.f32 %v1866, 0.0
        %v1879 = vmax.f32 %v1867, 0.0
        %v1880 = vmax.f32 %v1868, 0.0
        %v1881 = vmax.f32 %v1869, 0.0
        %v1882 = vmul.f32 %v1870, %v1136
        %v1883 = vmul.f32 %v1871, %v1140
        %v1884 = vmul.f32 %v1872, %v1144
        %v1885 = vmul.f32 %v1873, %v1136
        %v1886 = vmul.f32 %v1874, %v1140
        %v1887 = vmul.f32 %v1875, %v1144
        %v1888 = vmul.f32 %v1876, %v1136
        %v1889 = vmul.f32 %v1877, %v1140
        %v1890 = vmul.f32 %v1878, %v1144
        %v1891 = vmul.f32 %v1879, %v1136
        %v1892 = vmul.f32 %v1880, %v1140
        %v1893 = vmul.f32 %v1881, %v1144
        %v1894 = vadd.f32 %v1882, %v1883
        %v1895 = vsel %vm1161, %v1884, 0.0
        %v1896 = vadd.f32 %v1894, %v1895
        %1897 = vadd.xlane.f32.xlu0 %v1896
        %v1898 = vpop.xlane.xlu0 %1897
        %v1899 = vadd.f32 %v1885, %v1886
        %v1900 = vsel %vm1161, %v1887, 0.0
        %v1901 = vadd.f32 %v1899, %v1900
        %1902 = vadd.xlane.f32.xlu0 %v1901
        %v1903 = vpop.xlane.xlu0 %1902
        %v1904 = vadd.f32 %v1888, %v1889
        %v1905 = vsel %vm1161, %v1890, 0.0
        %v1906 = vadd.f32 %v1904, %v1905
        %1907 = vadd.xlane.f32.xlu0 %v1906
        %v1908 = vpop.xlane.xlu0 %1907
        %v1909 = vadd.f32 %v1891, %v1892
        %v1910 = vsel %vm1161, %v1893, 0.0
        %v1911 = vadd.f32 %v1909, %v1910
        %1912 = vadd.xlane.f32.xlu0 %v1911
        %v1913 = vpop.xlane.xlu0 %1912
        %v1914 = vmul.f32 %v1898, %v260
        %v1915 = vmul.f32 %v1903, %v261
        %v1916 = vmul.f32 %v1908, %v262
        %v1917 = vmul.f32 %v1913, %v263
        %v1918 = vadd.f32 %v1914, %v1915
        %v1919 = vadd.f32 %v1918, %v1916
        %v1920 = vadd.f32 %v1919, %v1917
        %v1921 = vrot.slane %v1920, 4
        %v1922 = vadd.f32 %v1920, %v1921
        %v1923 = vrot.slane %v1922, 2
        %v1924 = vadd.f32 %v1922, %v1923
        %v1925 = vrot.slane %v1924, 1
        %v1926 = vadd.f32 %v1924, %v1925
        %v1927 = vlaneseq
        %v1928 = vshrl.u32 %v1927, 7
        %v1929 = vsub.s32 2, %v1928
        %v1930 = vrot.slane %v252, %v1929
        %v1931 = vlaneseq
        %v1932 = vshrl.u32 %v1931, 7
        %v1933 = vsub.s32 2, %v1932
        %v1934 = vrot.slane %v253, %v1933
        %v1935 = vlaneseq
        %v1936 = vshrl.u32 %v1935, 7
        %v1937 = vsub.s32 2, %v1936
        %v1938 = vrot.slane %v254, %v1937
        %v1939 = vmul.f32 %v271, %v1930
        %v1940 = vmul.f32 %v271, %v1934
        %v1941 = vmul.f32 %v271, %v1938
        %v1942 = vmul.f32 %v276, %v1930
        %v1943 = vmul.f32 %v276, %v1934
        %v1944 = vmul.f32 %v276, %v1938
        %v1945 = vmul.f32 %v281, %v1930
        %v1946 = vmul.f32 %v281, %v1934
        %v1947 = vmul.f32 %v281, %v1938
        %v1948 = vmul.f32 %v286, %v1930
        %v1949 = vmul.f32 %v286, %v1934
        %v1950 = vmul.f32 %v286, %v1938
        %v1951 = vmul.f32 %v314, %v1930
        %v1952 = vmul.f32 %v314, %v1934
        %v1953 = vmul.f32 %v314, %v1938
        %v1954 = vmul.f32 %v318, %v1930
        %v1955 = vmul.f32 %v318, %v1934
        %v1956 = vmul.f32 %v318, %v1938
        %v1957 = vmul.f32 %v322, %v1930
        %v1958 = vmul.f32 %v322, %v1934
        %v1959 = vmul.f32 %v322, %v1938
        %v1960 = vmul.f32 %v326, %v1930
        %v1961 = vmul.f32 %v326, %v1934
        %v1962 = vmul.f32 %v326, %v1938
        %1975 = vrot.lane.b32.xlu0 %v1951, 127
        %v1976 = vpop.permute.xlu0 %1975
        %1977 = vrot.lane.b32.xlu0 %v1952, 127
        %v1978 = vpop.permute.xlu0 %1977
        %1979 = vrot.lane.b32.xlu0 %v1953, 127
        %v1980 = vpop.permute.xlu0 %1979
        %1981 = vrot.lane.b32.xlu0 %v1954, 127
        %v1982 = vpop.permute.xlu0 %1981
        %1983 = vrot.lane.b32.xlu0 %v1955, 127
        %v1984 = vpop.permute.xlu0 %1983
        %1985 = vrot.lane.b32.xlu0 %v1956, 127
        %v1986 = vpop.permute.xlu0 %1985
        %1987 = vrot.lane.b32.xlu0 %v1957, 127
        %v1988 = vpop.permute.xlu0 %1987
        %1989 = vrot.lane.b32.xlu0 %v1958, 127
        %v1990 = vpop.permute.xlu0 %1989
        %1991 = vrot.lane.b32.xlu0 %v1959, 127
        %v1992 = vpop.permute.xlu0 %1991
        %1993 = vrot.lane.b32.xlu0 %v1960, 127
        %v1994 = vpop.permute.xlu0 %1993
        %1995 = vrot.lane.b32.xlu0 %v1961, 127
        %v1996 = vpop.permute.xlu0 %1995
        %1997 = vrot.lane.b32.xlu0 %v1962, 127
        %v1998 = vpop.permute.xlu0 %1997
        %v1999 = vsel %vm376, %v1976, %v1978
        %v2000 = vsel %vm376, %v1978, %v1980
        %v2001 = vsel %vm376, %v1982, %v1984
        %v2002 = vsel %vm376, %v1984, %v1986
        %v2003 = vsel %vm376, %v1988, %v1990
        %v2004 = vsel %vm376, %v1990, %v1992
        %v2005 = vsel %vm376, %v1994, %v1996
        %v2006 = vsel %vm376, %v1996, %v1998
        %v2019 = vadd.f32 %v1939, %v1999
        %v2020 = vadd.f32 %v1940, %v2000
        %v2021 = vadd.f32 %v1941, %v1980
        %v2022 = vadd.f32 %v1942, %v2001
        %v2023 = vadd.f32 %v1943, %v2002
        %v2024 = vadd.f32 %v1944, %v1986
        %v2025 = vadd.f32 %v1945, %v2003
        %v2026 = vadd.f32 %v1946, %v2004
        %v2027 = vadd.f32 %v1947, %v1992
        %v2028 = vadd.f32 %v1948, %v2005
        %v2029 = vadd.f32 %v1949, %v2006
        %v2030 = vadd.f32 %v1950, %v1998
        %v2031 = vmul.f32 %v411, %v1930
        %v2032 = vmul.f32 %v411, %v1934
        %v2033 = vmul.f32 %v411, %v1938
        %v2034 = vmul.f32 %v415, %v1930
        %v2035 = vmul.f32 %v415, %v1934
        %v2036 = vmul.f32 %v415, %v1938
        %v2037 = vmul.f32 %v419, %v1930
        %v2038 = vmul.f32 %v419, %v1934
        %v2039 = vmul.f32 %v419, %v1938
        %v2040 = vmul.f32 %v423, %v1930
        %v2041 = vmul.f32 %v423, %v1934
        %v2042 = vmul.f32 %v423, %v1938
        %2055 = vrot.lane.b32.xlu0 %v2031, 126
        %v2056 = vpop.permute.xlu0 %2055
        %2057 = vrot.lane.b32.xlu0 %v2032, 126
        %v2058 = vpop.permute.xlu0 %2057
        %2059 = vrot.lane.b32.xlu0 %v2033, 126
        %v2060 = vpop.permute.xlu0 %2059
        %2061 = vrot.lane.b32.xlu0 %v2034, 126
        %v2062 = vpop.permute.xlu0 %2061
        %2063 = vrot.lane.b32.xlu0 %v2035, 126
        %v2064 = vpop.permute.xlu0 %2063
        %2065 = vrot.lane.b32.xlu0 %v2036, 126
        %v2066 = vpop.permute.xlu0 %2065
        %2067 = vrot.lane.b32.xlu0 %v2037, 126
        %v2068 = vpop.permute.xlu0 %2067
        %2069 = vrot.lane.b32.xlu0 %v2038, 126
        %v2070 = vpop.permute.xlu0 %2069
        %2071 = vrot.lane.b32.xlu0 %v2039, 126
        %v2072 = vpop.permute.xlu0 %2071
        %2073 = vrot.lane.b32.xlu0 %v2040, 126
        %v2074 = vpop.permute.xlu0 %2073
        %2075 = vrot.lane.b32.xlu0 %v2041, 126
        %v2076 = vpop.permute.xlu0 %2075
        %2077 = vrot.lane.b32.xlu0 %v2042, 126
        %v2078 = vpop.permute.xlu0 %2077
        %v2079 = vsel %vm473, %v2056, %v2058
        %v2080 = vsel %vm473, %v2058, %v2060
        %v2081 = vsel %vm473, %v2062, %v2064
        %v2082 = vsel %vm473, %v2064, %v2066
        %v2083 = vsel %vm473, %v2068, %v2070
        %v2084 = vsel %vm473, %v2070, %v2072
        %v2085 = vsel %vm473, %v2074, %v2076
        %v2086 = vsel %vm473, %v2076, %v2078
        %v2099 = vadd.f32 %v2019, %v2079
        %v2100 = vadd.f32 %v2020, %v2080
        %v2101 = vadd.f32 %v2021, %v2060
        %v2102 = vadd.f32 %v2022, %v2081
        %v2103 = vadd.f32 %v2023, %v2082
        %v2104 = vadd.f32 %v2024, %v2066
        %v2105 = vadd.f32 %v2025, %v2083
        %v2106 = vadd.f32 %v2026, %v2084
        %v2107 = vadd.f32 %v2027, %v2072
        %v2108 = vadd.f32 %v2028, %v2085
        %v2109 = vadd.f32 %v2029, %v2086
        %v2110 = vadd.f32 %v2030, %v2078
        %v2111 = vmul.f32 %v508, %v1930
        %v2112 = vmul.f32 %v508, %v1934
        %v2113 = vmul.f32 %v508, %v1938
        %v2114 = vmul.f32 %v512, %v1930
        %v2115 = vmul.f32 %v512, %v1934
        %v2116 = vmul.f32 %v512, %v1938
        %v2117 = vmul.f32 %v516, %v1930
        %v2118 = vmul.f32 %v516, %v1934
        %v2119 = vmul.f32 %v516, %v1938
        %v2120 = vmul.f32 %v520, %v1930
        %v2121 = vmul.f32 %v520, %v1934
        %v2122 = vmul.f32 %v520, %v1938
        %2135 = vrot.lane.b32.xlu0 %v2111, 110
        %v2136 = vpop.permute.xlu0 %2135
        %2137 = vrot.lane.b32.xlu0 %v2112, 110
        %v2138 = vpop.permute.xlu0 %2137
        %2139 = vrot.lane.b32.xlu0 %v2113, 110
        %v2140 = vpop.permute.xlu0 %2139
        %2141 = vrot.lane.b32.xlu0 %v2114, 110
        %v2142 = vpop.permute.xlu0 %2141
        %2143 = vrot.lane.b32.xlu0 %v2115, 110
        %v2144 = vpop.permute.xlu0 %2143
        %2145 = vrot.lane.b32.xlu0 %v2116, 110
        %v2146 = vpop.permute.xlu0 %2145
        %2147 = vrot.lane.b32.xlu0 %v2117, 110
        %v2148 = vpop.permute.xlu0 %2147
        %2149 = vrot.lane.b32.xlu0 %v2118, 110
        %v2150 = vpop.permute.xlu0 %2149
        %2151 = vrot.lane.b32.xlu0 %v2119, 110
        %v2152 = vpop.permute.xlu0 %2151
        %2153 = vrot.lane.b32.xlu0 %v2120, 110
        %v2154 = vpop.permute.xlu0 %2153
        %2155 = vrot.lane.b32.xlu0 %v2121, 110
        %v2156 = vpop.permute.xlu0 %2155
        %2157 = vrot.lane.b32.xlu0 %v2122, 110
        %v2158 = vpop.permute.xlu0 %2157
        %v2159 = vsel %vm570, %v2136, %v2138
        %v2160 = vsel %vm570, %v2138, %v2140
        %v2161 = vsel %vm570, %v2142, %v2144
        %v2162 = vsel %vm570, %v2144, %v2146
        %v2163 = vsel %vm570, %v2148, %v2150
        %v2164 = vsel %vm570, %v2150, %v2152
        %v2165 = vsel %vm570, %v2154, %v2156
        %v2166 = vsel %vm570, %v2156, %v2158
        %v2179 = vadd.f32 %v2099, %v2159
        %v2180 = vadd.f32 %v2100, %v2160
        %v2181 = vadd.f32 %v2101, %v2140
        %v2182 = vadd.f32 %v2102, %v2161
        %v2183 = vadd.f32 %v2103, %v2162
        %v2184 = vadd.f32 %v2104, %v2146
        %v2185 = vadd.f32 %v2105, %v2163
        %v2186 = vadd.f32 %v2106, %v2164
        %v2187 = vadd.f32 %v2107, %v2152
        %v2188 = vadd.f32 %v2108, %v2165
        %v2189 = vadd.f32 %v2109, %v2166
        %v2190 = vadd.f32 %v2110, %v2158
        %v2191 = vmul.f32 %v605, %v1930
        %v2192 = vmul.f32 %v605, %v1934
        %v2193 = vmul.f32 %v605, %v1938
        %v2194 = vmul.f32 %v609, %v1930
        %v2195 = vmul.f32 %v609, %v1934
        %v2196 = vmul.f32 %v609, %v1938
        %v2197 = vmul.f32 %v613, %v1930
        %v2198 = vmul.f32 %v613, %v1934
        %v2199 = vmul.f32 %v613, %v1938
        %v2200 = vmul.f32 %v617, %v1930
        %v2201 = vmul.f32 %v617, %v1934
        %v2202 = vmul.f32 %v617, %v1938
        %2215 = vrot.lane.b32.xlu0 %v2191, 109
        %v2216 = vpop.permute.xlu0 %2215
        %2217 = vrot.lane.b32.xlu0 %v2192, 109
        %v2218 = vpop.permute.xlu0 %2217
        %2219 = vrot.lane.b32.xlu0 %v2193, 109
        %v2220 = vpop.permute.xlu0 %2219
        %2221 = vrot.lane.b32.xlu0 %v2194, 109
        %v2222 = vpop.permute.xlu0 %2221
        %2223 = vrot.lane.b32.xlu0 %v2195, 109
        %v2224 = vpop.permute.xlu0 %2223
        %2225 = vrot.lane.b32.xlu0 %v2196, 109
        %v2226 = vpop.permute.xlu0 %2225
        %2227 = vrot.lane.b32.xlu0 %v2197, 109
        %v2228 = vpop.permute.xlu0 %2227
        %2229 = vrot.lane.b32.xlu0 %v2198, 109
        %v2230 = vpop.permute.xlu0 %2229
        %2231 = vrot.lane.b32.xlu0 %v2199, 109
        %v2232 = vpop.permute.xlu0 %2231
        %2233 = vrot.lane.b32.xlu0 %v2200, 109
        %v2234 = vpop.permute.xlu0 %2233
        %2235 = vrot.lane.b32.xlu0 %v2201, 109
        %v2236 = vpop.permute.xlu0 %2235
        %2237 = vrot.lane.b32.xlu0 %v2202, 109
        %v2238 = vpop.permute.xlu0 %2237
        %v2239 = vsel %vm667, %v2216, %v2218
        %v2240 = vsel %vm667, %v2218, %v2220
        %v2241 = vsel %vm667, %v2222, %v2224
        %v2242 = vsel %vm667, %v2224, %v2226
        %v2243 = vsel %vm667, %v2228, %v2230
        %v2244 = vsel %vm667, %v2230, %v2232
        %v2245 = vsel %vm667, %v2234, %v2236
        %v2246 = vsel %vm667, %v2236, %v2238
        %v2259 = vadd.f32 %v2179, %v2239
        %v2260 = vadd.f32 %v2180, %v2240
        %v2261 = vadd.f32 %v2181, %v2220
        %v2262 = vadd.f32 %v2182, %v2241
        %v2263 = vadd.f32 %v2183, %v2242
        %v2264 = vadd.f32 %v2184, %v2226
        %v2265 = vadd.f32 %v2185, %v2243
        %v2266 = vadd.f32 %v2186, %v2244
        %v2267 = vadd.f32 %v2187, %v2232
        %v2268 = vadd.f32 %v2188, %v2245
        %v2269 = vadd.f32 %v2189, %v2246
        %v2270 = vadd.f32 %v2190, %v2238
        %v2271 = vmul.f32 %v702, %v1930
        %v2272 = vmul.f32 %v702, %v1934
        %v2273 = vmul.f32 %v702, %v1938
        %v2274 = vmul.f32 %v706, %v1930
        %v2275 = vmul.f32 %v706, %v1934
        %v2276 = vmul.f32 %v706, %v1938
        %v2277 = vmul.f32 %v710, %v1930
        %v2278 = vmul.f32 %v710, %v1934
        %v2279 = vmul.f32 %v710, %v1938
        %v2280 = vmul.f32 %v714, %v1930
        %v2281 = vmul.f32 %v714, %v1934
        %v2282 = vmul.f32 %v714, %v1938
        %2295 = vrot.lane.b32.xlu0 %v2271, 108
        %v2296 = vpop.permute.xlu0 %2295
        %2297 = vrot.lane.b32.xlu0 %v2272, 108
        %v2298 = vpop.permute.xlu0 %2297
        %2299 = vrot.lane.b32.xlu0 %v2273, 108
        %v2300 = vpop.permute.xlu0 %2299
        %2301 = vrot.lane.b32.xlu0 %v2274, 108
        %v2302 = vpop.permute.xlu0 %2301
        %2303 = vrot.lane.b32.xlu0 %v2275, 108
        %v2304 = vpop.permute.xlu0 %2303
        %2305 = vrot.lane.b32.xlu0 %v2276, 108
        %v2306 = vpop.permute.xlu0 %2305
        %2307 = vrot.lane.b32.xlu0 %v2277, 108
        %v2308 = vpop.permute.xlu0 %2307
        %2309 = vrot.lane.b32.xlu0 %v2278, 108
        %v2310 = vpop.permute.xlu0 %2309
        %2311 = vrot.lane.b32.xlu0 %v2279, 108
        %v2312 = vpop.permute.xlu0 %2311
        %2313 = vrot.lane.b32.xlu0 %v2280, 108
        %v2314 = vpop.permute.xlu0 %2313
        %2315 = vrot.lane.b32.xlu0 %v2281, 108
        %v2316 = vpop.permute.xlu0 %2315
        %2317 = vrot.lane.b32.xlu0 %v2282, 108
        %v2318 = vpop.permute.xlu0 %2317
        %v2319 = vsel %vm764, %v2296, %v2298
        %v2320 = vsel %vm764, %v2298, %v2300
        %v2321 = vsel %vm764, %v2302, %v2304
        %v2322 = vsel %vm764, %v2304, %v2306
        %v2323 = vsel %vm764, %v2308, %v2310
        %v2324 = vsel %vm764, %v2310, %v2312
        %v2325 = vsel %vm764, %v2314, %v2316
        %v2326 = vsel %vm764, %v2316, %v2318
        %v2339 = vadd.f32 %v2259, %v2319
        %v2340 = vadd.f32 %v2260, %v2320
        %v2341 = vadd.f32 %v2261, %v2300
        %v2342 = vadd.f32 %v2262, %v2321
        %v2343 = vadd.f32 %v2263, %v2322
        %v2344 = vadd.f32 %v2264, %v2306
        %v2345 = vadd.f32 %v2265, %v2323
        %v2346 = vadd.f32 %v2266, %v2324
        %v2347 = vadd.f32 %v2267, %v2312
        %v2348 = vadd.f32 %v2268, %v2325
        %v2349 = vadd.f32 %v2269, %v2326
        %v2350 = vadd.f32 %v2270, %v2318
        %v2351 = vmul.f32 %v799, %v1930
        %v2352 = vmul.f32 %v799, %v1934
        %v2353 = vmul.f32 %v799, %v1938
        %v2354 = vmul.f32 %v803, %v1930
        %v2355 = vmul.f32 %v803, %v1934
        %v2356 = vmul.f32 %v803, %v1938
        %v2357 = vmul.f32 %v807, %v1930
        %v2358 = vmul.f32 %v807, %v1934
        %v2359 = vmul.f32 %v807, %v1938
        %v2360 = vmul.f32 %v811, %v1930
        %v2361 = vmul.f32 %v811, %v1934
        %v2362 = vmul.f32 %v811, %v1938
        %2375 = vrot.lane.b32.xlu0 %v2351, 92
        %v2376 = vpop.permute.xlu0 %2375
        %2377 = vrot.lane.b32.xlu0 %v2352, 92
        %v2378 = vpop.permute.xlu0 %2377
        %2379 = vrot.lane.b32.xlu0 %v2353, 92
        %v2380 = vpop.permute.xlu0 %2379
        %2381 = vrot.lane.b32.xlu0 %v2354, 92
        %v2382 = vpop.permute.xlu0 %2381
        %2383 = vrot.lane.b32.xlu0 %v2355, 92
        %v2384 = vpop.permute.xlu0 %2383
        %2385 = vrot.lane.b32.xlu0 %v2356, 92
        %v2386 = vpop.permute.xlu0 %2385
        %2387 = vrot.lane.b32.xlu0 %v2357, 92
        %v2388 = vpop.permute.xlu0 %2387
        %2389 = vrot.lane.b32.xlu0 %v2358, 92
        %v2390 = vpop.permute.xlu0 %2389
        %2391 = vrot.lane.b32.xlu0 %v2359, 92
        %v2392 = vpop.permute.xlu0 %2391
        %2393 = vrot.lane.b32.xlu0 %v2360, 92
        %v2394 = vpop.permute.xlu0 %2393
        %2395 = vrot.lane.b32.xlu0 %v2361, 92
        %v2396 = vpop.permute.xlu0 %2395
        %2397 = vrot.lane.b32.xlu0 %v2362, 92
        %v2398 = vpop.permute.xlu0 %2397
        %v2399 = vsel %vm861, %v2376, %v2378
        %v2400 = vsel %vm861, %v2378, %v2380
        %v2401 = vsel %vm861, %v2382, %v2384
        %v2402 = vsel %vm861, %v2384, %v2386
        %v2403 = vsel %vm861, %v2388, %v2390
        %v2404 = vsel %vm861, %v2390, %v2392
        %v2405 = vsel %vm861, %v2394, %v2396
        %v2406 = vsel %vm861, %v2396, %v2398
        %v2419 = vadd.f32 %v2339, %v2399
        %v2420 = vadd.f32 %v2340, %v2400
        %v2421 = vadd.f32 %v2341, %v2380
        %v2422 = vadd.f32 %v2342, %v2401
        %v2423 = vadd.f32 %v2343, %v2402
        %v2424 = vadd.f32 %v2344, %v2386
        %v2425 = vadd.f32 %v2345, %v2403
        %v2426 = vadd.f32 %v2346, %v2404
        %v2427 = vadd.f32 %v2347, %v2392
        %v2428 = vadd.f32 %v2348, %v2405
        %v2429 = vadd.f32 %v2349, %v2406
        %v2430 = vadd.f32 %v2350, %v2398
        %v2431 = vmul.f32 %v896, %v1930
        %v2432 = vmul.f32 %v896, %v1934
        %v2433 = vmul.f32 %v896, %v1938
        %v2434 = vmul.f32 %v900, %v1930
        %v2435 = vmul.f32 %v900, %v1934
        %v2436 = vmul.f32 %v900, %v1938
        %v2437 = vmul.f32 %v904, %v1930
        %v2438 = vmul.f32 %v904, %v1934
        %v2439 = vmul.f32 %v904, %v1938
        %v2440 = vmul.f32 %v908, %v1930
        %v2441 = vmul.f32 %v908, %v1934
        %v2442 = vmul.f32 %v908, %v1938
        %2455 = vrot.lane.b32.xlu0 %v2431, 91
        %v2456 = vpop.permute.xlu0 %2455
        %2457 = vrot.lane.b32.xlu0 %v2432, 91
        %v2458 = vpop.permute.xlu0 %2457
        %2459 = vrot.lane.b32.xlu0 %v2433, 91
        %v2460 = vpop.permute.xlu0 %2459
        %2461 = vrot.lane.b32.xlu0 %v2434, 91
        %v2462 = vpop.permute.xlu0 %2461
        %2463 = vrot.lane.b32.xlu0 %v2435, 91
        %v2464 = vpop.permute.xlu0 %2463
        %2465 = vrot.lane.b32.xlu0 %v2436, 91
        %v2466 = vpop.permute.xlu0 %2465
        %2467 = vrot.lane.b32.xlu0 %v2437, 91
        %v2468 = vpop.permute.xlu0 %2467
        %2469 = vrot.lane.b32.xlu0 %v2438, 91
        %v2470 = vpop.permute.xlu0 %2469
        %2471 = vrot.lane.b32.xlu0 %v2439, 91
        %v2472 = vpop.permute.xlu0 %2471
        %2473 = vrot.lane.b32.xlu0 %v2440, 91
        %v2474 = vpop.permute.xlu0 %2473
        %2475 = vrot.lane.b32.xlu0 %v2441, 91
        %v2476 = vpop.permute.xlu0 %2475
        %2477 = vrot.lane.b32.xlu0 %v2442, 91
        %v2478 = vpop.permute.xlu0 %2477
        %v2479 = vsel %vm958, %v2456, %v2458
        %v2480 = vsel %vm958, %v2458, %v2460
        %v2481 = vsel %vm958, %v2462, %v2464
        %v2482 = vsel %vm958, %v2464, %v2466
        %v2483 = vsel %vm958, %v2468, %v2470
        %v2484 = vsel %vm958, %v2470, %v2472
        %v2485 = vsel %vm958, %v2474, %v2476
        %v2486 = vsel %vm958, %v2476, %v2478
        %v2499 = vadd.f32 %v2419, %v2479
        %v2500 = vadd.f32 %v2420, %v2480
        %v2501 = vadd.f32 %v2421, %v2460
        %v2502 = vadd.f32 %v2422, %v2481
        %v2503 = vadd.f32 %v2423, %v2482
        %v2504 = vadd.f32 %v2424, %v2466
        %v2505 = vadd.f32 %v2425, %v2483
        %v2506 = vadd.f32 %v2426, %v2484
        %v2507 = vadd.f32 %v2427, %v2472
        %v2508 = vadd.f32 %v2428, %v2485
        %v2509 = vadd.f32 %v2429, %v2486
        %v2510 = vadd.f32 %v2430, %v2478
        %v2511 = vmul.f32 %v993, %v1930
        %v2512 = vmul.f32 %v993, %v1934
        %v2513 = vmul.f32 %v993, %v1938
        %v2514 = vmul.f32 %v997, %v1930
        %v2515 = vmul.f32 %v997, %v1934
        %v2516 = vmul.f32 %v997, %v1938
        %v2517 = vmul.f32 %v1001, %v1930
        %v2518 = vmul.f32 %v1001, %v1934
        %v2519 = vmul.f32 %v1001, %v1938
        %v2520 = vmul.f32 %v1005, %v1930
        %v2521 = vmul.f32 %v1005, %v1934
        %v2522 = vmul.f32 %v1005, %v1938
        %2535 = vrot.lane.b32.xlu0 %v2511, 90
        %v2536 = vpop.permute.xlu0 %2535
        %2537 = vrot.lane.b32.xlu0 %v2512, 90
        %v2538 = vpop.permute.xlu0 %2537
        %2539 = vrot.lane.b32.xlu0 %v2513, 90
        %v2540 = vpop.permute.xlu0 %2539
        %2541 = vrot.lane.b32.xlu0 %v2514, 90
        %v2542 = vpop.permute.xlu0 %2541
        %2543 = vrot.lane.b32.xlu0 %v2515, 90
        %v2544 = vpop.permute.xlu0 %2543
        %2545 = vrot.lane.b32.xlu0 %v2516, 90
        %v2546 = vpop.permute.xlu0 %2545
        %2547 = vrot.lane.b32.xlu0 %v2517, 90
        %v2548 = vpop.permute.xlu0 %2547
        %2549 = vrot.lane.b32.xlu0 %v2518, 90
        %v2550 = vpop.permute.xlu0 %2549
        %2551 = vrot.lane.b32.xlu0 %v2519, 90
        %v2552 = vpop.permute.xlu0 %2551
        %2553 = vrot.lane.b32.xlu0 %v2520, 90
        %v2554 = vpop.permute.xlu0 %2553
        %2555 = vrot.lane.b32.xlu0 %v2521, 90
        %v2556 = vpop.permute.xlu0 %2555
        %2557 = vrot.lane.b32.xlu0 %v2522, 90
        %v2558 = vpop.permute.xlu0 %2557
        %v2559 = vsel %vm1055, %v2536, %v2538
        %v2560 = vsel %vm1055, %v2538, %v2540
        %v2561 = vsel %vm1055, %v2542, %v2544
        %v2562 = vsel %vm1055, %v2544, %v2546
        %v2563 = vsel %vm1055, %v2548, %v2550
        %v2564 = vsel %vm1055, %v2550, %v2552
        %v2565 = vsel %vm1055, %v2554, %v2556
        %v2566 = vsel %vm1055, %v2556, %v2558
        %v2579 = vadd.f32 %v2499, %v2559
        %v2580 = vadd.f32 %v2500, %v2560
        %v2581 = vadd.f32 %v2501, %v2540
        %v2582 = vadd.f32 %v2502, %v2561
        %v2583 = vadd.f32 %v2503, %v2562
        %v2584 = vadd.f32 %v2504, %v2546
        %v2585 = vadd.f32 %v2505, %v2563
        %v2586 = vadd.f32 %v2506, %v2564
        %v2587 = vadd.f32 %v2507, %v2552
        %v2588 = vadd.f32 %v2508, %v2565
        %v2589 = vadd.f32 %v2509, %v2566
        %v2590 = vadd.f32 %v2510, %v2558
        %v2591 = vadd.f32 %v2579, %v1091
        %v2592 = vadd.f32 %v2580, %v1091
        %v2593 = vadd.f32 %v2581, %v1091
        %v2594 = vadd.f32 %v2582, %v1096
        %v2595 = vadd.f32 %v2583, %v1096
        %v2596 = vadd.f32 %v2584, %v1096
        %v2597 = vadd.f32 %v2585, %v1101
        %v2598 = vadd.f32 %v2586, %v1101
        %v2599 = vadd.f32 %v2587, %v1101
        %v2600 = vadd.f32 %v2588, %v1106
        %v2601 = vadd.f32 %v2589, %v1106
        %v2602 = vadd.f32 %v2590, %v1106
        %v2603 = vmax.f32 %v2591, 0.0
        %v2604 = vmax.f32 %v2592, 0.0
        %v2605 = vmax.f32 %v2593, 0.0
        %v2606 = vmax.f32 %v2594, 0.0
        %v2607 = vmax.f32 %v2595, 0.0
        %v2608 = vmax.f32 %v2596, 0.0
        %v2609 = vmax.f32 %v2597, 0.0
        %v2610 = vmax.f32 %v2598, 0.0
        %v2611 = vmax.f32 %v2599, 0.0
        %v2612 = vmax.f32 %v2600, 0.0
        %v2613 = vmax.f32 %v2601, 0.0
        %v2614 = vmax.f32 %v2602, 0.0
        %v2615 = vmul.f32 %v2603, %v1136
        %v2616 = vmul.f32 %v2604, %v1140
        %v2617 = vmul.f32 %v2605, %v1144
        %v2618 = vmul.f32 %v2606, %v1136
        %v2619 = vmul.f32 %v2607, %v1140
        %v2620 = vmul.f32 %v2608, %v1144
        %v2621 = vmul.f32 %v2609, %v1136
        %v2622 = vmul.f32 %v2610, %v1140
        %v2623 = vmul.f32 %v2611, %v1144
        %v2624 = vmul.f32 %v2612, %v1136
        %v2625 = vmul.f32 %v2613, %v1140
        %v2626 = vmul.f32 %v2614, %v1144
        %v2627 = vadd.f32 %v2615, %v2616
        %v2628 = vsel %vm1161, %v2617, 0.0
        %v2629 = vadd.f32 %v2627, %v2628
        %2630 = vadd.xlane.f32.xlu0 %v2629
        %v2631 = vpop.xlane.xlu0 %2630
        %v2632 = vadd.f32 %v2618, %v2619
        %v2633 = vsel %vm1161, %v2620, 0.0
        %v2634 = vadd.f32 %v2632, %v2633
        %2635 = vadd.xlane.f32.xlu0 %v2634
        %v2636 = vpop.xlane.xlu0 %2635
        %v2637 = vadd.f32 %v2621, %v2622
        %v2638 = vsel %vm1161, %v2623, 0.0
        %v2639 = vadd.f32 %v2637, %v2638
        %2640 = vadd.xlane.f32.xlu0 %v2639
        %v2641 = vpop.xlane.xlu0 %2640
        %v2642 = vadd.f32 %v2624, %v2625
        %v2643 = vsel %vm1161, %v2626, 0.0
        %v2644 = vadd.f32 %v2642, %v2643
        %2645 = vadd.xlane.f32.xlu0 %v2644
        %v2646 = vpop.xlane.xlu0 %2645
        %v2647 = vmul.f32 %v2631, %v260
        %v2648 = vmul.f32 %v2636, %v261
        %v2649 = vmul.f32 %v2641, %v262
        %v2650 = vmul.f32 %v2646, %v263
        %v2651 = vadd.f32 %v2647, %v2648
        %v2652 = vadd.f32 %v2651, %v2649
        %v2653 = vadd.f32 %v2652, %v2650
        %v2654 = vrot.slane %v2653, 4
        %v2655 = vadd.f32 %v2653, %v2654
        %v2656 = vrot.slane %v2655, 2
        %v2657 = vadd.f32 %v2655, %v2656
        %v2658 = vrot.slane %v2657, 1
        %v2659 = vadd.f32 %v2657, %v2658
        %v2660 = vlaneseq
        %v2661 = vshrl.u32 %v2660, 7
        %v2662 = vsub.s32 3, %v2661
        %v2663 = vrot.slane %v252, %v2662
        %v2664 = vlaneseq
        %v2665 = vshrl.u32 %v2664, 7
        %v2666 = vsub.s32 3, %v2665
        %v2667 = vrot.slane %v253, %v2666
        %v2668 = vlaneseq
        %v2669 = vshrl.u32 %v2668, 7
        %v2670 = vsub.s32 3, %v2669
        %v2671 = vrot.slane %v254, %v2670
        %v2672 = vmul.f32 %v271, %v2663
        %v2673 = vmul.f32 %v271, %v2667
        %v2674 = vmul.f32 %v271, %v2671
        %v2675 = vmul.f32 %v276, %v2663
        %v2676 = vmul.f32 %v276, %v2667
        %v2677 = vmul.f32 %v276, %v2671
        %v2678 = vmul.f32 %v281, %v2663
        %v2679 = vmul.f32 %v281, %v2667
        %v2680 = vmul.f32 %v281, %v2671
        %v2681 = vmul.f32 %v286, %v2663
        %v2682 = vmul.f32 %v286, %v2667
        %v2683 = vmul.f32 %v286, %v2671
        %v2684 = vmul.f32 %v314, %v2663
        %v2685 = vmul.f32 %v314, %v2667
        %v2686 = vmul.f32 %v314, %v2671
        %v2687 = vmul.f32 %v318, %v2663
        %v2688 = vmul.f32 %v318, %v2667
        %v2689 = vmul.f32 %v318, %v2671
        %v2690 = vmul.f32 %v322, %v2663
        %v2691 = vmul.f32 %v322, %v2667
        %v2692 = vmul.f32 %v322, %v2671
        %v2693 = vmul.f32 %v326, %v2663
        %v2694 = vmul.f32 %v326, %v2667
        %v2695 = vmul.f32 %v326, %v2671
        %2708 = vrot.lane.b32.xlu0 %v2684, 127
        %v2709 = vpop.permute.xlu0 %2708
        %2710 = vrot.lane.b32.xlu0 %v2685, 127
        %v2711 = vpop.permute.xlu0 %2710
        %2712 = vrot.lane.b32.xlu0 %v2686, 127
        %v2713 = vpop.permute.xlu0 %2712
        %2714 = vrot.lane.b32.xlu0 %v2687, 127
        %v2715 = vpop.permute.xlu0 %2714
        %2716 = vrot.lane.b32.xlu0 %v2688, 127
        %v2717 = vpop.permute.xlu0 %2716
        %2718 = vrot.lane.b32.xlu0 %v2689, 127
        %v2719 = vpop.permute.xlu0 %2718
        %2720 = vrot.lane.b32.xlu0 %v2690, 127
        %v2721 = vpop.permute.xlu0 %2720
        %2722 = vrot.lane.b32.xlu0 %v2691, 127
        %v2723 = vpop.permute.xlu0 %2722
        %2724 = vrot.lane.b32.xlu0 %v2692, 127
        %v2725 = vpop.permute.xlu0 %2724
        %2726 = vrot.lane.b32.xlu0 %v2693, 127
        %v2727 = vpop.permute.xlu0 %2726
        %2728 = vrot.lane.b32.xlu0 %v2694, 127
        %v2729 = vpop.permute.xlu0 %2728
        %2730 = vrot.lane.b32.xlu0 %v2695, 127
        %v2731 = vpop.permute.xlu0 %2730
        %v2732 = vsel %vm376, %v2709, %v2711
        %v2733 = vsel %vm376, %v2711, %v2713
        %v2734 = vsel %vm376, %v2715, %v2717
        %v2735 = vsel %vm376, %v2717, %v2719
        %v2736 = vsel %vm376, %v2721, %v2723
        %v2737 = vsel %vm376, %v2723, %v2725
        %v2738 = vsel %vm376, %v2727, %v2729
        %v2739 = vsel %vm376, %v2729, %v2731
        %v2752 = vadd.f32 %v2672, %v2732
        %v2753 = vadd.f32 %v2673, %v2733
        %v2754 = vadd.f32 %v2674, %v2713
        %v2755 = vadd.f32 %v2675, %v2734
        %v2756 = vadd.f32 %v2676, %v2735
        %v2757 = vadd.f32 %v2677, %v2719
        %v2758 = vadd.f32 %v2678, %v2736
        %v2759 = vadd.f32 %v2679, %v2737
        %v2760 = vadd.f32 %v2680, %v2725
        %v2761 = vadd.f32 %v2681, %v2738
        %v2762 = vadd.f32 %v2682, %v2739
        %v2763 = vadd.f32 %v2683, %v2731
        %v2764 = vmul.f32 %v411, %v2663
        %v2765 = vmul.f32 %v411, %v2667
        %v2766 = vmul.f32 %v411, %v2671
        %v2767 = vmul.f32 %v415, %v2663
        %v2768 = vmul.f32 %v415, %v2667
        %v2769 = vmul.f32 %v415, %v2671
        %v2770 = vmul.f32 %v419, %v2663
        %v2771 = vmul.f32 %v419, %v2667
        %v2772 = vmul.f32 %v419, %v2671
        %v2773 = vmul.f32 %v423, %v2663
        %v2774 = vmul.f32 %v423, %v2667
        %v2775 = vmul.f32 %v423, %v2671
        %2788 = vrot.lane.b32.xlu0 %v2764, 126
        %v2789 = vpop.permute.xlu0 %2788
        %2790 = vrot.lane.b32.xlu0 %v2765, 126
        %v2791 = vpop.permute.xlu0 %2790
        %2792 = vrot.lane.b32.xlu0 %v2766, 126
        %v2793 = vpop.permute.xlu0 %2792
        %2794 = vrot.lane.b32.xlu0 %v2767, 126
        %v2795 = vpop.permute.xlu0 %2794
        %2796 = vrot.lane.b32.xlu0 %v2768, 126
        %v2797 = vpop.permute.xlu0 %2796
        %2798 = vrot.lane.b32.xlu0 %v2769, 126
        %v2799 = vpop.permute.xlu0 %2798
        %2800 = vrot.lane.b32.xlu0 %v2770, 126
        %v2801 = vpop.permute.xlu0 %2800
        %2802 = vrot.lane.b32.xlu0 %v2771, 126
        %v2803 = vpop.permute.xlu0 %2802
        %2804 = vrot.lane.b32.xlu0 %v2772, 126
        %v2805 = vpop.permute.xlu0 %2804
        %2806 = vrot.lane.b32.xlu0 %v2773, 126
        %v2807 = vpop.permute.xlu0 %2806
        %2808 = vrot.lane.b32.xlu0 %v2774, 126
        %v2809 = vpop.permute.xlu0 %2808
        %2810 = vrot.lane.b32.xlu0 %v2775, 126
        %v2811 = vpop.permute.xlu0 %2810
        %v2812 = vsel %vm473, %v2789, %v2791
        %v2813 = vsel %vm473, %v2791, %v2793
        %v2814 = vsel %vm473, %v2795, %v2797
        %v2815 = vsel %vm473, %v2797, %v2799
        %v2816 = vsel %vm473, %v2801, %v2803
        %v2817 = vsel %vm473, %v2803, %v2805
        %v2818 = vsel %vm473, %v2807, %v2809
        %v2819 = vsel %vm473, %v2809, %v2811
        %v2832 = vadd.f32 %v2752, %v2812
        %v2833 = vadd.f32 %v2753, %v2813
        %v2834 = vadd.f32 %v2754, %v2793
        %v2835 = vadd.f32 %v2755, %v2814
        %v2836 = vadd.f32 %v2756, %v2815
        %v2837 = vadd.f32 %v2757, %v2799
        %v2838 = vadd.f32 %v2758, %v2816
        %v2839 = vadd.f32 %v2759, %v2817
        %v2840 = vadd.f32 %v2760, %v2805
        %v2841 = vadd.f32 %v2761, %v2818
        %v2842 = vadd.f32 %v2762, %v2819
        %v2843 = vadd.f32 %v2763, %v2811
        %v2844 = vmul.f32 %v508, %v2663
        %v2845 = vmul.f32 %v508, %v2667
        %v2846 = vmul.f32 %v508, %v2671
        %v2847 = vmul.f32 %v512, %v2663
        %v2848 = vmul.f32 %v512, %v2667
        %v2849 = vmul.f32 %v512, %v2671
        %v2850 = vmul.f32 %v516, %v2663
        %v2851 = vmul.f32 %v516, %v2667
        %v2852 = vmul.f32 %v516, %v2671
        %v2853 = vmul.f32 %v520, %v2663
        %v2854 = vmul.f32 %v520, %v2667
        %v2855 = vmul.f32 %v520, %v2671
        %2868 = vrot.lane.b32.xlu0 %v2844, 110
        %v2869 = vpop.permute.xlu0 %2868
        %2870 = vrot.lane.b32.xlu0 %v2845, 110
        %v2871 = vpop.permute.xlu0 %2870
        %2872 = vrot.lane.b32.xlu0 %v2846, 110
        %v2873 = vpop.permute.xlu0 %2872
        %2874 = vrot.lane.b32.xlu0 %v2847, 110
        %v2875 = vpop.permute.xlu0 %2874
        %2876 = vrot.lane.b32.xlu0 %v2848, 110
        %v2877 = vpop.permute.xlu0 %2876
        %2878 = vrot.lane.b32.xlu0 %v2849, 110
        %v2879 = vpop.permute.xlu0 %2878
        %2880 = vrot.lane.b32.xlu0 %v2850, 110
        %v2881 = vpop.permute.xlu0 %2880
        %2882 = vrot.lane.b32.xlu0 %v2851, 110
        %v2883 = vpop.permute.xlu0 %2882
        %2884 = vrot.lane.b32.xlu0 %v2852, 110
        %v2885 = vpop.permute.xlu0 %2884
        %2886 = vrot.lane.b32.xlu0 %v2853, 110
        %v2887 = vpop.permute.xlu0 %2886
        %2888 = vrot.lane.b32.xlu0 %v2854, 110
        %v2889 = vpop.permute.xlu0 %2888
        %2890 = vrot.lane.b32.xlu0 %v2855, 110
        %v2891 = vpop.permute.xlu0 %2890
        %v2892 = vsel %vm570, %v2869, %v2871
        %v2893 = vsel %vm570, %v2871, %v2873
        %v2894 = vsel %vm570, %v2875, %v2877
        %v2895 = vsel %vm570, %v2877, %v2879
        %v2896 = vsel %vm570, %v2881, %v2883
        %v2897 = vsel %vm570, %v2883, %v2885
        %v2898 = vsel %vm570, %v2887, %v2889
        %v2899 = vsel %vm570, %v2889, %v2891
        %v2912 = vadd.f32 %v2832, %v2892
        %v2913 = vadd.f32 %v2833, %v2893
        %v2914 = vadd.f32 %v2834, %v2873
        %v2915 = vadd.f32 %v2835, %v2894
        %v2916 = vadd.f32 %v2836, %v2895
        %v2917 = vadd.f32 %v2837, %v2879
        %v2918 = vadd.f32 %v2838, %v2896
        %v2919 = vadd.f32 %v2839, %v2897
        %v2920 = vadd.f32 %v2840, %v2885
        %v2921 = vadd.f32 %v2841, %v2898
        %v2922 = vadd.f32 %v2842, %v2899
        %v2923 = vadd.f32 %v2843, %v2891
        %v2924 = vmul.f32 %v605, %v2663
        %v2925 = vmul.f32 %v605, %v2667
        %v2926 = vmul.f32 %v605, %v2671
        %v2927 = vmul.f32 %v609, %v2663
        %v2928 = vmul.f32 %v609, %v2667
        %v2929 = vmul.f32 %v609, %v2671
        %v2930 = vmul.f32 %v613, %v2663
        %v2931 = vmul.f32 %v613, %v2667
        %v2932 = vmul.f32 %v613, %v2671
        %v2933 = vmul.f32 %v617, %v2663
        %v2934 = vmul.f32 %v617, %v2667
        %v2935 = vmul.f32 %v617, %v2671
        %2948 = vrot.lane.b32.xlu0 %v2924, 109
        %v2949 = vpop.permute.xlu0 %2948
        %2950 = vrot.lane.b32.xlu0 %v2925, 109
        %v2951 = vpop.permute.xlu0 %2950
        %2952 = vrot.lane.b32.xlu0 %v2926, 109
        %v2953 = vpop.permute.xlu0 %2952
        %2954 = vrot.lane.b32.xlu0 %v2927, 109
        %v2955 = vpop.permute.xlu0 %2954
        %2956 = vrot.lane.b32.xlu0 %v2928, 109
        %v2957 = vpop.permute.xlu0 %2956
        %2958 = vrot.lane.b32.xlu0 %v2929, 109
        %v2959 = vpop.permute.xlu0 %2958
        %2960 = vrot.lane.b32.xlu0 %v2930, 109
        %v2961 = vpop.permute.xlu0 %2960
        %2962 = vrot.lane.b32.xlu0 %v2931, 109
        %v2963 = vpop.permute.xlu0 %2962
        %2964 = vrot.lane.b32.xlu0 %v2932, 109
        %v2965 = vpop.permute.xlu0 %2964
        %2966 = vrot.lane.b32.xlu0 %v2933, 109
        %v2967 = vpop.permute.xlu0 %2966
        %2968 = vrot.lane.b32.xlu0 %v2934, 109
        %v2969 = vpop.permute.xlu0 %2968
        %2970 = vrot.lane.b32.xlu0 %v2935, 109
        %v2971 = vpop.permute.xlu0 %2970
        %v2972 = vsel %vm667, %v2949, %v2951
        %v2973 = vsel %vm667, %v2951, %v2953
        %v2974 = vsel %vm667, %v2955, %v2957
        %v2975 = vsel %vm667, %v2957, %v2959
        %v2976 = vsel %vm667, %v2961, %v2963
        %v2977 = vsel %vm667, %v2963, %v2965
        %v2978 = vsel %vm667, %v2967, %v2969
        %v2979 = vsel %vm667, %v2969, %v2971
        %v2992 = vadd.f32 %v2912, %v2972
        %v2993 = vadd.f32 %v2913, %v2973
        %v2994 = vadd.f32 %v2914, %v2953
        %v2995 = vadd.f32 %v2915, %v2974
        %v2996 = vadd.f32 %v2916, %v2975
        %v2997 = vadd.f32 %v2917, %v2959
        %v2998 = vadd.f32 %v2918, %v2976
        %v2999 = vadd.f32 %v2919, %v2977
        %v3000 = vadd.f32 %v2920, %v2965
        %v3001 = vadd.f32 %v2921, %v2978
        %v3002 = vadd.f32 %v2922, %v2979
        %v3003 = vadd.f32 %v2923, %v2971
        %v3004 = vmul.f32 %v702, %v2663
        %v3005 = vmul.f32 %v702, %v2667
        %v3006 = vmul.f32 %v702, %v2671
        %v3007 = vmul.f32 %v706, %v2663
        %v3008 = vmul.f32 %v706, %v2667
        %v3009 = vmul.f32 %v706, %v2671
        %v3010 = vmul.f32 %v710, %v2663
        %v3011 = vmul.f32 %v710, %v2667
        %v3012 = vmul.f32 %v710, %v2671
        %v3013 = vmul.f32 %v714, %v2663
        %v3014 = vmul.f32 %v714, %v2667
        %v3015 = vmul.f32 %v714, %v2671
        %3028 = vrot.lane.b32.xlu0 %v3004, 108
        %v3029 = vpop.permute.xlu0 %3028
        %3030 = vrot.lane.b32.xlu0 %v3005, 108
        %v3031 = vpop.permute.xlu0 %3030
        %3032 = vrot.lane.b32.xlu0 %v3006, 108
        %v3033 = vpop.permute.xlu0 %3032
        %3034 = vrot.lane.b32.xlu0 %v3007, 108
        %v3035 = vpop.permute.xlu0 %3034
        %3036 = vrot.lane.b32.xlu0 %v3008, 108
        %v3037 = vpop.permute.xlu0 %3036
        %3038 = vrot.lane.b32.xlu0 %v3009, 108
        %v3039 = vpop.permute.xlu0 %3038
        %3040 = vrot.lane.b32.xlu0 %v3010, 108
        %v3041 = vpop.permute.xlu0 %3040
        %3042 = vrot.lane.b32.xlu0 %v3011, 108
        %v3043 = vpop.permute.xlu0 %3042
        %3044 = vrot.lane.b32.xlu0 %v3012, 108
        %v3045 = vpop.permute.xlu0 %3044
        %3046 = vrot.lane.b32.xlu0 %v3013, 108
        %v3047 = vpop.permute.xlu0 %3046
        %3048 = vrot.lane.b32.xlu0 %v3014, 108
        %v3049 = vpop.permute.xlu0 %3048
        %3050 = vrot.lane.b32.xlu0 %v3015, 108
        %v3051 = vpop.permute.xlu0 %3050
        %v3052 = vsel %vm764, %v3029, %v3031
        %v3053 = vsel %vm764, %v3031, %v3033
        %v3054 = vsel %vm764, %v3035, %v3037
        %v3055 = vsel %vm764, %v3037, %v3039
        %v3056 = vsel %vm764, %v3041, %v3043
        %v3057 = vsel %vm764, %v3043, %v3045
        %v3058 = vsel %vm764, %v3047, %v3049
        %v3059 = vsel %vm764, %v3049, %v3051
        %v3072 = vadd.f32 %v2992, %v3052
        %v3073 = vadd.f32 %v2993, %v3053
        %v3074 = vadd.f32 %v2994, %v3033
        %v3075 = vadd.f32 %v2995, %v3054
        %v3076 = vadd.f32 %v2996, %v3055
        %v3077 = vadd.f32 %v2997, %v3039
        %v3078 = vadd.f32 %v2998, %v3056
        %v3079 = vadd.f32 %v2999, %v3057
        %v3080 = vadd.f32 %v3000, %v3045
        %v3081 = vadd.f32 %v3001, %v3058
        %v3082 = vadd.f32 %v3002, %v3059
        %v3083 = vadd.f32 %v3003, %v3051
        %v3084 = vmul.f32 %v799, %v2663
        %v3085 = vmul.f32 %v799, %v2667
        %v3086 = vmul.f32 %v799, %v2671
        %v3087 = vmul.f32 %v803, %v2663
        %v3088 = vmul.f32 %v803, %v2667
        %v3089 = vmul.f32 %v803, %v2671
        %v3090 = vmul.f32 %v807, %v2663
        %v3091 = vmul.f32 %v807, %v2667
        %v3092 = vmul.f32 %v807, %v2671
        %v3093 = vmul.f32 %v811, %v2663
        %v3094 = vmul.f32 %v811, %v2667
        %v3095 = vmul.f32 %v811, %v2671
        %3108 = vrot.lane.b32.xlu0 %v3084, 92
        %v3109 = vpop.permute.xlu0 %3108
        %3110 = vrot.lane.b32.xlu0 %v3085, 92
        %v3111 = vpop.permute.xlu0 %3110
        %3112 = vrot.lane.b32.xlu0 %v3086, 92
        %v3113 = vpop.permute.xlu0 %3112
        %3114 = vrot.lane.b32.xlu0 %v3087, 92
        %v3115 = vpop.permute.xlu0 %3114
        %3116 = vrot.lane.b32.xlu0 %v3088, 92
        %v3117 = vpop.permute.xlu0 %3116
        %3118 = vrot.lane.b32.xlu0 %v3089, 92
        %v3119 = vpop.permute.xlu0 %3118
        %3120 = vrot.lane.b32.xlu0 %v3090, 92
        %v3121 = vpop.permute.xlu0 %3120
        %3122 = vrot.lane.b32.xlu0 %v3091, 92
        %v3123 = vpop.permute.xlu0 %3122
        %3124 = vrot.lane.b32.xlu0 %v3092, 92
        %v3125 = vpop.permute.xlu0 %3124
        %3126 = vrot.lane.b32.xlu0 %v3093, 92
        %v3127 = vpop.permute.xlu0 %3126
        %3128 = vrot.lane.b32.xlu0 %v3094, 92
        %v3129 = vpop.permute.xlu0 %3128
        %3130 = vrot.lane.b32.xlu0 %v3095, 92
        %v3131 = vpop.permute.xlu0 %3130
        %v3132 = vsel %vm861, %v3109, %v3111
        %v3133 = vsel %vm861, %v3111, %v3113
        %v3134 = vsel %vm861, %v3115, %v3117
        %v3135 = vsel %vm861, %v3117, %v3119
        %v3136 = vsel %vm861, %v3121, %v3123
        %v3137 = vsel %vm861, %v3123, %v3125
        %v3138 = vsel %vm861, %v3127, %v3129
        %v3139 = vsel %vm861, %v3129, %v3131
        %v3152 = vadd.f32 %v3072, %v3132
        %v3153 = vadd.f32 %v3073, %v3133
        %v3154 = vadd.f32 %v3074, %v3113
        %v3155 = vadd.f32 %v3075, %v3134
        %v3156 = vadd.f32 %v3076, %v3135
        %v3157 = vadd.f32 %v3077, %v3119
        %v3158 = vadd.f32 %v3078, %v3136
        %v3159 = vadd.f32 %v3079, %v3137
        %v3160 = vadd.f32 %v3080, %v3125
        %v3161 = vadd.f32 %v3081, %v3138
        %v3162 = vadd.f32 %v3082, %v3139
        %v3163 = vadd.f32 %v3083, %v3131
        %v3164 = vmul.f32 %v896, %v2663
        %v3165 = vmul.f32 %v896, %v2667
        %v3166 = vmul.f32 %v896, %v2671
        %v3167 = vmul.f32 %v900, %v2663
        %v3168 = vmul.f32 %v900, %v2667
        %v3169 = vmul.f32 %v900, %v2671
        %v3170 = vmul.f32 %v904, %v2663
        %v3171 = vmul.f32 %v904, %v2667
        %v3172 = vmul.f32 %v904, %v2671
        %v3173 = vmul.f32 %v908, %v2663
        %v3174 = vmul.f32 %v908, %v2667
        %v3175 = vmul.f32 %v908, %v2671
        %3188 = vrot.lane.b32.xlu0 %v3164, 91
        %v3189 = vpop.permute.xlu0 %3188
        %3190 = vrot.lane.b32.xlu0 %v3165, 91
        %v3191 = vpop.permute.xlu0 %3190
        %3192 = vrot.lane.b32.xlu0 %v3166, 91
        %v3193 = vpop.permute.xlu0 %3192
        %3194 = vrot.lane.b32.xlu0 %v3167, 91
        %v3195 = vpop.permute.xlu0 %3194
        %3196 = vrot.lane.b32.xlu0 %v3168, 91
        %v3197 = vpop.permute.xlu0 %3196
        %3198 = vrot.lane.b32.xlu0 %v3169, 91
        %v3199 = vpop.permute.xlu0 %3198
        %3200 = vrot.lane.b32.xlu0 %v3170, 91
        %v3201 = vpop.permute.xlu0 %3200
        %3202 = vrot.lane.b32.xlu0 %v3171, 91
        %v3203 = vpop.permute.xlu0 %3202
        %3204 = vrot.lane.b32.xlu0 %v3172, 91
        %v3205 = vpop.permute.xlu0 %3204
        %3206 = vrot.lane.b32.xlu0 %v3173, 91
        %v3207 = vpop.permute.xlu0 %3206
        %3208 = vrot.lane.b32.xlu0 %v3174, 91
        %v3209 = vpop.permute.xlu0 %3208
        %3210 = vrot.lane.b32.xlu0 %v3175, 91
        %v3211 = vpop.permute.xlu0 %3210
        %v3212 = vsel %vm958, %v3189, %v3191
        %v3213 = vsel %vm958, %v3191, %v3193
        %v3214 = vsel %vm958, %v3195, %v3197
        %v3215 = vsel %vm958, %v3197, %v3199
        %v3216 = vsel %vm958, %v3201, %v3203
        %v3217 = vsel %vm958, %v3203, %v3205
        %v3218 = vsel %vm958, %v3207, %v3209
        %v3219 = vsel %vm958, %v3209, %v3211
        %v3232 = vadd.f32 %v3152, %v3212
        %v3233 = vadd.f32 %v3153, %v3213
        %v3234 = vadd.f32 %v3154, %v3193
        %v3235 = vadd.f32 %v3155, %v3214
        %v3236 = vadd.f32 %v3156, %v3215
        %v3237 = vadd.f32 %v3157, %v3199
        %v3238 = vadd.f32 %v3158, %v3216
        %v3239 = vadd.f32 %v3159, %v3217
        %v3240 = vadd.f32 %v3160, %v3205
        %v3241 = vadd.f32 %v3161, %v3218
        %v3242 = vadd.f32 %v3162, %v3219
        %v3243 = vadd.f32 %v3163, %v3211
        %v3244 = vmul.f32 %v993, %v2663
        %v3245 = vmul.f32 %v993, %v2667
        %v3246 = vmul.f32 %v993, %v2671
        %v3247 = vmul.f32 %v997, %v2663
        %v3248 = vmul.f32 %v997, %v2667
        %v3249 = vmul.f32 %v997, %v2671
        %v3250 = vmul.f32 %v1001, %v2663
        %v3251 = vmul.f32 %v1001, %v2667
        %v3252 = vmul.f32 %v1001, %v2671
        %v3253 = vmul.f32 %v1005, %v2663
        %v3254 = vmul.f32 %v1005, %v2667
        %v3255 = vmul.f32 %v1005, %v2671
        %3268 = vrot.lane.b32.xlu0 %v3244, 90
        %v3269 = vpop.permute.xlu0 %3268
        %3270 = vrot.lane.b32.xlu0 %v3245, 90
        %v3271 = vpop.permute.xlu0 %3270
        %3272 = vrot.lane.b32.xlu0 %v3246, 90
        %v3273 = vpop.permute.xlu0 %3272
        %3274 = vrot.lane.b32.xlu0 %v3247, 90
        %v3275 = vpop.permute.xlu0 %3274
        %3276 = vrot.lane.b32.xlu0 %v3248, 90
        %v3277 = vpop.permute.xlu0 %3276
        %3278 = vrot.lane.b32.xlu0 %v3249, 90
        %v3279 = vpop.permute.xlu0 %3278
        %3280 = vrot.lane.b32.xlu0 %v3250, 90
        %v3281 = vpop.permute.xlu0 %3280
        %3282 = vrot.lane.b32.xlu0 %v3251, 90
        %v3283 = vpop.permute.xlu0 %3282
        %3284 = vrot.lane.b32.xlu0 %v3252, 90
        %v3285 = vpop.permute.xlu0 %3284
        %3286 = vrot.lane.b32.xlu0 %v3253, 90
        %v3287 = vpop.permute.xlu0 %3286
        %3288 = vrot.lane.b32.xlu0 %v3254, 90
        %v3289 = vpop.permute.xlu0 %3288
        %3290 = vrot.lane.b32.xlu0 %v3255, 90
        %v3291 = vpop.permute.xlu0 %3290
        %v3292 = vsel %vm1055, %v3269, %v3271
        %v3293 = vsel %vm1055, %v3271, %v3273
        %v3294 = vsel %vm1055, %v3275, %v3277
        %v3295 = vsel %vm1055, %v3277, %v3279
        %v3296 = vsel %vm1055, %v3281, %v3283
        %v3297 = vsel %vm1055, %v3283, %v3285
        %v3298 = vsel %vm1055, %v3287, %v3289
        %v3299 = vsel %vm1055, %v3289, %v3291
        %v3312 = vadd.f32 %v3232, %v3292
        %v3313 = vadd.f32 %v3233, %v3293
        %v3314 = vadd.f32 %v3234, %v3273
        %v3315 = vadd.f32 %v3235, %v3294
        %v3316 = vadd.f32 %v3236, %v3295
        %v3317 = vadd.f32 %v3237, %v3279
        %v3318 = vadd.f32 %v3238, %v3296
        %v3319 = vadd.f32 %v3239, %v3297
        %v3320 = vadd.f32 %v3240, %v3285
        %v3321 = vadd.f32 %v3241, %v3298
        %v3322 = vadd.f32 %v3242, %v3299
        %v3323 = vadd.f32 %v3243, %v3291
        %v3324 = vadd.f32 %v3312, %v1091
        %v3325 = vadd.f32 %v3313, %v1091
        %v3326 = vadd.f32 %v3314, %v1091
        %v3327 = vadd.f32 %v3315, %v1096
        %v3328 = vadd.f32 %v3316, %v1096
        %v3329 = vadd.f32 %v3317, %v1096
        %v3330 = vadd.f32 %v3318, %v1101
        %v3331 = vadd.f32 %v3319, %v1101
        %v3332 = vadd.f32 %v3320, %v1101
        %v3333 = vadd.f32 %v3321, %v1106
        %v3334 = vadd.f32 %v3322, %v1106
        %v3335 = vadd.f32 %v3323, %v1106
        %v3336 = vmax.f32 %v3324, 0.0
        %v3337 = vmax.f32 %v3325, 0.0
        %v3338 = vmax.f32 %v3326, 0.0
        %v3339 = vmax.f32 %v3327, 0.0
        %v3340 = vmax.f32 %v3328, 0.0
        %v3341 = vmax.f32 %v3329, 0.0
        %v3342 = vmax.f32 %v3330, 0.0
        %v3343 = vmax.f32 %v3331, 0.0
        %v3344 = vmax.f32 %v3332, 0.0
        %v3345 = vmax.f32 %v3333, 0.0
        %v3346 = vmax.f32 %v3334, 0.0
        %v3347 = vmax.f32 %v3335, 0.0
        %v3348 = vmul.f32 %v3336, %v1136
        %v3349 = vmul.f32 %v3337, %v1140
        %v3350 = vmul.f32 %v3338, %v1144
        %v3351 = vmul.f32 %v3339, %v1136
        %v3352 = vmul.f32 %v3340, %v1140
        %v3353 = vmul.f32 %v3341, %v1144
        %v3354 = vmul.f32 %v3342, %v1136
        %v3355 = vmul.f32 %v3343, %v1140
        %v3356 = vmul.f32 %v3344, %v1144
        %v3357 = vmul.f32 %v3345, %v1136
        %v3358 = vmul.f32 %v3346, %v1140
        %v3359 = vmul.f32 %v3347, %v1144
        %v3360 = vadd.f32 %v3348, %v3349
        %v3361 = vsel %vm1161, %v3350, 0.0
        %v3362 = vadd.f32 %v3360, %v3361
        %3363 = vadd.xlane.f32.xlu0 %v3362
        %v3364 = vpop.xlane.xlu0 %3363
        %v3365 = vadd.f32 %v3351, %v3352
        %v3366 = vsel %vm1161, %v3353, 0.0
        %v3367 = vadd.f32 %v3365, %v3366
        %3368 = vadd.xlane.f32.xlu0 %v3367
        %v3369 = vpop.xlane.xlu0 %3368
        %v3370 = vadd.f32 %v3354, %v3355
        %v3371 = vsel %vm1161, %v3356, 0.0
        %v3372 = vadd.f32 %v3370, %v3371
        %3373 = vadd.xlane.f32.xlu0 %v3372
        %v3374 = vpop.xlane.xlu0 %3373
        %v3375 = vadd.f32 %v3357, %v3358
        %v3376 = vsel %vm1161, %v3359, 0.0
        %v3377 = vadd.f32 %v3375, %v3376
        %3378 = vadd.xlane.f32.xlu0 %v3377
        %v3379 = vpop.xlane.xlu0 %3378
        %v3380 = vmul.f32 %v3364, %v260
        %v3381 = vmul.f32 %v3369, %v261
        %v3382 = vmul.f32 %v3374, %v262
        %v3383 = vmul.f32 %v3379, %v263
        %v3384 = vadd.f32 %v3380, %v3381
        %v3385 = vadd.f32 %v3384, %v3382
        %v3386 = vadd.f32 %v3385, %v3383
        %v3387 = vrot.slane %v3386, 4
        %v3388 = vadd.f32 %v3386, %v3387
        %v3389 = vrot.slane %v3388, 2
        %v3390 = vadd.f32 %v3388, %v3389
        %v3391 = vrot.slane %v3390, 1
        %v3392 = vadd.f32 %v3390, %v3391
        %v3393 = vlaneseq
        %v3394 = vshrl.u32 %v3393, 7
        %v3395 = vsub.s32 4, %v3394
        %v3396 = vrot.slane %v252, %v3395
        %v3397 = vlaneseq
        %v3398 = vshrl.u32 %v3397, 7
        %v3399 = vsub.s32 4, %v3398
        %v3400 = vrot.slane %v253, %v3399
        %v3401 = vlaneseq
        %v3402 = vshrl.u32 %v3401, 7
        %v3403 = vsub.s32 4, %v3402
        %v3404 = vrot.slane %v254, %v3403
        %v3405 = vmul.f32 %v271, %v3396
        %v3406 = vmul.f32 %v271, %v3400
        %v3407 = vmul.f32 %v271, %v3404
        %v3408 = vmul.f32 %v276, %v3396
        %v3409 = vmul.f32 %v276, %v3400
        %v3410 = vmul.f32 %v276, %v3404
        %v3411 = vmul.f32 %v281, %v3396
        %v3412 = vmul.f32 %v281, %v3400
        %v3413 = vmul.f32 %v281, %v3404
        %v3414 = vmul.f32 %v286, %v3396
        %v3415 = vmul.f32 %v286, %v3400
        %v3416 = vmul.f32 %v286, %v3404
        %v3417 = vmul.f32 %v314, %v3396
        %v3418 = vmul.f32 %v314, %v3400
        %v3419 = vmul.f32 %v314, %v3404
        %v3420 = vmul.f32 %v318, %v3396
        %v3421 = vmul.f32 %v318, %v3400
        %v3422 = vmul.f32 %v318, %v3404
        %v3423 = vmul.f32 %v322, %v3396
        %v3424 = vmul.f32 %v322, %v3400
        %v3425 = vmul.f32 %v322, %v3404
        %v3426 = vmul.f32 %v326, %v3396
        %v3427 = vmul.f32 %v326, %v3400
        %v3428 = vmul.f32 %v326, %v3404
        %3441 = vrot.lane.b32.xlu0 %v3417, 127
        %v3442 = vpop.permute.xlu0 %3441
        %3443 = vrot.lane.b32.xlu0 %v3418, 127
        %v3444 = vpop.permute.xlu0 %3443
        %3445 = vrot.lane.b32.xlu0 %v3419, 127
        %v3446 = vpop.permute.xlu0 %3445
        %3447 = vrot.lane.b32.xlu0 %v3420, 127
        %v3448 = vpop.permute.xlu0 %3447
        %3449 = vrot.lane.b32.xlu0 %v3421, 127
        %v3450 = vpop.permute.xlu0 %3449
        %3451 = vrot.lane.b32.xlu0 %v3422, 127
        %v3452 = vpop.permute.xlu0 %3451
        %3453 = vrot.lane.b32.xlu0 %v3423, 127
        %v3454 = vpop.permute.xlu0 %3453
        %3455 = vrot.lane.b32.xlu0 %v3424, 127
        %v3456 = vpop.permute.xlu0 %3455
        %3457 = vrot.lane.b32.xlu0 %v3425, 127
        %v3458 = vpop.permute.xlu0 %3457
        %3459 = vrot.lane.b32.xlu0 %v3426, 127
        %v3460 = vpop.permute.xlu0 %3459
        %3461 = vrot.lane.b32.xlu0 %v3427, 127
        %v3462 = vpop.permute.xlu0 %3461
        %3463 = vrot.lane.b32.xlu0 %v3428, 127
        %v3464 = vpop.permute.xlu0 %3463
        %v3465 = vsel %vm376, %v3442, %v3444
        %v3466 = vsel %vm376, %v3444, %v3446
        %v3467 = vsel %vm376, %v3448, %v3450
        %v3468 = vsel %vm376, %v3450, %v3452
        %v3469 = vsel %vm376, %v3454, %v3456
        %v3470 = vsel %vm376, %v3456, %v3458
        %v3471 = vsel %vm376, %v3460, %v3462
        %v3472 = vsel %vm376, %v3462, %v3464
        %v3485 = vadd.f32 %v3405, %v3465
        %v3486 = vadd.f32 %v3406, %v3466
        %v3487 = vadd.f32 %v3407, %v3446
        %v3488 = vadd.f32 %v3408, %v3467
        %v3489 = vadd.f32 %v3409, %v3468
        %v3490 = vadd.f32 %v3410, %v3452
        %v3491 = vadd.f32 %v3411, %v3469
        %v3492 = vadd.f32 %v3412, %v3470
        %v3493 = vadd.f32 %v3413, %v3458
        %v3494 = vadd.f32 %v3414, %v3471
        %v3495 = vadd.f32 %v3415, %v3472
        %v3496 = vadd.f32 %v3416, %v3464
        %v3497 = vmul.f32 %v411, %v3396
        %v3498 = vmul.f32 %v411, %v3400
        %v3499 = vmul.f32 %v411, %v3404
        %v3500 = vmul.f32 %v415, %v3396
        %v3501 = vmul.f32 %v415, %v3400
        %v3502 = vmul.f32 %v415, %v3404
        %v3503 = vmul.f32 %v419, %v3396
        %v3504 = vmul.f32 %v419, %v3400
        %v3505 = vmul.f32 %v419, %v3404
        %v3506 = vmul.f32 %v423, %v3396
        %v3507 = vmul.f32 %v423, %v3400
        %v3508 = vmul.f32 %v423, %v3404
        %3521 = vrot.lane.b32.xlu0 %v3497, 126
        %v3522 = vpop.permute.xlu0 %3521
        %3523 = vrot.lane.b32.xlu0 %v3498, 126
        %v3524 = vpop.permute.xlu0 %3523
        %3525 = vrot.lane.b32.xlu0 %v3499, 126
        %v3526 = vpop.permute.xlu0 %3525
        %3527 = vrot.lane.b32.xlu0 %v3500, 126
        %v3528 = vpop.permute.xlu0 %3527
        %3529 = vrot.lane.b32.xlu0 %v3501, 126
        %v3530 = vpop.permute.xlu0 %3529
        %3531 = vrot.lane.b32.xlu0 %v3502, 126
        %v3532 = vpop.permute.xlu0 %3531
        %3533 = vrot.lane.b32.xlu0 %v3503, 126
        %v3534 = vpop.permute.xlu0 %3533
        %3535 = vrot.lane.b32.xlu0 %v3504, 126
        %v3536 = vpop.permute.xlu0 %3535
        %3537 = vrot.lane.b32.xlu0 %v3505, 126
        %v3538 = vpop.permute.xlu0 %3537
        %3539 = vrot.lane.b32.xlu0 %v3506, 126
        %v3540 = vpop.permute.xlu0 %3539
        %3541 = vrot.lane.b32.xlu0 %v3507, 126
        %v3542 = vpop.permute.xlu0 %3541
        %3543 = vrot.lane.b32.xlu0 %v3508, 126
        %v3544 = vpop.permute.xlu0 %3543
        %v3545 = vsel %vm473, %v3522, %v3524
        %v3546 = vsel %vm473, %v3524, %v3526
        %v3547 = vsel %vm473, %v3528, %v3530
        %v3548 = vsel %vm473, %v3530, %v3532
        %v3549 = vsel %vm473, %v3534, %v3536
        %v3550 = vsel %vm473, %v3536, %v3538
        %v3551 = vsel %vm473, %v3540, %v3542
        %v3552 = vsel %vm473, %v3542, %v3544
        %v3565 = vadd.f32 %v3485, %v3545
        %v3566 = vadd.f32 %v3486, %v3546
        %v3567 = vadd.f32 %v3487, %v3526
        %v3568 = vadd.f32 %v3488, %v3547
        %v3569 = vadd.f32 %v3489, %v3548
        %v3570 = vadd.f32 %v3490, %v3532
        %v3571 = vadd.f32 %v3491, %v3549
        %v3572 = vadd.f32 %v3492, %v3550
        %v3573 = vadd.f32 %v3493, %v3538
        %v3574 = vadd.f32 %v3494, %v3551
        %v3575 = vadd.f32 %v3495, %v3552
        %v3576 = vadd.f32 %v3496, %v3544
        %v3577 = vmul.f32 %v508, %v3396
        %v3578 = vmul.f32 %v508, %v3400
        %v3579 = vmul.f32 %v508, %v3404
        %v3580 = vmul.f32 %v512, %v3396
        %v3581 = vmul.f32 %v512, %v3400
        %v3582 = vmul.f32 %v512, %v3404
        %v3583 = vmul.f32 %v516, %v3396
        %v3584 = vmul.f32 %v516, %v3400
        %v3585 = vmul.f32 %v516, %v3404
        %v3586 = vmul.f32 %v520, %v3396
        %v3587 = vmul.f32 %v520, %v3400
        %v3588 = vmul.f32 %v520, %v3404
        %3601 = vrot.lane.b32.xlu0 %v3577, 110
        %v3602 = vpop.permute.xlu0 %3601
        %3603 = vrot.lane.b32.xlu0 %v3578, 110
        %v3604 = vpop.permute.xlu0 %3603
        %3605 = vrot.lane.b32.xlu0 %v3579, 110
        %v3606 = vpop.permute.xlu0 %3605
        %3607 = vrot.lane.b32.xlu0 %v3580, 110
        %v3608 = vpop.permute.xlu0 %3607
        %3609 = vrot.lane.b32.xlu0 %v3581, 110
        %v3610 = vpop.permute.xlu0 %3609
        %3611 = vrot.lane.b32.xlu0 %v3582, 110
        %v3612 = vpop.permute.xlu0 %3611
        %3613 = vrot.lane.b32.xlu0 %v3583, 110
        %v3614 = vpop.permute.xlu0 %3613
        %3615 = vrot.lane.b32.xlu0 %v3584, 110
        %v3616 = vpop.permute.xlu0 %3615
        %3617 = vrot.lane.b32.xlu0 %v3585, 110
        %v3618 = vpop.permute.xlu0 %3617
        %3619 = vrot.lane.b32.xlu0 %v3586, 110
        %v3620 = vpop.permute.xlu0 %3619
        %3621 = vrot.lane.b32.xlu0 %v3587, 110
        %v3622 = vpop.permute.xlu0 %3621
        %3623 = vrot.lane.b32.xlu0 %v3588, 110
        %v3624 = vpop.permute.xlu0 %3623
        %v3625 = vsel %vm570, %v3602, %v3604
        %v3626 = vsel %vm570, %v3604, %v3606
        %v3627 = vsel %vm570, %v3608, %v3610
        %v3628 = vsel %vm570, %v3610, %v3612
        %v3629 = vsel %vm570, %v3614, %v3616
        %v3630 = vsel %vm570, %v3616, %v3618
        %v3631 = vsel %vm570, %v3620, %v3622
        %v3632 = vsel %vm570, %v3622, %v3624
        %v3645 = vadd.f32 %v3565, %v3625
        %v3646 = vadd.f32 %v3566, %v3626
        %v3647 = vadd.f32 %v3567, %v3606
        %v3648 = vadd.f32 %v3568, %v3627
        %v3649 = vadd.f32 %v3569, %v3628
        %v3650 = vadd.f32 %v3570, %v3612
        %v3651 = vadd.f32 %v3571, %v3629
        %v3652 = vadd.f32 %v3572, %v3630
        %v3653 = vadd.f32 %v3573, %v3618
        %v3654 = vadd.f32 %v3574, %v3631
        %v3655 = vadd.f32 %v3575, %v3632
        %v3656 = vadd.f32 %v3576, %v3624
        %v3657 = vmul.f32 %v605, %v3396
        %v3658 = vmul.f32 %v605, %v3400
        %v3659 = vmul.f32 %v605, %v3404
        %v3660 = vmul.f32 %v609, %v3396
        %v3661 = vmul.f32 %v609, %v3400
        %v3662 = vmul.f32 %v609, %v3404
        %v3663 = vmul.f32 %v613, %v3396
        %v3664 = vmul.f32 %v613, %v3400
        %v3665 = vmul.f32 %v613, %v3404
        %v3666 = vmul.f32 %v617, %v3396
        %v3667 = vmul.f32 %v617, %v3400
        %v3668 = vmul.f32 %v617, %v3404
        %3681 = vrot.lane.b32.xlu0 %v3657, 109
        %v3682 = vpop.permute.xlu0 %3681
        %3683 = vrot.lane.b32.xlu0 %v3658, 109
        %v3684 = vpop.permute.xlu0 %3683
        %3685 = vrot.lane.b32.xlu0 %v3659, 109
        %v3686 = vpop.permute.xlu0 %3685
        %3687 = vrot.lane.b32.xlu0 %v3660, 109
        %v3688 = vpop.permute.xlu0 %3687
        %3689 = vrot.lane.b32.xlu0 %v3661, 109
        %v3690 = vpop.permute.xlu0 %3689
        %3691 = vrot.lane.b32.xlu0 %v3662, 109
        %v3692 = vpop.permute.xlu0 %3691
        %3693 = vrot.lane.b32.xlu0 %v3663, 109
        %v3694 = vpop.permute.xlu0 %3693
        %3695 = vrot.lane.b32.xlu0 %v3664, 109
        %v3696 = vpop.permute.xlu0 %3695
        %3697 = vrot.lane.b32.xlu0 %v3665, 109
        %v3698 = vpop.permute.xlu0 %3697
        %3699 = vrot.lane.b32.xlu0 %v3666, 109
        %v3700 = vpop.permute.xlu0 %3699
        %3701 = vrot.lane.b32.xlu0 %v3667, 109
        %v3702 = vpop.permute.xlu0 %3701
        %3703 = vrot.lane.b32.xlu0 %v3668, 109
        %v3704 = vpop.permute.xlu0 %3703
        %v3705 = vsel %vm667, %v3682, %v3684
        %v3706 = vsel %vm667, %v3684, %v3686
        %v3707 = vsel %vm667, %v3688, %v3690
        %v3708 = vsel %vm667, %v3690, %v3692
        %v3709 = vsel %vm667, %v3694, %v3696
        %v3710 = vsel %vm667, %v3696, %v3698
        %v3711 = vsel %vm667, %v3700, %v3702
        %v3712 = vsel %vm667, %v3702, %v3704
        %v3725 = vadd.f32 %v3645, %v3705
        %v3726 = vadd.f32 %v3646, %v3706
        %v3727 = vadd.f32 %v3647, %v3686
        %v3728 = vadd.f32 %v3648, %v3707
        %v3729 = vadd.f32 %v3649, %v3708
        %v3730 = vadd.f32 %v3650, %v3692
        %v3731 = vadd.f32 %v3651, %v3709
        %v3732 = vadd.f32 %v3652, %v3710
        %v3733 = vadd.f32 %v3653, %v3698
        %v3734 = vadd.f32 %v3654, %v3711
        %v3735 = vadd.f32 %v3655, %v3712
        %v3736 = vadd.f32 %v3656, %v3704
        %v3737 = vmul.f32 %v702, %v3396
        %v3738 = vmul.f32 %v702, %v3400
        %v3739 = vmul.f32 %v702, %v3404
        %v3740 = vmul.f32 %v706, %v3396
        %v3741 = vmul.f32 %v706, %v3400
        %v3742 = vmul.f32 %v706, %v3404
        %v3743 = vmul.f32 %v710, %v3396
        %v3744 = vmul.f32 %v710, %v3400
        %v3745 = vmul.f32 %v710, %v3404
        %v3746 = vmul.f32 %v714, %v3396
        %v3747 = vmul.f32 %v714, %v3400
        %v3748 = vmul.f32 %v714, %v3404
        %3761 = vrot.lane.b32.xlu0 %v3737, 108
        %v3762 = vpop.permute.xlu0 %3761
        %3763 = vrot.lane.b32.xlu0 %v3738, 108
        %v3764 = vpop.permute.xlu0 %3763
        %3765 = vrot.lane.b32.xlu0 %v3739, 108
        %v3766 = vpop.permute.xlu0 %3765
        %3767 = vrot.lane.b32.xlu0 %v3740, 108
        %v3768 = vpop.permute.xlu0 %3767
        %3769 = vrot.lane.b32.xlu0 %v3741, 108
        %v3770 = vpop.permute.xlu0 %3769
        %3771 = vrot.lane.b32.xlu0 %v3742, 108
        %v3772 = vpop.permute.xlu0 %3771
        %3773 = vrot.lane.b32.xlu0 %v3743, 108
        %v3774 = vpop.permute.xlu0 %3773
        %3775 = vrot.lane.b32.xlu0 %v3744, 108
        %v3776 = vpop.permute.xlu0 %3775
        %3777 = vrot.lane.b32.xlu0 %v3745, 108
        %v3778 = vpop.permute.xlu0 %3777
        %3779 = vrot.lane.b32.xlu0 %v3746, 108
        %v3780 = vpop.permute.xlu0 %3779
        %3781 = vrot.lane.b32.xlu0 %v3747, 108
        %v3782 = vpop.permute.xlu0 %3781
        %3783 = vrot.lane.b32.xlu0 %v3748, 108
        %v3784 = vpop.permute.xlu0 %3783
        %v3785 = vsel %vm764, %v3762, %v3764
        %v3786 = vsel %vm764, %v3764, %v3766
        %v3787 = vsel %vm764, %v3768, %v3770
        %v3788 = vsel %vm764, %v3770, %v3772
        %v3789 = vsel %vm764, %v3774, %v3776
        %v3790 = vsel %vm764, %v3776, %v3778
        %v3791 = vsel %vm764, %v3780, %v3782
        %v3792 = vsel %vm764, %v3782, %v3784
        %v3805 = vadd.f32 %v3725, %v3785
        %v3806 = vadd.f32 %v3726, %v3786
        %v3807 = vadd.f32 %v3727, %v3766
        %v3808 = vadd.f32 %v3728, %v3787
        %v3809 = vadd.f32 %v3729, %v3788
        %v3810 = vadd.f32 %v3730, %v3772
        %v3811 = vadd.f32 %v3731, %v3789
        %v3812 = vadd.f32 %v3732, %v3790
        %v3813 = vadd.f32 %v3733, %v3778
        %v3814 = vadd.f32 %v3734, %v3791
        %v3815 = vadd.f32 %v3735, %v3792
        %v3816 = vadd.f32 %v3736, %v3784
        %v3817 = vmul.f32 %v799, %v3396
        %v3818 = vmul.f32 %v799, %v3400
        %v3819 = vmul.f32 %v799, %v3404
        %v3820 = vmul.f32 %v803, %v3396
        %v3821 = vmul.f32 %v803, %v3400
        %v3822 = vmul.f32 %v803, %v3404
        %v3823 = vmul.f32 %v807, %v3396
        %v3824 = vmul.f32 %v807, %v3400
        %v3825 = vmul.f32 %v807, %v3404
        %v3826 = vmul.f32 %v811, %v3396
        %v3827 = vmul.f32 %v811, %v3400
        %v3828 = vmul.f32 %v811, %v3404
        %3841 = vrot.lane.b32.xlu0 %v3817, 92
        %v3842 = vpop.permute.xlu0 %3841
        %3843 = vrot.lane.b32.xlu0 %v3818, 92
        %v3844 = vpop.permute.xlu0 %3843
        %3845 = vrot.lane.b32.xlu0 %v3819, 92
        %v3846 = vpop.permute.xlu0 %3845
        %3847 = vrot.lane.b32.xlu0 %v3820, 92
        %v3848 = vpop.permute.xlu0 %3847
        %3849 = vrot.lane.b32.xlu0 %v3821, 92
        %v3850 = vpop.permute.xlu0 %3849
        %3851 = vrot.lane.b32.xlu0 %v3822, 92
        %v3852 = vpop.permute.xlu0 %3851
        %3853 = vrot.lane.b32.xlu0 %v3823, 92
        %v3854 = vpop.permute.xlu0 %3853
        %3855 = vrot.lane.b32.xlu0 %v3824, 92
        %v3856 = vpop.permute.xlu0 %3855
        %3857 = vrot.lane.b32.xlu0 %v3825, 92
        %v3858 = vpop.permute.xlu0 %3857
        %3859 = vrot.lane.b32.xlu0 %v3826, 92
        %v3860 = vpop.permute.xlu0 %3859
        %3861 = vrot.lane.b32.xlu0 %v3827, 92
        %v3862 = vpop.permute.xlu0 %3861
        %3863 = vrot.lane.b32.xlu0 %v3828, 92
        %v3864 = vpop.permute.xlu0 %3863
        %v3865 = vsel %vm861, %v3842, %v3844
        %v3866 = vsel %vm861, %v3844, %v3846
        %v3867 = vsel %vm861, %v3848, %v3850
        %v3868 = vsel %vm861, %v3850, %v3852
        %v3869 = vsel %vm861, %v3854, %v3856
        %v3870 = vsel %vm861, %v3856, %v3858
        %v3871 = vsel %vm861, %v3860, %v3862
        %v3872 = vsel %vm861, %v3862, %v3864
        %v3885 = vadd.f32 %v3805, %v3865
        %v3886 = vadd.f32 %v3806, %v3866
        %v3887 = vadd.f32 %v3807, %v3846
        %v3888 = vadd.f32 %v3808, %v3867
        %v3889 = vadd.f32 %v3809, %v3868
        %v3890 = vadd.f32 %v3810, %v3852
        %v3891 = vadd.f32 %v3811, %v3869
        %v3892 = vadd.f32 %v3812, %v3870
        %v3893 = vadd.f32 %v3813, %v3858
        %v3894 = vadd.f32 %v3814, %v3871
        %v3895 = vadd.f32 %v3815, %v3872
        %v3896 = vadd.f32 %v3816, %v3864
        %v3897 = vmul.f32 %v896, %v3396
        %v3898 = vmul.f32 %v896, %v3400
        %v3899 = vmul.f32 %v896, %v3404
        %v3900 = vmul.f32 %v900, %v3396
        %v3901 = vmul.f32 %v900, %v3400
        %v3902 = vmul.f32 %v900, %v3404
        %v3903 = vmul.f32 %v904, %v3396
        %v3904 = vmul.f32 %v904, %v3400
        %v3905 = vmul.f32 %v904, %v3404
        %v3906 = vmul.f32 %v908, %v3396
        %v3907 = vmul.f32 %v908, %v3400
        %v3908 = vmul.f32 %v908, %v3404
        %3921 = vrot.lane.b32.xlu0 %v3897, 91
        %v3922 = vpop.permute.xlu0 %3921
        %3923 = vrot.lane.b32.xlu0 %v3898, 91
        %v3924 = vpop.permute.xlu0 %3923
        %3925 = vrot.lane.b32.xlu0 %v3899, 91
        %v3926 = vpop.permute.xlu0 %3925
        %3927 = vrot.lane.b32.xlu0 %v3900, 91
        %v3928 = vpop.permute.xlu0 %3927
        %3929 = vrot.lane.b32.xlu0 %v3901, 91
        %v3930 = vpop.permute.xlu0 %3929
        %3931 = vrot.lane.b32.xlu0 %v3902, 91
        %v3932 = vpop.permute.xlu0 %3931
        %3933 = vrot.lane.b32.xlu0 %v3903, 91
        %v3934 = vpop.permute.xlu0 %3933
        %3935 = vrot.lane.b32.xlu0 %v3904, 91
        %v3936 = vpop.permute.xlu0 %3935
        %3937 = vrot.lane.b32.xlu0 %v3905, 91
        %v3938 = vpop.permute.xlu0 %3937
        %3939 = vrot.lane.b32.xlu0 %v3906, 91
        %v3940 = vpop.permute.xlu0 %3939
        %3941 = vrot.lane.b32.xlu0 %v3907, 91
        %v3942 = vpop.permute.xlu0 %3941
        %3943 = vrot.lane.b32.xlu0 %v3908, 91
        %v3944 = vpop.permute.xlu0 %3943
        %v3945 = vsel %vm958, %v3922, %v3924
        %v3946 = vsel %vm958, %v3924, %v3926
        %v3947 = vsel %vm958, %v3928, %v3930
        %v3948 = vsel %vm958, %v3930, %v3932
        %v3949 = vsel %vm958, %v3934, %v3936
        %v3950 = vsel %vm958, %v3936, %v3938
        %v3951 = vsel %vm958, %v3940, %v3942
        %v3952 = vsel %vm958, %v3942, %v3944
        %v3965 = vadd.f32 %v3885, %v3945
        %v3966 = vadd.f32 %v3886, %v3946
        %v3967 = vadd.f32 %v3887, %v3926
        %v3968 = vadd.f32 %v3888, %v3947
        %v3969 = vadd.f32 %v3889, %v3948
        %v3970 = vadd.f32 %v3890, %v3932
        %v3971 = vadd.f32 %v3891, %v3949
        %v3972 = vadd.f32 %v3892, %v3950
        %v3973 = vadd.f32 %v3893, %v3938
        %v3974 = vadd.f32 %v3894, %v3951
        %v3975 = vadd.f32 %v3895, %v3952
        %v3976 = vadd.f32 %v3896, %v3944
        %v3977 = vmul.f32 %v993, %v3396
        %v3978 = vmul.f32 %v993, %v3400
        %v3979 = vmul.f32 %v993, %v3404
        %v3980 = vmul.f32 %v997, %v3396
        %v3981 = vmul.f32 %v997, %v3400
        %v3982 = vmul.f32 %v997, %v3404
        %v3983 = vmul.f32 %v1001, %v3396
        %v3984 = vmul.f32 %v1001, %v3400
        %v3985 = vmul.f32 %v1001, %v3404
        %v3986 = vmul.f32 %v1005, %v3396
        %v3987 = vmul.f32 %v1005, %v3400
        %v3988 = vmul.f32 %v1005, %v3404
        %4001 = vrot.lane.b32.xlu0 %v3977, 90
        %v4002 = vpop.permute.xlu0 %4001
        %4003 = vrot.lane.b32.xlu0 %v3978, 90
        %v4004 = vpop.permute.xlu0 %4003
        %4005 = vrot.lane.b32.xlu0 %v3979, 90
        %v4006 = vpop.permute.xlu0 %4005
        %4007 = vrot.lane.b32.xlu0 %v3980, 90
        %v4008 = vpop.permute.xlu0 %4007
        %4009 = vrot.lane.b32.xlu0 %v3981, 90
        %v4010 = vpop.permute.xlu0 %4009
        %4011 = vrot.lane.b32.xlu0 %v3982, 90
        %v4012 = vpop.permute.xlu0 %4011
        %4013 = vrot.lane.b32.xlu0 %v3983, 90
        %v4014 = vpop.permute.xlu0 %4013
        %4015 = vrot.lane.b32.xlu0 %v3984, 90
        %v4016 = vpop.permute.xlu0 %4015
        %4017 = vrot.lane.b32.xlu0 %v3985, 90
        %v4018 = vpop.permute.xlu0 %4017
        %4019 = vrot.lane.b32.xlu0 %v3986, 90
        %v4020 = vpop.permute.xlu0 %4019
        %4021 = vrot.lane.b32.xlu0 %v3987, 90
        %v4022 = vpop.permute.xlu0 %4021
        %4023 = vrot.lane.b32.xlu0 %v3988, 90
        %v4024 = vpop.permute.xlu0 %4023
        %v4025 = vsel %vm1055, %v4002, %v4004
        %v4026 = vsel %vm1055, %v4004, %v4006
        %v4027 = vsel %vm1055, %v4008, %v4010
        %v4028 = vsel %vm1055, %v4010, %v4012
        %v4029 = vsel %vm1055, %v4014, %v4016
        %v4030 = vsel %vm1055, %v4016, %v4018
        %v4031 = vsel %vm1055, %v4020, %v4022
        %v4032 = vsel %vm1055, %v4022, %v4024
        %v4045 = vadd.f32 %v3965, %v4025
        %v4046 = vadd.f32 %v3966, %v4026
        %v4047 = vadd.f32 %v3967, %v4006
        %v4048 = vadd.f32 %v3968, %v4027
        %v4049 = vadd.f32 %v3969, %v4028
        %v4050 = vadd.f32 %v3970, %v4012
        %v4051 = vadd.f32 %v3971, %v4029
        %v4052 = vadd.f32 %v3972, %v4030
        %v4053 = vadd.f32 %v3973, %v4018
        %v4054 = vadd.f32 %v3974, %v4031
        %v4055 = vadd.f32 %v3975, %v4032
        %v4056 = vadd.f32 %v3976, %v4024
        %v4057 = vadd.f32 %v4045, %v1091
        %v4058 = vadd.f32 %v4046, %v1091
        %v4059 = vadd.f32 %v4047, %v1091
        %v4060 = vadd.f32 %v4048, %v1096
        %v4061 = vadd.f32 %v4049, %v1096
        %v4062 = vadd.f32 %v4050, %v1096
        %v4063 = vadd.f32 %v4051, %v1101
        %v4064 = vadd.f32 %v4052, %v1101
        %v4065 = vadd.f32 %v4053, %v1101
        %v4066 = vadd.f32 %v4054, %v1106
        %v4067 = vadd.f32 %v4055, %v1106
        %v4068 = vadd.f32 %v4056, %v1106
        %v4069 = vmax.f32 %v4057, 0.0
        %v4070 = vmax.f32 %v4058, 0.0
        %v4071 = vmax.f32 %v4059, 0.0
        %v4072 = vmax.f32 %v4060, 0.0
        %v4073 = vmax.f32 %v4061, 0.0
        %v4074 = vmax.f32 %v4062, 0.0
        %v4075 = vmax.f32 %v4063, 0.0
        %v4076 = vmax.f32 %v4064, 0.0
        %v4077 = vmax.f32 %v4065, 0.0
        %v4078 = vmax.f32 %v4066, 0.0
        %v4079 = vmax.f32 %v4067, 0.0
        %v4080 = vmax.f32 %v4068, 0.0
        %v4081 = vmul.f32 %v4069, %v1136
        %v4082 = vmul.f32 %v4070, %v1140
        %v4083 = vmul.f32 %v4071, %v1144
        %v4084 = vmul.f32 %v4072, %v1136
        %v4085 = vmul.f32 %v4073, %v1140
        %v4086 = vmul.f32 %v4074, %v1144
        %v4087 = vmul.f32 %v4075, %v1136
        %v4088 = vmul.f32 %v4076, %v1140
        %v4089 = vmul.f32 %v4077, %v1144
        %v4090 = vmul.f32 %v4078, %v1136
        %v4091 = vmul.f32 %v4079, %v1140
        %v4092 = vmul.f32 %v4080, %v1144
        %v4093 = vadd.f32 %v4081, %v4082
        %v4094 = vsel %vm1161, %v4083, 0.0
        %v4095 = vadd.f32 %v4093, %v4094
        %4096 = vadd.xlane.f32.xlu0 %v4095
        %v4097 = vpop.xlane.xlu0 %4096
        %v4098 = vadd.f32 %v4084, %v4085
        %v4099 = vsel %vm1161, %v4086, 0.0
        %v4100 = vadd.f32 %v4098, %v4099
        %4101 = vadd.xlane.f32.xlu0 %v4100
        %v4102 = vpop.xlane.xlu0 %4101
        %v4103 = vadd.f32 %v4087, %v4088
        %v4104 = vsel %vm1161, %v4089, 0.0
        %v4105 = vadd.f32 %v4103, %v4104
        %4106 = vadd.xlane.f32.xlu0 %v4105
        %v4107 = vpop.xlane.xlu0 %4106
        %v4108 = vadd.f32 %v4090, %v4091
        %v4109 = vsel %vm1161, %v4092, 0.0
        %v4110 = vadd.f32 %v4108, %v4109
        %4111 = vadd.xlane.f32.xlu0 %v4110
        %v4112 = vpop.xlane.xlu0 %4111
        %v4113 = vmul.f32 %v4097, %v260
        %v4114 = vmul.f32 %v4102, %v261
        %v4115 = vmul.f32 %v4107, %v262
        %v4116 = vmul.f32 %v4112, %v263
        %v4117 = vadd.f32 %v4113, %v4114
        %v4118 = vadd.f32 %v4117, %v4115
        %v4119 = vadd.f32 %v4118, %v4116
        %v4120 = vrot.slane %v4119, 4
        %v4121 = vadd.f32 %v4119, %v4120
        %v4122 = vrot.slane %v4121, 2
        %v4123 = vadd.f32 %v4121, %v4122
        %v4124 = vrot.slane %v4123, 1
        %v4125 = vadd.f32 %v4123, %v4124
        %v4126 = vlaneseq
        %v4127 = vshrl.u32 %v4126, 7
        %v4128 = vsub.s32 5, %v4127
        %v4129 = vrot.slane %v252, %v4128
        %v4130 = vlaneseq
        %v4131 = vshrl.u32 %v4130, 7
        %v4132 = vsub.s32 5, %v4131
        %v4133 = vrot.slane %v253, %v4132
        %v4134 = vlaneseq
        %v4135 = vshrl.u32 %v4134, 7
        %v4136 = vsub.s32 5, %v4135
        %v4137 = vrot.slane %v254, %v4136
        %v4138 = vmul.f32 %v271, %v4129
        %v4139 = vmul.f32 %v271, %v4133
        %v4140 = vmul.f32 %v271, %v4137
        %v4141 = vmul.f32 %v276, %v4129
        %v4142 = vmul.f32 %v276, %v4133
        %v4143 = vmul.f32 %v276, %v4137
        %v4144 = vmul.f32 %v281, %v4129
        %v4145 = vmul.f32 %v281, %v4133
        %v4146 = vmul.f32 %v281, %v4137
        %v4147 = vmul.f32 %v286, %v4129
        %v4148 = vmul.f32 %v286, %v4133
        %v4149 = vmul.f32 %v286, %v4137
        %v4150 = vmul.f32 %v314, %v4129
        %v4151 = vmul.f32 %v314, %v4133
        %v4152 = vmul.f32 %v314, %v4137
        %v4153 = vmul.f32 %v318, %v4129
        %v4154 = vmul.f32 %v318, %v4133
        %v4155 = vmul.f32 %v318, %v4137
        %v4156 = vmul.f32 %v322, %v4129
        %v4157 = vmul.f32 %v322, %v4133
        %v4158 = vmul.f32 %v322, %v4137
        %v4159 = vmul.f32 %v326, %v4129
        %v4160 = vmul.f32 %v326, %v4133
        %v4161 = vmul.f32 %v326, %v4137
        %4174 = vrot.lane.b32.xlu0 %v4150, 127
        %v4175 = vpop.permute.xlu0 %4174
        %4176 = vrot.lane.b32.xlu0 %v4151, 127
        %v4177 = vpop.permute.xlu0 %4176
        %4178 = vrot.lane.b32.xlu0 %v4152, 127
        %v4179 = vpop.permute.xlu0 %4178
        %4180 = vrot.lane.b32.xlu0 %v4153, 127
        %v4181 = vpop.permute.xlu0 %4180
        %4182 = vrot.lane.b32.xlu0 %v4154, 127
        %v4183 = vpop.permute.xlu0 %4182
        %4184 = vrot.lane.b32.xlu0 %v4155, 127
        %v4185 = vpop.permute.xlu0 %4184
        %4186 = vrot.lane.b32.xlu0 %v4156, 127
        %v4187 = vpop.permute.xlu0 %4186
        %4188 = vrot.lane.b32.xlu0 %v4157, 127
        %v4189 = vpop.permute.xlu0 %4188
        %4190 = vrot.lane.b32.xlu0 %v4158, 127
        %v4191 = vpop.permute.xlu0 %4190
        %4192 = vrot.lane.b32.xlu0 %v4159, 127
        %v4193 = vpop.permute.xlu0 %4192
        %4194 = vrot.lane.b32.xlu0 %v4160, 127
        %v4195 = vpop.permute.xlu0 %4194
        %4196 = vrot.lane.b32.xlu0 %v4161, 127
        %v4197 = vpop.permute.xlu0 %4196
        %v4198 = vsel %vm376, %v4175, %v4177
        %v4199 = vsel %vm376, %v4177, %v4179
        %v4200 = vsel %vm376, %v4181, %v4183
        %v4201 = vsel %vm376, %v4183, %v4185
        %v4202 = vsel %vm376, %v4187, %v4189
        %v4203 = vsel %vm376, %v4189, %v4191
        %v4204 = vsel %vm376, %v4193, %v4195
        %v4205 = vsel %vm376, %v4195, %v4197
        %v4218 = vadd.f32 %v4138, %v4198
        %v4219 = vadd.f32 %v4139, %v4199
        %v4220 = vadd.f32 %v4140, %v4179
        %v4221 = vadd.f32 %v4141, %v4200
        %v4222 = vadd.f32 %v4142, %v4201
        %v4223 = vadd.f32 %v4143, %v4185
        %v4224 = vadd.f32 %v4144, %v4202
        %v4225 = vadd.f32 %v4145, %v4203
        %v4226 = vadd.f32 %v4146, %v4191
        %v4227 = vadd.f32 %v4147, %v4204
        %v4228 = vadd.f32 %v4148, %v4205
        %v4229 = vadd.f32 %v4149, %v4197
        %v4230 = vmul.f32 %v411, %v4129
        %v4231 = vmul.f32 %v411, %v4133
        %v4232 = vmul.f32 %v411, %v4137
        %v4233 = vmul.f32 %v415, %v4129
        %v4234 = vmul.f32 %v415, %v4133
        %v4235 = vmul.f32 %v415, %v4137
        %v4236 = vmul.f32 %v419, %v4129
        %v4237 = vmul.f32 %v419, %v4133
        %v4238 = vmul.f32 %v419, %v4137
        %v4239 = vmul.f32 %v423, %v4129
        %v4240 = vmul.f32 %v423, %v4133
        %v4241 = vmul.f32 %v423, %v4137
        %4254 = vrot.lane.b32.xlu0 %v4230, 126
        %v4255 = vpop.permute.xlu0 %4254
        %4256 = vrot.lane.b32.xlu0 %v4231, 126
        %v4257 = vpop.permute.xlu0 %4256
        %4258 = vrot.lane.b32.xlu0 %v4232, 126
        %v4259 = vpop.permute.xlu0 %4258
        %4260 = vrot.lane.b32.xlu0 %v4233, 126
        %v4261 = vpop.permute.xlu0 %4260
        %4262 = vrot.lane.b32.xlu0 %v4234, 126
        %v4263 = vpop.permute.xlu0 %4262
        %4264 = vrot.lane.b32.xlu0 %v4235, 126
        %v4265 = vpop.permute.xlu0 %4264
        %4266 = vrot.lane.b32.xlu0 %v4236, 126
        %v4267 = vpop.permute.xlu0 %4266
        %4268 = vrot.lane.b32.xlu0 %v4237, 126
        %v4269 = vpop.permute.xlu0 %4268
        %4270 = vrot.lane.b32.xlu0 %v4238, 126
        %v4271 = vpop.permute.xlu0 %4270
        %4272 = vrot.lane.b32.xlu0 %v4239, 126
        %v4273 = vpop.permute.xlu0 %4272
        %4274 = vrot.lane.b32.xlu0 %v4240, 126
        %v4275 = vpop.permute.xlu0 %4274
        %4276 = vrot.lane.b32.xlu0 %v4241, 126
        %v4277 = vpop.permute.xlu0 %4276
        %v4278 = vsel %vm473, %v4255, %v4257
        %v4279 = vsel %vm473, %v4257, %v4259
        %v4280 = vsel %vm473, %v4261, %v4263
        %v4281 = vsel %vm473, %v4263, %v4265
        %v4282 = vsel %vm473, %v4267, %v4269
        %v4283 = vsel %vm473, %v4269, %v4271
        %v4284 = vsel %vm473, %v4273, %v4275
        %v4285 = vsel %vm473, %v4275, %v4277
        %v4298 = vadd.f32 %v4218, %v4278
        %v4299 = vadd.f32 %v4219, %v4279
        %v4300 = vadd.f32 %v4220, %v4259
        %v4301 = vadd.f32 %v4221, %v4280
        %v4302 = vadd.f32 %v4222, %v4281
        %v4303 = vadd.f32 %v4223, %v4265
        %v4304 = vadd.f32 %v4224, %v4282
        %v4305 = vadd.f32 %v4225, %v4283
        %v4306 = vadd.f32 %v4226, %v4271
        %v4307 = vadd.f32 %v4227, %v4284
        %v4308 = vadd.f32 %v4228, %v4285
        %v4309 = vadd.f32 %v4229, %v4277
        %v4310 = vmul.f32 %v508, %v4129
        %v4311 = vmul.f32 %v508, %v4133
        %v4312 = vmul.f32 %v508, %v4137
        %v4313 = vmul.f32 %v512, %v4129
        %v4314 = vmul.f32 %v512, %v4133
        %v4315 = vmul.f32 %v512, %v4137
        %v4316 = vmul.f32 %v516, %v4129
        %v4317 = vmul.f32 %v516, %v4133
        %v4318 = vmul.f32 %v516, %v4137
        %v4319 = vmul.f32 %v520, %v4129
        %v4320 = vmul.f32 %v520, %v4133
        %v4321 = vmul.f32 %v520, %v4137
        %4334 = vrot.lane.b32.xlu0 %v4310, 110
        %v4335 = vpop.permute.xlu0 %4334
        %4336 = vrot.lane.b32.xlu0 %v4311, 110
        %v4337 = vpop.permute.xlu0 %4336
        %4338 = vrot.lane.b32.xlu0 %v4312, 110
        %v4339 = vpop.permute.xlu0 %4338
        %4340 = vrot.lane.b32.xlu0 %v4313, 110
        %v4341 = vpop.permute.xlu0 %4340
        %4342 = vrot.lane.b32.xlu0 %v4314, 110
        %v4343 = vpop.permute.xlu0 %4342
        %4344 = vrot.lane.b32.xlu0 %v4315, 110
        %v4345 = vpop.permute.xlu0 %4344
        %4346 = vrot.lane.b32.xlu0 %v4316, 110
        %v4347 = vpop.permute.xlu0 %4346
        %4348 = vrot.lane.b32.xlu0 %v4317, 110
        %v4349 = vpop.permute.xlu0 %4348
        %4350 = vrot.lane.b32.xlu0 %v4318, 110
        %v4351 = vpop.permute.xlu0 %4350
        %4352 = vrot.lane.b32.xlu0 %v4319, 110
        %v4353 = vpop.permute.xlu0 %4352
        %4354 = vrot.lane.b32.xlu0 %v4320, 110
        %v4355 = vpop.permute.xlu0 %4354
        %4356 = vrot.lane.b32.xlu0 %v4321, 110
        %v4357 = vpop.permute.xlu0 %4356
        %v4358 = vsel %vm570, %v4335, %v4337
        %v4359 = vsel %vm570, %v4337, %v4339
        %v4360 = vsel %vm570, %v4341, %v4343
        %v4361 = vsel %vm570, %v4343, %v4345
        %v4362 = vsel %vm570, %v4347, %v4349
        %v4363 = vsel %vm570, %v4349, %v4351
        %v4364 = vsel %vm570, %v4353, %v4355
        %v4365 = vsel %vm570, %v4355, %v4357
        %v4378 = vadd.f32 %v4298, %v4358
        %v4379 = vadd.f32 %v4299, %v4359
        %v4380 = vadd.f32 %v4300, %v4339
        %v4381 = vadd.f32 %v4301, %v4360
        %v4382 = vadd.f32 %v4302, %v4361
        %v4383 = vadd.f32 %v4303, %v4345
        %v4384 = vadd.f32 %v4304, %v4362
        %v4385 = vadd.f32 %v4305, %v4363
        %v4386 = vadd.f32 %v4306, %v4351
        %v4387 = vadd.f32 %v4307, %v4364
        %v4388 = vadd.f32 %v4308, %v4365
        %v4389 = vadd.f32 %v4309, %v4357
        %v4390 = vmul.f32 %v605, %v4129
        %v4391 = vmul.f32 %v605, %v4133
        %v4392 = vmul.f32 %v605, %v4137
        %v4393 = vmul.f32 %v609, %v4129
        %v4394 = vmul.f32 %v609, %v4133
        %v4395 = vmul.f32 %v609, %v4137
        %v4396 = vmul.f32 %v613, %v4129
        %v4397 = vmul.f32 %v613, %v4133
        %v4398 = vmul.f32 %v613, %v4137
        %v4399 = vmul.f32 %v617, %v4129
        %v4400 = vmul.f32 %v617, %v4133
        %v4401 = vmul.f32 %v617, %v4137
        %4414 = vrot.lane.b32.xlu0 %v4390, 109
        %v4415 = vpop.permute.xlu0 %4414
        %4416 = vrot.lane.b32.xlu0 %v4391, 109
        %v4417 = vpop.permute.xlu0 %4416
        %4418 = vrot.lane.b32.xlu0 %v4392, 109
        %v4419 = vpop.permute.xlu0 %4418
        %4420 = vrot.lane.b32.xlu0 %v4393, 109
        %v4421 = vpop.permute.xlu0 %4420
        %4422 = vrot.lane.b32.xlu0 %v4394, 109
        %v4423 = vpop.permute.xlu0 %4422
        %4424 = vrot.lane.b32.xlu0 %v4395, 109
        %v4425 = vpop.permute.xlu0 %4424
        %4426 = vrot.lane.b32.xlu0 %v4396, 109
        %v4427 = vpop.permute.xlu0 %4426
        %4428 = vrot.lane.b32.xlu0 %v4397, 109
        %v4429 = vpop.permute.xlu0 %4428
        %4430 = vrot.lane.b32.xlu0 %v4398, 109
        %v4431 = vpop.permute.xlu0 %4430
        %4432 = vrot.lane.b32.xlu0 %v4399, 109
        %v4433 = vpop.permute.xlu0 %4432
        %4434 = vrot.lane.b32.xlu0 %v4400, 109
        %v4435 = vpop.permute.xlu0 %4434
        %4436 = vrot.lane.b32.xlu0 %v4401, 109
        %v4437 = vpop.permute.xlu0 %4436
        %v4438 = vsel %vm667, %v4415, %v4417
        %v4439 = vsel %vm667, %v4417, %v4419
        %v4440 = vsel %vm667, %v4421, %v4423
        %v4441 = vsel %vm667, %v4423, %v4425
        %v4442 = vsel %vm667, %v4427, %v4429
        %v4443 = vsel %vm667, %v4429, %v4431
        %v4444 = vsel %vm667, %v4433, %v4435
        %v4445 = vsel %vm667, %v4435, %v4437
        %v4458 = vadd.f32 %v4378, %v4438
        %v4459 = vadd.f32 %v4379, %v4439
        %v4460 = vadd.f32 %v4380, %v4419
        %v4461 = vadd.f32 %v4381, %v4440
        %v4462 = vadd.f32 %v4382, %v4441
        %v4463 = vadd.f32 %v4383, %v4425
        %v4464 = vadd.f32 %v4384, %v4442
        %v4465 = vadd.f32 %v4385, %v4443
        %v4466 = vadd.f32 %v4386, %v4431
        %v4467 = vadd.f32 %v4387, %v4444
        %v4468 = vadd.f32 %v4388, %v4445
        %v4469 = vadd.f32 %v4389, %v4437
        %v4470 = vmul.f32 %v702, %v4129
        %v4471 = vmul.f32 %v702, %v4133
        %v4472 = vmul.f32 %v702, %v4137
        %v4473 = vmul.f32 %v706, %v4129
        %v4474 = vmul.f32 %v706, %v4133
        %v4475 = vmul.f32 %v706, %v4137
        %v4476 = vmul.f32 %v710, %v4129
        %v4477 = vmul.f32 %v710, %v4133
        %v4478 = vmul.f32 %v710, %v4137
        %v4479 = vmul.f32 %v714, %v4129
        %v4480 = vmul.f32 %v714, %v4133
        %v4481 = vmul.f32 %v714, %v4137
        %4494 = vrot.lane.b32.xlu0 %v4470, 108
        %v4495 = vpop.permute.xlu0 %4494
        %4496 = vrot.lane.b32.xlu0 %v4471, 108
        %v4497 = vpop.permute.xlu0 %4496
        %4498 = vrot.lane.b32.xlu0 %v4472, 108
        %v4499 = vpop.permute.xlu0 %4498
        %4500 = vrot.lane.b32.xlu0 %v4473, 108
        %v4501 = vpop.permute.xlu0 %4500
        %4502 = vrot.lane.b32.xlu0 %v4474, 108
        %v4503 = vpop.permute.xlu0 %4502
        %4504 = vrot.lane.b32.xlu0 %v4475, 108
        %v4505 = vpop.permute.xlu0 %4504
        %4506 = vrot.lane.b32.xlu0 %v4476, 108
        %v4507 = vpop.permute.xlu0 %4506
        %4508 = vrot.lane.b32.xlu0 %v4477, 108
        %v4509 = vpop.permute.xlu0 %4508
        %4510 = vrot.lane.b32.xlu0 %v4478, 108
        %v4511 = vpop.permute.xlu0 %4510
        %4512 = vrot.lane.b32.xlu0 %v4479, 108
        %v4513 = vpop.permute.xlu0 %4512
        %4514 = vrot.lane.b32.xlu0 %v4480, 108
        %v4515 = vpop.permute.xlu0 %4514
        %4516 = vrot.lane.b32.xlu0 %v4481, 108
        %v4517 = vpop.permute.xlu0 %4516
        %v4518 = vsel %vm764, %v4495, %v4497
        %v4519 = vsel %vm764, %v4497, %v4499
        %v4520 = vsel %vm764, %v4501, %v4503
        %v4521 = vsel %vm764, %v4503, %v4505
        %v4522 = vsel %vm764, %v4507, %v4509
        %v4523 = vsel %vm764, %v4509, %v4511
        %v4524 = vsel %vm764, %v4513, %v4515
        %v4525 = vsel %vm764, %v4515, %v4517
        %v4538 = vadd.f32 %v4458, %v4518
        %v4539 = vadd.f32 %v4459, %v4519
        %v4540 = vadd.f32 %v4460, %v4499
        %v4541 = vadd.f32 %v4461, %v4520
        %v4542 = vadd.f32 %v4462, %v4521
        %v4543 = vadd.f32 %v4463, %v4505
        %v4544 = vadd.f32 %v4464, %v4522
        %v4545 = vadd.f32 %v4465, %v4523
        %v4546 = vadd.f32 %v4466, %v4511
        %v4547 = vadd.f32 %v4467, %v4524
        %v4548 = vadd.f32 %v4468, %v4525
        %v4549 = vadd.f32 %v4469, %v4517
        %v4550 = vmul.f32 %v799, %v4129
        %v4551 = vmul.f32 %v799, %v4133
        %v4552 = vmul.f32 %v799, %v4137
        %v4553 = vmul.f32 %v803, %v4129
        %v4554 = vmul.f32 %v803, %v4133
        %v4555 = vmul.f32 %v803, %v4137
        %v4556 = vmul.f32 %v807, %v4129
        %v4557 = vmul.f32 %v807, %v4133
        %v4558 = vmul.f32 %v807, %v4137
        %v4559 = vmul.f32 %v811, %v4129
        %v4560 = vmul.f32 %v811, %v4133
        %v4561 = vmul.f32 %v811, %v4137
        %4574 = vrot.lane.b32.xlu0 %v4550, 92
        %v4575 = vpop.permute.xlu0 %4574
        %4576 = vrot.lane.b32.xlu0 %v4551, 92
        %v4577 = vpop.permute.xlu0 %4576
        %4578 = vrot.lane.b32.xlu0 %v4552, 92
        %v4579 = vpop.permute.xlu0 %4578
        %4580 = vrot.lane.b32.xlu0 %v4553, 92
        %v4581 = vpop.permute.xlu0 %4580
        %4582 = vrot.lane.b32.xlu0 %v4554, 92
        %v4583 = vpop.permute.xlu0 %4582
        %4584 = vrot.lane.b32.xlu0 %v4555, 92
        %v4585 = vpop.permute.xlu0 %4584
        %4586 = vrot.lane.b32.xlu0 %v4556, 92
        %v4587 = vpop.permute.xlu0 %4586
        %4588 = vrot.lane.b32.xlu0 %v4557, 92
        %v4589 = vpop.permute.xlu0 %4588
        %4590 = vrot.lane.b32.xlu0 %v4558, 92
        %v4591 = vpop.permute.xlu0 %4590
        %4592 = vrot.lane.b32.xlu0 %v4559, 92
        %v4593 = vpop.permute.xlu0 %4592
        %4594 = vrot.lane.b32.xlu0 %v4560, 92
        %v4595 = vpop.permute.xlu0 %4594
        %4596 = vrot.lane.b32.xlu0 %v4561, 92
        %v4597 = vpop.permute.xlu0 %4596
        %v4598 = vsel %vm861, %v4575, %v4577
        %v4599 = vsel %vm861, %v4577, %v4579
        %v4600 = vsel %vm861, %v4581, %v4583
        %v4601 = vsel %vm861, %v4583, %v4585
        %v4602 = vsel %vm861, %v4587, %v4589
        %v4603 = vsel %vm861, %v4589, %v4591
        %v4604 = vsel %vm861, %v4593, %v4595
        %v4605 = vsel %vm861, %v4595, %v4597
        %v4618 = vadd.f32 %v4538, %v4598
        %v4619 = vadd.f32 %v4539, %v4599
        %v4620 = vadd.f32 %v4540, %v4579
        %v4621 = vadd.f32 %v4541, %v4600
        %v4622 = vadd.f32 %v4542, %v4601
        %v4623 = vadd.f32 %v4543, %v4585
        %v4624 = vadd.f32 %v4544, %v4602
        %v4625 = vadd.f32 %v4545, %v4603
        %v4626 = vadd.f32 %v4546, %v4591
        %v4627 = vadd.f32 %v4547, %v4604
        %v4628 = vadd.f32 %v4548, %v4605
        %v4629 = vadd.f32 %v4549, %v4597
        %v4630 = vmul.f32 %v896, %v4129
        %v4631 = vmul.f32 %v896, %v4133
        %v4632 = vmul.f32 %v896, %v4137
        %v4633 = vmul.f32 %v900, %v4129
        %v4634 = vmul.f32 %v900, %v4133
        %v4635 = vmul.f32 %v900, %v4137
        %v4636 = vmul.f32 %v904, %v4129
        %v4637 = vmul.f32 %v904, %v4133
        %v4638 = vmul.f32 %v904, %v4137
        %v4639 = vmul.f32 %v908, %v4129
        %v4640 = vmul.f32 %v908, %v4133
        %v4641 = vmul.f32 %v908, %v4137
        %4654 = vrot.lane.b32.xlu0 %v4630, 91
        %v4655 = vpop.permute.xlu0 %4654
        %4656 = vrot.lane.b32.xlu0 %v4631, 91
        %v4657 = vpop.permute.xlu0 %4656
        %4658 = vrot.lane.b32.xlu0 %v4632, 91
        %v4659 = vpop.permute.xlu0 %4658
        %4660 = vrot.lane.b32.xlu0 %v4633, 91
        %v4661 = vpop.permute.xlu0 %4660
        %4662 = vrot.lane.b32.xlu0 %v4634, 91
        %v4663 = vpop.permute.xlu0 %4662
        %4664 = vrot.lane.b32.xlu0 %v4635, 91
        %v4665 = vpop.permute.xlu0 %4664
        %4666 = vrot.lane.b32.xlu0 %v4636, 91
        %v4667 = vpop.permute.xlu0 %4666
        %4668 = vrot.lane.b32.xlu0 %v4637, 91
        %v4669 = vpop.permute.xlu0 %4668
        %4670 = vrot.lane.b32.xlu0 %v4638, 91
        %v4671 = vpop.permute.xlu0 %4670
        %4672 = vrot.lane.b32.xlu0 %v4639, 91
        %v4673 = vpop.permute.xlu0 %4672
        %4674 = vrot.lane.b32.xlu0 %v4640, 91
        %v4675 = vpop.permute.xlu0 %4674
        %4676 = vrot.lane.b32.xlu0 %v4641, 91
        %v4677 = vpop.permute.xlu0 %4676
        %v4678 = vsel %vm958, %v4655, %v4657
        %v4679 = vsel %vm958, %v4657, %v4659
        %v4680 = vsel %vm958, %v4661, %v4663
        %v4681 = vsel %vm958, %v4663, %v4665
        %v4682 = vsel %vm958, %v4667, %v4669
        %v4683 = vsel %vm958, %v4669, %v4671
        %v4684 = vsel %vm958, %v4673, %v4675
        %v4685 = vsel %vm958, %v4675, %v4677
        %v4698 = vadd.f32 %v4618, %v4678
        %v4699 = vadd.f32 %v4619, %v4679
        %v4700 = vadd.f32 %v4620, %v4659
        %v4701 = vadd.f32 %v4621, %v4680
        %v4702 = vadd.f32 %v4622, %v4681
        %v4703 = vadd.f32 %v4623, %v4665
        %v4704 = vadd.f32 %v4624, %v4682
        %v4705 = vadd.f32 %v4625, %v4683
        %v4706 = vadd.f32 %v4626, %v4671
        %v4707 = vadd.f32 %v4627, %v4684
        %v4708 = vadd.f32 %v4628, %v4685
        %v4709 = vadd.f32 %v4629, %v4677
        %v4710 = vmul.f32 %v993, %v4129
        %v4711 = vmul.f32 %v993, %v4133
        %v4712 = vmul.f32 %v993, %v4137
        %v4713 = vmul.f32 %v997, %v4129
        %v4714 = vmul.f32 %v997, %v4133
        %v4715 = vmul.f32 %v997, %v4137
        %v4716 = vmul.f32 %v1001, %v4129
        %v4717 = vmul.f32 %v1001, %v4133
        %v4718 = vmul.f32 %v1001, %v4137
        %v4719 = vmul.f32 %v1005, %v4129
        %v4720 = vmul.f32 %v1005, %v4133
        %v4721 = vmul.f32 %v1005, %v4137
        %4734 = vrot.lane.b32.xlu0 %v4710, 90
        %v4735 = vpop.permute.xlu0 %4734
        %4736 = vrot.lane.b32.xlu0 %v4711, 90
        %v4737 = vpop.permute.xlu0 %4736
        %4738 = vrot.lane.b32.xlu0 %v4712, 90
        %v4739 = vpop.permute.xlu0 %4738
        %4740 = vrot.lane.b32.xlu0 %v4713, 90
        %v4741 = vpop.permute.xlu0 %4740
        %4742 = vrot.lane.b32.xlu0 %v4714, 90
        %v4743 = vpop.permute.xlu0 %4742
        %4744 = vrot.lane.b32.xlu0 %v4715, 90
        %v4745 = vpop.permute.xlu0 %4744
        %4746 = vrot.lane.b32.xlu0 %v4716, 90
        %v4747 = vpop.permute.xlu0 %4746
        %4748 = vrot.lane.b32.xlu0 %v4717, 90
        %v4749 = vpop.permute.xlu0 %4748
        %4750 = vrot.lane.b32.xlu0 %v4718, 90
        %v4751 = vpop.permute.xlu0 %4750
        %4752 = vrot.lane.b32.xlu0 %v4719, 90
        %v4753 = vpop.permute.xlu0 %4752
        %4754 = vrot.lane.b32.xlu0 %v4720, 90
        %v4755 = vpop.permute.xlu0 %4754
        %4756 = vrot.lane.b32.xlu0 %v4721, 90
        %v4757 = vpop.permute.xlu0 %4756
        %v4758 = vsel %vm1055, %v4735, %v4737
        %v4759 = vsel %vm1055, %v4737, %v4739
        %v4760 = vsel %vm1055, %v4741, %v4743
        %v4761 = vsel %vm1055, %v4743, %v4745
        %v4762 = vsel %vm1055, %v4747, %v4749
        %v4763 = vsel %vm1055, %v4749, %v4751
        %v4764 = vsel %vm1055, %v4753, %v4755
        %v4765 = vsel %vm1055, %v4755, %v4757
        %v4778 = vadd.f32 %v4698, %v4758
        %v4779 = vadd.f32 %v4699, %v4759
        %v4780 = vadd.f32 %v4700, %v4739
        %v4781 = vadd.f32 %v4701, %v4760
        %v4782 = vadd.f32 %v4702, %v4761
        %v4783 = vadd.f32 %v4703, %v4745
        %v4784 = vadd.f32 %v4704, %v4762
        %v4785 = vadd.f32 %v4705, %v4763
        %v4786 = vadd.f32 %v4706, %v4751
        %v4787 = vadd.f32 %v4707, %v4764
        %v4788 = vadd.f32 %v4708, %v4765
        %v4789 = vadd.f32 %v4709, %v4757
        %v4790 = vadd.f32 %v4778, %v1091
        %v4791 = vadd.f32 %v4779, %v1091
        %v4792 = vadd.f32 %v4780, %v1091
        %v4793 = vadd.f32 %v4781, %v1096
        %v4794 = vadd.f32 %v4782, %v1096
        %v4795 = vadd.f32 %v4783, %v1096
        %v4796 = vadd.f32 %v4784, %v1101
        %v4797 = vadd.f32 %v4785, %v1101
        %v4798 = vadd.f32 %v4786, %v1101
        %v4799 = vadd.f32 %v4787, %v1106
        %v4800 = vadd.f32 %v4788, %v1106
        %v4801 = vadd.f32 %v4789, %v1106
        %v4802 = vmax.f32 %v4790, 0.0
        %v4803 = vmax.f32 %v4791, 0.0
        %v4804 = vmax.f32 %v4792, 0.0
        %v4805 = vmax.f32 %v4793, 0.0
        %v4806 = vmax.f32 %v4794, 0.0
        %v4807 = vmax.f32 %v4795, 0.0
        %v4808 = vmax.f32 %v4796, 0.0
        %v4809 = vmax.f32 %v4797, 0.0
        %v4810 = vmax.f32 %v4798, 0.0
        %v4811 = vmax.f32 %v4799, 0.0
        %v4812 = vmax.f32 %v4800, 0.0
        %v4813 = vmax.f32 %v4801, 0.0
        %v4814 = vmul.f32 %v4802, %v1136
        %v4815 = vmul.f32 %v4803, %v1140
        %v4816 = vmul.f32 %v4804, %v1144
        %v4817 = vmul.f32 %v4805, %v1136
        %v4818 = vmul.f32 %v4806, %v1140
        %v4819 = vmul.f32 %v4807, %v1144
        %v4820 = vmul.f32 %v4808, %v1136
        %v4821 = vmul.f32 %v4809, %v1140
        %v4822 = vmul.f32 %v4810, %v1144
        %v4823 = vmul.f32 %v4811, %v1136
        %v4824 = vmul.f32 %v4812, %v1140
        %v4825 = vmul.f32 %v4813, %v1144
        %v4826 = vadd.f32 %v4814, %v4815
        %v4827 = vsel %vm1161, %v4816, 0.0
        %v4828 = vadd.f32 %v4826, %v4827
        %4829 = vadd.xlane.f32.xlu0 %v4828
        %v4830 = vpop.xlane.xlu0 %4829
        %v4831 = vadd.f32 %v4817, %v4818
        %v4832 = vsel %vm1161, %v4819, 0.0
        %v4833 = vadd.f32 %v4831, %v4832
        %4834 = vadd.xlane.f32.xlu0 %v4833
        %v4835 = vpop.xlane.xlu0 %4834
        %v4836 = vadd.f32 %v4820, %v4821
        %v4837 = vsel %vm1161, %v4822, 0.0
        %v4838 = vadd.f32 %v4836, %v4837
        %4839 = vadd.xlane.f32.xlu0 %v4838
        %v4840 = vpop.xlane.xlu0 %4839
        %v4841 = vadd.f32 %v4823, %v4824
        %v4842 = vsel %vm1161, %v4825, 0.0
        %v4843 = vadd.f32 %v4841, %v4842
        %4844 = vadd.xlane.f32.xlu0 %v4843
        %v4845 = vpop.xlane.xlu0 %4844
        %v4846 = vmul.f32 %v4830, %v260
        %v4847 = vmul.f32 %v4835, %v261
        %v4848 = vmul.f32 %v4840, %v262
        %v4849 = vmul.f32 %v4845, %v263
        %v4850 = vadd.f32 %v4846, %v4847
        %v4851 = vadd.f32 %v4850, %v4848
        %v4852 = vadd.f32 %v4851, %v4849
        %v4853 = vrot.slane %v4852, 4
        %v4854 = vadd.f32 %v4852, %v4853
        %v4855 = vrot.slane %v4854, 2
        %v4856 = vadd.f32 %v4854, %v4855
        %v4857 = vrot.slane %v4856, 1
        %v4858 = vadd.f32 %v4856, %v4857
        %v4859 = vlaneseq
        %v4860 = vshrl.u32 %v4859, 7
        %v4861 = vsub.s32 6, %v4860
        %v4862 = vrot.slane %v252, %v4861
        %v4863 = vlaneseq
        %v4864 = vshrl.u32 %v4863, 7
        %v4865 = vsub.s32 6, %v4864
        %v4866 = vrot.slane %v253, %v4865
        %v4867 = vlaneseq
        %v4868 = vshrl.u32 %v4867, 7
        %v4869 = vsub.s32 6, %v4868
        %v4870 = vrot.slane %v254, %v4869
        %v4871 = vmul.f32 %v271, %v4862
        %v4872 = vmul.f32 %v271, %v4866
        %v4873 = vmul.f32 %v271, %v4870
        %v4874 = vmul.f32 %v276, %v4862
        %v4875 = vmul.f32 %v276, %v4866
        %v4876 = vmul.f32 %v276, %v4870
        %v4877 = vmul.f32 %v281, %v4862
        %v4878 = vmul.f32 %v281, %v4866
        %v4879 = vmul.f32 %v281, %v4870
        %v4880 = vmul.f32 %v286, %v4862
        %v4881 = vmul.f32 %v286, %v4866
        %v4882 = vmul.f32 %v286, %v4870
        %v4883 = vmul.f32 %v314, %v4862
        %v4884 = vmul.f32 %v314, %v4866
        %v4885 = vmul.f32 %v314, %v4870
        %v4886 = vmul.f32 %v318, %v4862
        %v4887 = vmul.f32 %v318, %v4866
        %v4888 = vmul.f32 %v318, %v4870
        %v4889 = vmul.f32 %v322, %v4862
        %v4890 = vmul.f32 %v322, %v4866
        %v4891 = vmul.f32 %v322, %v4870
        %v4892 = vmul.f32 %v326, %v4862
        %v4893 = vmul.f32 %v326, %v4866
        %v4894 = vmul.f32 %v326, %v4870
        %4907 = vrot.lane.b32.xlu0 %v4883, 127
        %v4908 = vpop.permute.xlu0 %4907
        %4909 = vrot.lane.b32.xlu0 %v4884, 127
        %v4910 = vpop.permute.xlu0 %4909
        %4911 = vrot.lane.b32.xlu0 %v4885, 127
        %v4912 = vpop.permute.xlu0 %4911
        %4913 = vrot.lane.b32.xlu0 %v4886, 127
        %v4914 = vpop.permute.xlu0 %4913
        %4915 = vrot.lane.b32.xlu0 %v4887, 127
        %v4916 = vpop.permute.xlu0 %4915
        %4917 = vrot.lane.b32.xlu0 %v4888, 127
        %v4918 = vpop.permute.xlu0 %4917
        %4919 = vrot.lane.b32.xlu0 %v4889, 127
        %v4920 = vpop.permute.xlu0 %4919
        %4921 = vrot.lane.b32.xlu0 %v4890, 127
        %v4922 = vpop.permute.xlu0 %4921
        %4923 = vrot.lane.b32.xlu0 %v4891, 127
        %v4924 = vpop.permute.xlu0 %4923
        %4925 = vrot.lane.b32.xlu0 %v4892, 127
        %v4926 = vpop.permute.xlu0 %4925
        %4927 = vrot.lane.b32.xlu0 %v4893, 127
        %v4928 = vpop.permute.xlu0 %4927
        %4929 = vrot.lane.b32.xlu0 %v4894, 127
        %v4930 = vpop.permute.xlu0 %4929
        %v4931 = vsel %vm376, %v4908, %v4910
        %v4932 = vsel %vm376, %v4910, %v4912
        %v4933 = vsel %vm376, %v4914, %v4916
        %v4934 = vsel %vm376, %v4916, %v4918
        %v4935 = vsel %vm376, %v4920, %v4922
        %v4936 = vsel %vm376, %v4922, %v4924
        %v4937 = vsel %vm376, %v4926, %v4928
        %v4938 = vsel %vm376, %v4928, %v4930
        %v4951 = vadd.f32 %v4871, %v4931
        %v4952 = vadd.f32 %v4872, %v4932
        %v4953 = vadd.f32 %v4873, %v4912
        %v4954 = vadd.f32 %v4874, %v4933
        %v4955 = vadd.f32 %v4875, %v4934
        %v4956 = vadd.f32 %v4876, %v4918
        %v4957 = vadd.f32 %v4877, %v4935
        %v4958 = vadd.f32 %v4878, %v4936
        %v4959 = vadd.f32 %v4879, %v4924
        %v4960 = vadd.f32 %v4880, %v4937
        %v4961 = vadd.f32 %v4881, %v4938
        %v4962 = vadd.f32 %v4882, %v4930
        %v4963 = vmul.f32 %v411, %v4862
        %v4964 = vmul.f32 %v411, %v4866
        %v4965 = vmul.f32 %v411, %v4870
        %v4966 = vmul.f32 %v415, %v4862
        %v4967 = vmul.f32 %v415, %v4866
        %v4968 = vmul.f32 %v415, %v4870
        %v4969 = vmul.f32 %v419, %v4862
        %v4970 = vmul.f32 %v419, %v4866
        %v4971 = vmul.f32 %v419, %v4870
        %v4972 = vmul.f32 %v423, %v4862
        %v4973 = vmul.f32 %v423, %v4866
        %v4974 = vmul.f32 %v423, %v4870
        %4987 = vrot.lane.b32.xlu0 %v4963, 126
        %v4988 = vpop.permute.xlu0 %4987
        %4989 = vrot.lane.b32.xlu0 %v4964, 126
        %v4990 = vpop.permute.xlu0 %4989
        %4991 = vrot.lane.b32.xlu0 %v4965, 126
        %v4992 = vpop.permute.xlu0 %4991
        %4993 = vrot.lane.b32.xlu0 %v4966, 126
        %v4994 = vpop.permute.xlu0 %4993
        %4995 = vrot.lane.b32.xlu0 %v4967, 126
        %v4996 = vpop.permute.xlu0 %4995
        %4997 = vrot.lane.b32.xlu0 %v4968, 126
        %v4998 = vpop.permute.xlu0 %4997
        %4999 = vrot.lane.b32.xlu0 %v4969, 126
        %v5000 = vpop.permute.xlu0 %4999
        %5001 = vrot.lane.b32.xlu0 %v4970, 126
        %v5002 = vpop.permute.xlu0 %5001
        %5003 = vrot.lane.b32.xlu0 %v4971, 126
        %v5004 = vpop.permute.xlu0 %5003
        %5005 = vrot.lane.b32.xlu0 %v4972, 126
        %v5006 = vpop.permute.xlu0 %5005
        %5007 = vrot.lane.b32.xlu0 %v4973, 126
        %v5008 = vpop.permute.xlu0 %5007
        %5009 = vrot.lane.b32.xlu0 %v4974, 126
        %v5010 = vpop.permute.xlu0 %5009
        %v5011 = vsel %vm473, %v4988, %v4990
        %v5012 = vsel %vm473, %v4990, %v4992
        %v5013 = vsel %vm473, %v4994, %v4996
        %v5014 = vsel %vm473, %v4996, %v4998
        %v5015 = vsel %vm473, %v5000, %v5002
        %v5016 = vsel %vm473, %v5002, %v5004
        %v5017 = vsel %vm473, %v5006, %v5008
        %v5018 = vsel %vm473, %v5008, %v5010
        %v5031 = vadd.f32 %v4951, %v5011
        %v5032 = vadd.f32 %v4952, %v5012
        %v5033 = vadd.f32 %v4953, %v4992
        %v5034 = vadd.f32 %v4954, %v5013
        %v5035 = vadd.f32 %v4955, %v5014
        %v5036 = vadd.f32 %v4956, %v4998
        %v5037 = vadd.f32 %v4957, %v5015
        %v5038 = vadd.f32 %v4958, %v5016
        %v5039 = vadd.f32 %v4959, %v5004
        %v5040 = vadd.f32 %v4960, %v5017
        %v5041 = vadd.f32 %v4961, %v5018
        %v5042 = vadd.f32 %v4962, %v5010
        %v5043 = vmul.f32 %v508, %v4862
        %v5044 = vmul.f32 %v508, %v4866
        %v5045 = vmul.f32 %v508, %v4870
        %v5046 = vmul.f32 %v512, %v4862
        %v5047 = vmul.f32 %v512, %v4866
        %v5048 = vmul.f32 %v512, %v4870
        %v5049 = vmul.f32 %v516, %v4862
        %v5050 = vmul.f32 %v516, %v4866
        %v5051 = vmul.f32 %v516, %v4870
        %v5052 = vmul.f32 %v520, %v4862
        %v5053 = vmul.f32 %v520, %v4866
        %v5054 = vmul.f32 %v520, %v4870
        %5067 = vrot.lane.b32.xlu0 %v5043, 110
        %v5068 = vpop.permute.xlu0 %5067
        %5069 = vrot.lane.b32.xlu0 %v5044, 110
        %v5070 = vpop.permute.xlu0 %5069
        %5071 = vrot.lane.b32.xlu0 %v5045, 110
        %v5072 = vpop.permute.xlu0 %5071
        %5073 = vrot.lane.b32.xlu0 %v5046, 110
        %v5074 = vpop.permute.xlu0 %5073
        %5075 = vrot.lane.b32.xlu0 %v5047, 110
        %v5076 = vpop.permute.xlu0 %5075
        %5077 = vrot.lane.b32.xlu0 %v5048, 110
        %v5078 = vpop.permute.xlu0 %5077
        %5079 = vrot.lane.b32.xlu0 %v5049, 110
        %v5080 = vpop.permute.xlu0 %5079
        %5081 = vrot.lane.b32.xlu0 %v5050, 110
        %v5082 = vpop.permute.xlu0 %5081
        %5083 = vrot.lane.b32.xlu0 %v5051, 110
        %v5084 = vpop.permute.xlu0 %5083
        %5085 = vrot.lane.b32.xlu0 %v5052, 110
        %v5086 = vpop.permute.xlu0 %5085
        %5087 = vrot.lane.b32.xlu0 %v5053, 110
        %v5088 = vpop.permute.xlu0 %5087
        %5089 = vrot.lane.b32.xlu0 %v5054, 110
        %v5090 = vpop.permute.xlu0 %5089
        %v5091 = vsel %vm570, %v5068, %v5070
        %v5092 = vsel %vm570, %v5070, %v5072
        %v5093 = vsel %vm570, %v5074, %v5076
        %v5094 = vsel %vm570, %v5076, %v5078
        %v5095 = vsel %vm570, %v5080, %v5082
        %v5096 = vsel %vm570, %v5082, %v5084
        %v5097 = vsel %vm570, %v5086, %v5088
        %v5098 = vsel %vm570, %v5088, %v5090
        %v5111 = vadd.f32 %v5031, %v5091
        %v5112 = vadd.f32 %v5032, %v5092
        %v5113 = vadd.f32 %v5033, %v5072
        %v5114 = vadd.f32 %v5034, %v5093
        %v5115 = vadd.f32 %v5035, %v5094
        %v5116 = vadd.f32 %v5036, %v5078
        %v5117 = vadd.f32 %v5037, %v5095
        %v5118 = vadd.f32 %v5038, %v5096
        %v5119 = vadd.f32 %v5039, %v5084
        %v5120 = vadd.f32 %v5040, %v5097
        %v5121 = vadd.f32 %v5041, %v5098
        %v5122 = vadd.f32 %v5042, %v5090
        %v5123 = vmul.f32 %v605, %v4862
        %v5124 = vmul.f32 %v605, %v4866
        %v5125 = vmul.f32 %v605, %v4870
        %v5126 = vmul.f32 %v609, %v4862
        %v5127 = vmul.f32 %v609, %v4866
        %v5128 = vmul.f32 %v609, %v4870
        %v5129 = vmul.f32 %v613, %v4862
        %v5130 = vmul.f32 %v613, %v4866
        %v5131 = vmul.f32 %v613, %v4870
        %v5132 = vmul.f32 %v617, %v4862
        %v5133 = vmul.f32 %v617, %v4866
        %v5134 = vmul.f32 %v617, %v4870
        %5147 = vrot.lane.b32.xlu0 %v5123, 109
        %v5148 = vpop.permute.xlu0 %5147
        %5149 = vrot.lane.b32.xlu0 %v5124, 109
        %v5150 = vpop.permute.xlu0 %5149
        %5151 = vrot.lane.b32.xlu0 %v5125, 109
        %v5152 = vpop.permute.xlu0 %5151
        %5153 = vrot.lane.b32.xlu0 %v5126, 109
        %v5154 = vpop.permute.xlu0 %5153
        %5155 = vrot.lane.b32.xlu0 %v5127, 109
        %v5156 = vpop.permute.xlu0 %5155
        %5157 = vrot.lane.b32.xlu0 %v5128, 109
        %v5158 = vpop.permute.xlu0 %5157
        %5159 = vrot.lane.b32.xlu0 %v5129, 109
        %v5160 = vpop.permute.xlu0 %5159
        %5161 = vrot.lane.b32.xlu0 %v5130, 109
        %v5162 = vpop.permute.xlu0 %5161
        %5163 = vrot.lane.b32.xlu0 %v5131, 109
        %v5164 = vpop.permute.xlu0 %5163
        %5165 = vrot.lane.b32.xlu0 %v5132, 109
        %v5166 = vpop.permute.xlu0 %5165
        %5167 = vrot.lane.b32.xlu0 %v5133, 109
        %v5168 = vpop.permute.xlu0 %5167
        %5169 = vrot.lane.b32.xlu0 %v5134, 109
        %v5170 = vpop.permute.xlu0 %5169
        %v5171 = vsel %vm667, %v5148, %v5150
        %v5172 = vsel %vm667, %v5150, %v5152
        %v5173 = vsel %vm667, %v5154, %v5156
        %v5174 = vsel %vm667, %v5156, %v5158
        %v5175 = vsel %vm667, %v5160, %v5162
        %v5176 = vsel %vm667, %v5162, %v5164
        %v5177 = vsel %vm667, %v5166, %v5168
        %v5178 = vsel %vm667, %v5168, %v5170
        %v5191 = vadd.f32 %v5111, %v5171
        %v5192 = vadd.f32 %v5112, %v5172
        %v5193 = vadd.f32 %v5113, %v5152
        %v5194 = vadd.f32 %v5114, %v5173
        %v5195 = vadd.f32 %v5115, %v5174
        %v5196 = vadd.f32 %v5116, %v5158
        %v5197 = vadd.f32 %v5117, %v5175
        %v5198 = vadd.f32 %v5118, %v5176
        %v5199 = vadd.f32 %v5119, %v5164
        %v5200 = vadd.f32 %v5120, %v5177
        %v5201 = vadd.f32 %v5121, %v5178
        %v5202 = vadd.f32 %v5122, %v5170
        %v5203 = vmul.f32 %v702, %v4862
        %v5204 = vmul.f32 %v702, %v4866
        %v5205 = vmul.f32 %v702, %v4870
        %v5206 = vmul.f32 %v706, %v4862
        %v5207 = vmul.f32 %v706, %v4866
        %v5208 = vmul.f32 %v706, %v4870
        %v5209 = vmul.f32 %v710, %v4862
        %v5210 = vmul.f32 %v710, %v4866
        %v5211 = vmul.f32 %v710, %v4870
        %v5212 = vmul.f32 %v714, %v4862
        %v5213 = vmul.f32 %v714, %v4866
        %v5214 = vmul.f32 %v714, %v4870
        %5227 = vrot.lane.b32.xlu0 %v5203, 108
        %v5228 = vpop.permute.xlu0 %5227
        %5229 = vrot.lane.b32.xlu0 %v5204, 108
        %v5230 = vpop.permute.xlu0 %5229
        %5231 = vrot.lane.b32.xlu0 %v5205, 108
        %v5232 = vpop.permute.xlu0 %5231
        %5233 = vrot.lane.b32.xlu0 %v5206, 108
        %v5234 = vpop.permute.xlu0 %5233
        %5235 = vrot.lane.b32.xlu0 %v5207, 108
        %v5236 = vpop.permute.xlu0 %5235
        %5237 = vrot.lane.b32.xlu0 %v5208, 108
        %v5238 = vpop.permute.xlu0 %5237
        %5239 = vrot.lane.b32.xlu0 %v5209, 108
        %v5240 = vpop.permute.xlu0 %5239
        %5241 = vrot.lane.b32.xlu0 %v5210, 108
        %v5242 = vpop.permute.xlu0 %5241
        %5243 = vrot.lane.b32.xlu0 %v5211, 108
        %v5244 = vpop.permute.xlu0 %5243
        %5245 = vrot.lane.b32.xlu0 %v5212, 108
        %v5246 = vpop.permute.xlu0 %5245
        %5247 = vrot.lane.b32.xlu0 %v5213, 108
        %v5248 = vpop.permute.xlu0 %5247
        %5249 = vrot.lane.b32.xlu0 %v5214, 108
        %v5250 = vpop.permute.xlu0 %5249
        %v5251 = vsel %vm764, %v5228, %v5230
        %v5252 = vsel %vm764, %v5230, %v5232
        %v5253 = vsel %vm764, %v5234, %v5236
        %v5254 = vsel %vm764, %v5236, %v5238
        %v5255 = vsel %vm764, %v5240, %v5242
        %v5256 = vsel %vm764, %v5242, %v5244
        %v5257 = vsel %vm764, %v5246, %v5248
        %v5258 = vsel %vm764, %v5248, %v5250
        %v5271 = vadd.f32 %v5191, %v5251
        %v5272 = vadd.f32 %v5192, %v5252
        %v5273 = vadd.f32 %v5193, %v5232
        %v5274 = vadd.f32 %v5194, %v5253
        %v5275 = vadd.f32 %v5195, %v5254
        %v5276 = vadd.f32 %v5196, %v5238
        %v5277 = vadd.f32 %v5197, %v5255
        %v5278 = vadd.f32 %v5198, %v5256
        %v5279 = vadd.f32 %v5199, %v5244
        %v5280 = vadd.f32 %v5200, %v5257
        %v5281 = vadd.f32 %v5201, %v5258
        %v5282 = vadd.f32 %v5202, %v5250
        %v5283 = vmul.f32 %v799, %v4862
        %v5284 = vmul.f32 %v799, %v4866
        %v5285 = vmul.f32 %v799, %v4870
        %v5286 = vmul.f32 %v803, %v4862
        %v5287 = vmul.f32 %v803, %v4866
        %v5288 = vmul.f32 %v803, %v4870
        %v5289 = vmul.f32 %v807, %v4862
        %v5290 = vmul.f32 %v807, %v4866
        %v5291 = vmul.f32 %v807, %v4870
        %v5292 = vmul.f32 %v811, %v4862
        %v5293 = vmul.f32 %v811, %v4866
        %v5294 = vmul.f32 %v811, %v4870
        %5307 = vrot.lane.b32.xlu0 %v5283, 92
        %v5308 = vpop.permute.xlu0 %5307
        %5309 = vrot.lane.b32.xlu0 %v5284, 92
        %v5310 = vpop.permute.xlu0 %5309
        %5311 = vrot.lane.b32.xlu0 %v5285, 92
        %v5312 = vpop.permute.xlu0 %5311
        %5313 = vrot.lane.b32.xlu0 %v5286, 92
        %v5314 = vpop.permute.xlu0 %5313
        %5315 = vrot.lane.b32.xlu0 %v5287, 92
        %v5316 = vpop.permute.xlu0 %5315
        %5317 = vrot.lane.b32.xlu0 %v5288, 92
        %v5318 = vpop.permute.xlu0 %5317
        %5319 = vrot.lane.b32.xlu0 %v5289, 92
        %v5320 = vpop.permute.xlu0 %5319
        %5321 = vrot.lane.b32.xlu0 %v5290, 92
        %v5322 = vpop.permute.xlu0 %5321
        %5323 = vrot.lane.b32.xlu0 %v5291, 92
        %v5324 = vpop.permute.xlu0 %5323
        %5325 = vrot.lane.b32.xlu0 %v5292, 92
        %v5326 = vpop.permute.xlu0 %5325
        %5327 = vrot.lane.b32.xlu0 %v5293, 92
        %v5328 = vpop.permute.xlu0 %5327
        %5329 = vrot.lane.b32.xlu0 %v5294, 92
        %v5330 = vpop.permute.xlu0 %5329
        %v5331 = vsel %vm861, %v5308, %v5310
        %v5332 = vsel %vm861, %v5310, %v5312
        %v5333 = vsel %vm861, %v5314, %v5316
        %v5334 = vsel %vm861, %v5316, %v5318
        %v5335 = vsel %vm861, %v5320, %v5322
        %v5336 = vsel %vm861, %v5322, %v5324
        %v5337 = vsel %vm861, %v5326, %v5328
        %v5338 = vsel %vm861, %v5328, %v5330
        %v5351 = vadd.f32 %v5271, %v5331
        %v5352 = vadd.f32 %v5272, %v5332
        %v5353 = vadd.f32 %v5273, %v5312
        %v5354 = vadd.f32 %v5274, %v5333
        %v5355 = vadd.f32 %v5275, %v5334
        %v5356 = vadd.f32 %v5276, %v5318
        %v5357 = vadd.f32 %v5277, %v5335
        %v5358 = vadd.f32 %v5278, %v5336
        %v5359 = vadd.f32 %v5279, %v5324
        %v5360 = vadd.f32 %v5280, %v5337
        %v5361 = vadd.f32 %v5281, %v5338
        %v5362 = vadd.f32 %v5282, %v5330
        %v5363 = vmul.f32 %v896, %v4862
        %v5364 = vmul.f32 %v896, %v4866
        %v5365 = vmul.f32 %v896, %v4870
        %v5366 = vmul.f32 %v900, %v4862
        %v5367 = vmul.f32 %v900, %v4866
        %v5368 = vmul.f32 %v900, %v4870
        %v5369 = vmul.f32 %v904, %v4862
        %v5370 = vmul.f32 %v904, %v4866
        %v5371 = vmul.f32 %v904, %v4870
        %v5372 = vmul.f32 %v908, %v4862
        %v5373 = vmul.f32 %v908, %v4866
        %v5374 = vmul.f32 %v908, %v4870
        %5387 = vrot.lane.b32.xlu0 %v5363, 91
        %v5388 = vpop.permute.xlu0 %5387
        %5389 = vrot.lane.b32.xlu0 %v5364, 91
        %v5390 = vpop.permute.xlu0 %5389
        %5391 = vrot.lane.b32.xlu0 %v5365, 91
        %v5392 = vpop.permute.xlu0 %5391
        %5393 = vrot.lane.b32.xlu0 %v5366, 91
        %v5394 = vpop.permute.xlu0 %5393
        %5395 = vrot.lane.b32.xlu0 %v5367, 91
        %v5396 = vpop.permute.xlu0 %5395
        %5397 = vrot.lane.b32.xlu0 %v5368, 91
        %v5398 = vpop.permute.xlu0 %5397
        %5399 = vrot.lane.b32.xlu0 %v5369, 91
        %v5400 = vpop.permute.xlu0 %5399
        %5401 = vrot.lane.b32.xlu0 %v5370, 91
        %v5402 = vpop.permute.xlu0 %5401
        %5403 = vrot.lane.b32.xlu0 %v5371, 91
        %v5404 = vpop.permute.xlu0 %5403
        %5405 = vrot.lane.b32.xlu0 %v5372, 91
        %v5406 = vpop.permute.xlu0 %5405
        %5407 = vrot.lane.b32.xlu0 %v5373, 91
        %v5408 = vpop.permute.xlu0 %5407
        %5409 = vrot.lane.b32.xlu0 %v5374, 91
        %v5410 = vpop.permute.xlu0 %5409
        %v5411 = vsel %vm958, %v5388, %v5390
        %v5412 = vsel %vm958, %v5390, %v5392
        %v5413 = vsel %vm958, %v5394, %v5396
        %v5414 = vsel %vm958, %v5396, %v5398
        %v5415 = vsel %vm958, %v5400, %v5402
        %v5416 = vsel %vm958, %v5402, %v5404
        %v5417 = vsel %vm958, %v5406, %v5408
        %v5418 = vsel %vm958, %v5408, %v5410
        %v5431 = vadd.f32 %v5351, %v5411
        %v5432 = vadd.f32 %v5352, %v5412
        %v5433 = vadd.f32 %v5353, %v5392
        %v5434 = vadd.f32 %v5354, %v5413
        %v5435 = vadd.f32 %v5355, %v5414
        %v5436 = vadd.f32 %v5356, %v5398
        %v5437 = vadd.f32 %v5357, %v5415
        %v5438 = vadd.f32 %v5358, %v5416
        %v5439 = vadd.f32 %v5359, %v5404
        %v5440 = vadd.f32 %v5360, %v5417
        %v5441 = vadd.f32 %v5361, %v5418
        %v5442 = vadd.f32 %v5362, %v5410
        %v5443 = vmul.f32 %v993, %v4862
        %v5444 = vmul.f32 %v993, %v4866
        %v5445 = vmul.f32 %v993, %v4870
        %v5446 = vmul.f32 %v997, %v4862
        %v5447 = vmul.f32 %v997, %v4866
        %v5448 = vmul.f32 %v997, %v4870
        %v5449 = vmul.f32 %v1001, %v4862
        %v5450 = vmul.f32 %v1001, %v4866
        %v5451 = vmul.f32 %v1001, %v4870
        %v5452 = vmul.f32 %v1005, %v4862
        %v5453 = vmul.f32 %v1005, %v4866
        %v5454 = vmul.f32 %v1005, %v4870
        %5467 = vrot.lane.b32.xlu0 %v5443, 90
        %v5468 = vpop.permute.xlu0 %5467
        %5469 = vrot.lane.b32.xlu0 %v5444, 90
        %v5470 = vpop.permute.xlu0 %5469
        %5471 = vrot.lane.b32.xlu0 %v5445, 90
        %v5472 = vpop.permute.xlu0 %5471
        %5473 = vrot.lane.b32.xlu0 %v5446, 90
        %v5474 = vpop.permute.xlu0 %5473
        %5475 = vrot.lane.b32.xlu0 %v5447, 90
        %v5476 = vpop.permute.xlu0 %5475
        %5477 = vrot.lane.b32.xlu0 %v5448, 90
        %v5478 = vpop.permute.xlu0 %5477
        %5479 = vrot.lane.b32.xlu0 %v5449, 90
        %v5480 = vpop.permute.xlu0 %5479
        %5481 = vrot.lane.b32.xlu0 %v5450, 90
        %v5482 = vpop.permute.xlu0 %5481
        %5483 = vrot.lane.b32.xlu0 %v5451, 90
        %v5484 = vpop.permute.xlu0 %5483
        %5485 = vrot.lane.b32.xlu0 %v5452, 90
        %v5486 = vpop.permute.xlu0 %5485
        %5487 = vrot.lane.b32.xlu0 %v5453, 90
        %v5488 = vpop.permute.xlu0 %5487
        %5489 = vrot.lane.b32.xlu0 %v5454, 90
        %v5490 = vpop.permute.xlu0 %5489
        %v5491 = vsel %vm1055, %v5468, %v5470
        %v5492 = vsel %vm1055, %v5470, %v5472
        %v5493 = vsel %vm1055, %v5474, %v5476
        %v5494 = vsel %vm1055, %v5476, %v5478
        %v5495 = vsel %vm1055, %v5480, %v5482
        %v5496 = vsel %vm1055, %v5482, %v5484
        %v5497 = vsel %vm1055, %v5486, %v5488
        %v5498 = vsel %vm1055, %v5488, %v5490
        %v5511 = vadd.f32 %v5431, %v5491
        %v5512 = vadd.f32 %v5432, %v5492
        %v5513 = vadd.f32 %v5433, %v5472
        %v5514 = vadd.f32 %v5434, %v5493
        %v5515 = vadd.f32 %v5435, %v5494
        %v5516 = vadd.f32 %v5436, %v5478
        %v5517 = vadd.f32 %v5437, %v5495
        %v5518 = vadd.f32 %v5438, %v5496
        %v5519 = vadd.f32 %v5439, %v5484
        %v5520 = vadd.f32 %v5440, %v5497
        %v5521 = vadd.f32 %v5441, %v5498
        %v5522 = vadd.f32 %v5442, %v5490
        %v5523 = vadd.f32 %v5511, %v1091
        %v5524 = vadd.f32 %v5512, %v1091
        %v5525 = vadd.f32 %v5513, %v1091
        %v5526 = vadd.f32 %v5514, %v1096
        %v5527 = vadd.f32 %v5515, %v1096
        %v5528 = vadd.f32 %v5516, %v1096
        %v5529 = vadd.f32 %v5517, %v1101
        %v5530 = vadd.f32 %v5518, %v1101
        %v5531 = vadd.f32 %v5519, %v1101
        %v5532 = vadd.f32 %v5520, %v1106
        %v5533 = vadd.f32 %v5521, %v1106
        %v5534 = vadd.f32 %v5522, %v1106
        %v5535 = vmax.f32 %v5523, 0.0
        %v5536 = vmax.f32 %v5524, 0.0
        %v5537 = vmax.f32 %v5525, 0.0
        %v5538 = vmax.f32 %v5526, 0.0
        %v5539 = vmax.f32 %v5527, 0.0
        %v5540 = vmax.f32 %v5528, 0.0
        %v5541 = vmax.f32 %v5529, 0.0
        %v5542 = vmax.f32 %v5530, 0.0
        %v5543 = vmax.f32 %v5531, 0.0
        %v5544 = vmax.f32 %v5532, 0.0
        %v5545 = vmax.f32 %v5533, 0.0
        %v5546 = vmax.f32 %v5534, 0.0
        %v5547 = vmul.f32 %v5535, %v1136
        %v5548 = vmul.f32 %v5536, %v1140
        %v5549 = vmul.f32 %v5537, %v1144
        %v5550 = vmul.f32 %v5538, %v1136
        %v5551 = vmul.f32 %v5539, %v1140
        %v5552 = vmul.f32 %v5540, %v1144
        %v5553 = vmul.f32 %v5541, %v1136
        %v5554 = vmul.f32 %v5542, %v1140
        %v5555 = vmul.f32 %v5543, %v1144
        %v5556 = vmul.f32 %v5544, %v1136
        %v5557 = vmul.f32 %v5545, %v1140
        %v5558 = vmul.f32 %v5546, %v1144
        %v5559 = vadd.f32 %v5547, %v5548
        %v5560 = vsel %vm1161, %v5549, 0.0
        %v5561 = vadd.f32 %v5559, %v5560
        %5562 = vadd.xlane.f32.xlu0 %v5561
        %v5563 = vpop.xlane.xlu0 %5562
        %v5564 = vadd.f32 %v5550, %v5551
        %v5565 = vsel %vm1161, %v5552, 0.0
        %v5566 = vadd.f32 %v5564, %v5565
        %5567 = vadd.xlane.f32.xlu0 %v5566
        %v5568 = vpop.xlane.xlu0 %5567
        %v5569 = vadd.f32 %v5553, %v5554
        %v5570 = vsel %vm1161, %v5555, 0.0
        %v5571 = vadd.f32 %v5569, %v5570
        %5572 = vadd.xlane.f32.xlu0 %v5571
        %v5573 = vpop.xlane.xlu0 %5572
        %v5574 = vadd.f32 %v5556, %v5557
        %v5575 = vsel %vm1161, %v5558, 0.0
        %v5576 = vadd.f32 %v5574, %v5575
        %5577 = vadd.xlane.f32.xlu0 %v5576
        %v5578 = vpop.xlane.xlu0 %5577
        %v5579 = vmul.f32 %v5563, %v260
        %v5580 = vmul.f32 %v5568, %v261
        %v5581 = vmul.f32 %v5573, %v262
        %v5582 = vmul.f32 %v5578, %v263
        %v5583 = vadd.f32 %v5579, %v5580
        %v5584 = vadd.f32 %v5583, %v5581
        %v5585 = vadd.f32 %v5584, %v5582
        %v5586 = vrot.slane %v5585, 4
        %v5587 = vadd.f32 %v5585, %v5586
        %v5588 = vrot.slane %v5587, 2
        %v5589 = vadd.f32 %v5587, %v5588
        %v5590 = vrot.slane %v5589, 1
        %v5591 = vadd.f32 %v5589, %v5590
        %v5592 = vlaneseq
        %v5593 = vshrl.u32 %v5592, 7
        %v5594 = vsub.s32 7, %v5593
        %v5595 = vrot.slane %v252, %v5594
        %v5596 = vlaneseq
        %v5597 = vshrl.u32 %v5596, 7
        %v5598 = vsub.s32 7, %v5597
        %v5599 = vrot.slane %v253, %v5598
        %v5600 = vlaneseq
        %v5601 = vshrl.u32 %v5600, 7
        %v5602 = vsub.s32 7, %v5601
        %v5603 = vrot.slane %v254, %v5602
        %v5604 = vmul.f32 %v271, %v5595
        %v5605 = vmul.f32 %v271, %v5599
        %v5606 = vmul.f32 %v271, %v5603
        %v5607 = vmul.f32 %v276, %v5595
        %v5608 = vmul.f32 %v276, %v5599
        %v5609 = vmul.f32 %v276, %v5603
        %v5610 = vmul.f32 %v281, %v5595
        %v5611 = vmul.f32 %v281, %v5599
        %v5612 = vmul.f32 %v281, %v5603
        %v5613 = vmul.f32 %v286, %v5595
        %v5614 = vmul.f32 %v286, %v5599
        %v5615 = vmul.f32 %v286, %v5603
        %v5616 = vmul.f32 %v314, %v5595
        %v5617 = vmul.f32 %v314, %v5599
        %v5618 = vmul.f32 %v314, %v5603
        %v5619 = vmul.f32 %v318, %v5595
        %v5620 = vmul.f32 %v318, %v5599
        %v5621 = vmul.f32 %v318, %v5603
        %v5622 = vmul.f32 %v322, %v5595
        %v5623 = vmul.f32 %v322, %v5599
        %v5624 = vmul.f32 %v322, %v5603
        %v5625 = vmul.f32 %v326, %v5595
        %v5626 = vmul.f32 %v326, %v5599
        %v5627 = vmul.f32 %v326, %v5603
        %5640 = vrot.lane.b32.xlu0 %v5616, 127
        %v5641 = vpop.permute.xlu0 %5640
        %5642 = vrot.lane.b32.xlu0 %v5617, 127
        %v5643 = vpop.permute.xlu0 %5642
        %5644 = vrot.lane.b32.xlu0 %v5618, 127
        %v5645 = vpop.permute.xlu0 %5644
        %5646 = vrot.lane.b32.xlu0 %v5619, 127
        %v5647 = vpop.permute.xlu0 %5646
        %5648 = vrot.lane.b32.xlu0 %v5620, 127
        %v5649 = vpop.permute.xlu0 %5648
        %5650 = vrot.lane.b32.xlu0 %v5621, 127
        %v5651 = vpop.permute.xlu0 %5650
        %5652 = vrot.lane.b32.xlu0 %v5622, 127
        %v5653 = vpop.permute.xlu0 %5652
        %5654 = vrot.lane.b32.xlu0 %v5623, 127
        %v5655 = vpop.permute.xlu0 %5654
        %5656 = vrot.lane.b32.xlu0 %v5624, 127
        %v5657 = vpop.permute.xlu0 %5656
        %5658 = vrot.lane.b32.xlu0 %v5625, 127
        %v5659 = vpop.permute.xlu0 %5658
        %5660 = vrot.lane.b32.xlu0 %v5626, 127
        %v5661 = vpop.permute.xlu0 %5660
        %5662 = vrot.lane.b32.xlu0 %v5627, 127
        %v5663 = vpop.permute.xlu0 %5662
        %v5664 = vsel %vm376, %v5641, %v5643
        %v5665 = vsel %vm376, %v5643, %v5645
        %v5666 = vsel %vm376, %v5647, %v5649
        %v5667 = vsel %vm376, %v5649, %v5651
        %v5668 = vsel %vm376, %v5653, %v5655
        %v5669 = vsel %vm376, %v5655, %v5657
        %v5670 = vsel %vm376, %v5659, %v5661
        %v5671 = vsel %vm376, %v5661, %v5663
        %v5684 = vadd.f32 %v5604, %v5664
        %v5685 = vadd.f32 %v5605, %v5665
        %v5686 = vadd.f32 %v5606, %v5645
        %v5687 = vadd.f32 %v5607, %v5666
        %v5688 = vadd.f32 %v5608, %v5667
        %v5689 = vadd.f32 %v5609, %v5651
        %v5690 = vadd.f32 %v5610, %v5668
        %v5691 = vadd.f32 %v5611, %v5669
        %v5692 = vadd.f32 %v5612, %v5657
        %v5693 = vadd.f32 %v5613, %v5670
        %v5694 = vadd.f32 %v5614, %v5671
        %v5695 = vadd.f32 %v5615, %v5663
        %v5696 = vmul.f32 %v411, %v5595
        %v5697 = vmul.f32 %v411, %v5599
        %v5698 = vmul.f32 %v411, %v5603
        %v5699 = vmul.f32 %v415, %v5595
        %v5700 = vmul.f32 %v415, %v5599
        %v5701 = vmul.f32 %v415, %v5603
        %v5702 = vmul.f32 %v419, %v5595
        %v5703 = vmul.f32 %v419, %v5599
        %v5704 = vmul.f32 %v419, %v5603
        %v5705 = vmul.f32 %v423, %v5595
        %v5706 = vmul.f32 %v423, %v5599
        %v5707 = vmul.f32 %v423, %v5603
        %5720 = vrot.lane.b32.xlu0 %v5696, 126
        %v5721 = vpop.permute.xlu0 %5720
        %5722 = vrot.lane.b32.xlu0 %v5697, 126
        %v5723 = vpop.permute.xlu0 %5722
        %5724 = vrot.lane.b32.xlu0 %v5698, 126
        %v5725 = vpop.permute.xlu0 %5724
        %5726 = vrot.lane.b32.xlu0 %v5699, 126
        %v5727 = vpop.permute.xlu0 %5726
        %5728 = vrot.lane.b32.xlu0 %v5700, 126
        %v5729 = vpop.permute.xlu0 %5728
        %5730 = vrot.lane.b32.xlu0 %v5701, 126
        %v5731 = vpop.permute.xlu0 %5730
        %5732 = vrot.lane.b32.xlu0 %v5702, 126
        %v5733 = vpop.permute.xlu0 %5732
        %5734 = vrot.lane.b32.xlu0 %v5703, 126
        %v5735 = vpop.permute.xlu0 %5734
        %5736 = vrot.lane.b32.xlu0 %v5704, 126
        %v5737 = vpop.permute.xlu0 %5736
        %5738 = vrot.lane.b32.xlu0 %v5705, 126
        %v5739 = vpop.permute.xlu0 %5738
        %5740 = vrot.lane.b32.xlu0 %v5706, 126
        %v5741 = vpop.permute.xlu0 %5740
        %5742 = vrot.lane.b32.xlu0 %v5707, 126
        %v5743 = vpop.permute.xlu0 %5742
        %v5744 = vsel %vm473, %v5721, %v5723
        %v5745 = vsel %vm473, %v5723, %v5725
        %v5746 = vsel %vm473, %v5727, %v5729
        %v5747 = vsel %vm473, %v5729, %v5731
        %v5748 = vsel %vm473, %v5733, %v5735
        %v5749 = vsel %vm473, %v5735, %v5737
        %v5750 = vsel %vm473, %v5739, %v5741
        %v5751 = vsel %vm473, %v5741, %v5743
        %v5764 = vadd.f32 %v5684, %v5744
        %v5765 = vadd.f32 %v5685, %v5745
        %v5766 = vadd.f32 %v5686, %v5725
        %v5767 = vadd.f32 %v5687, %v5746
        %v5768 = vadd.f32 %v5688, %v5747
        %v5769 = vadd.f32 %v5689, %v5731
        %v5770 = vadd.f32 %v5690, %v5748
        %v5771 = vadd.f32 %v5691, %v5749
        %v5772 = vadd.f32 %v5692, %v5737
        %v5773 = vadd.f32 %v5693, %v5750
        %v5774 = vadd.f32 %v5694, %v5751
        %v5775 = vadd.f32 %v5695, %v5743
        %v5776 = vmul.f32 %v508, %v5595
        %v5777 = vmul.f32 %v508, %v5599
        %v5778 = vmul.f32 %v508, %v5603
        %v5779 = vmul.f32 %v512, %v5595
        %v5780 = vmul.f32 %v512, %v5599
        %v5781 = vmul.f32 %v512, %v5603
        %v5782 = vmul.f32 %v516, %v5595
        %v5783 = vmul.f32 %v516, %v5599
        %v5784 = vmul.f32 %v516, %v5603
        %v5785 = vmul.f32 %v520, %v5595
        %v5786 = vmul.f32 %v520, %v5599
        %v5787 = vmul.f32 %v520, %v5603
        %5800 = vrot.lane.b32.xlu0 %v5776, 110
        %v5801 = vpop.permute.xlu0 %5800
        %5802 = vrot.lane.b32.xlu0 %v5777, 110
        %v5803 = vpop.permute.xlu0 %5802
        %5804 = vrot.lane.b32.xlu0 %v5778, 110
        %v5805 = vpop.permute.xlu0 %5804
        %5806 = vrot.lane.b32.xlu0 %v5779, 110
        %v5807 = vpop.permute.xlu0 %5806
        %5808 = vrot.lane.b32.xlu0 %v5780, 110
        %v5809 = vpop.permute.xlu0 %5808
        %5810 = vrot.lane.b32.xlu0 %v5781, 110
        %v5811 = vpop.permute.xlu0 %5810
        %5812 = vrot.lane.b32.xlu0 %v5782, 110
        %v5813 = vpop.permute.xlu0 %5812
        %5814 = vrot.lane.b32.xlu0 %v5783, 110
        %v5815 = vpop.permute.xlu0 %5814
        %5816 = vrot.lane.b32.xlu0 %v5784, 110
        %v5817 = vpop.permute.xlu0 %5816
        %5818 = vrot.lane.b32.xlu0 %v5785, 110
        %v5819 = vpop.permute.xlu0 %5818
        %5820 = vrot.lane.b32.xlu0 %v5786, 110
        %v5821 = vpop.permute.xlu0 %5820
        %5822 = vrot.lane.b32.xlu0 %v5787, 110
        %v5823 = vpop.permute.xlu0 %5822
        %v5824 = vsel %vm570, %v5801, %v5803
        %v5825 = vsel %vm570, %v5803, %v5805
        %v5826 = vsel %vm570, %v5807, %v5809
        %v5827 = vsel %vm570, %v5809, %v5811
        %v5828 = vsel %vm570, %v5813, %v5815
        %v5829 = vsel %vm570, %v5815, %v5817
        %v5830 = vsel %vm570, %v5819, %v5821
        %v5831 = vsel %vm570, %v5821, %v5823
        %v5844 = vadd.f32 %v5764, %v5824
        %v5845 = vadd.f32 %v5765, %v5825
        %v5846 = vadd.f32 %v5766, %v5805
        %v5847 = vadd.f32 %v5767, %v5826
        %v5848 = vadd.f32 %v5768, %v5827
        %v5849 = vadd.f32 %v5769, %v5811
        %v5850 = vadd.f32 %v5770, %v5828
        %v5851 = vadd.f32 %v5771, %v5829
        %v5852 = vadd.f32 %v5772, %v5817
        %v5853 = vadd.f32 %v5773, %v5830
        %v5854 = vadd.f32 %v5774, %v5831
        %v5855 = vadd.f32 %v5775, %v5823
        %v5856 = vmul.f32 %v605, %v5595
        %v5857 = vmul.f32 %v605, %v5599
        %v5858 = vmul.f32 %v605, %v5603
        %v5859 = vmul.f32 %v609, %v5595
        %v5860 = vmul.f32 %v609, %v5599
        %v5861 = vmul.f32 %v609, %v5603
        %v5862 = vmul.f32 %v613, %v5595
        %v5863 = vmul.f32 %v613, %v5599
        %v5864 = vmul.f32 %v613, %v5603
        %v5865 = vmul.f32 %v617, %v5595
        %v5866 = vmul.f32 %v617, %v5599
        %v5867 = vmul.f32 %v617, %v5603
        %5880 = vrot.lane.b32.xlu0 %v5856, 109
        %v5881 = vpop.permute.xlu0 %5880
        %5882 = vrot.lane.b32.xlu0 %v5857, 109
        %v5883 = vpop.permute.xlu0 %5882
        %5884 = vrot.lane.b32.xlu0 %v5858, 109
        %v5885 = vpop.permute.xlu0 %5884
        %5886 = vrot.lane.b32.xlu0 %v5859, 109
        %v5887 = vpop.permute.xlu0 %5886
        %5888 = vrot.lane.b32.xlu0 %v5860, 109
        %v5889 = vpop.permute.xlu0 %5888
        %5890 = vrot.lane.b32.xlu0 %v5861, 109
        %v5891 = vpop.permute.xlu0 %5890
        %5892 = vrot.lane.b32.xlu0 %v5862, 109
        %v5893 = vpop.permute.xlu0 %5892
        %5894 = vrot.lane.b32.xlu0 %v5863, 109
        %v5895 = vpop.permute.xlu0 %5894
        %5896 = vrot.lane.b32.xlu0 %v5864, 109
        %v5897 = vpop.permute.xlu0 %5896
        %5898 = vrot.lane.b32.xlu0 %v5865, 109
        %v5899 = vpop.permute.xlu0 %5898
        %5900 = vrot.lane.b32.xlu0 %v5866, 109
        %v5901 = vpop.permute.xlu0 %5900
        %5902 = vrot.lane.b32.xlu0 %v5867, 109
        %v5903 = vpop.permute.xlu0 %5902
        %v5904 = vsel %vm667, %v5881, %v5883
        %v5905 = vsel %vm667, %v5883, %v5885
        %v5906 = vsel %vm667, %v5887, %v5889
        %v5907 = vsel %vm667, %v5889, %v5891
        %v5908 = vsel %vm667, %v5893, %v5895
        %v5909 = vsel %vm667, %v5895, %v5897
        %v5910 = vsel %vm667, %v5899, %v5901
        %v5911 = vsel %vm667, %v5901, %v5903
        %v5924 = vadd.f32 %v5844, %v5904
        %v5925 = vadd.f32 %v5845, %v5905
        %v5926 = vadd.f32 %v5846, %v5885
        %v5927 = vadd.f32 %v5847, %v5906
        %v5928 = vadd.f32 %v5848, %v5907
        %v5929 = vadd.f32 %v5849, %v5891
        %v5930 = vadd.f32 %v5850, %v5908
        %v5931 = vadd.f32 %v5851, %v5909
        %v5932 = vadd.f32 %v5852, %v5897
        %v5933 = vadd.f32 %v5853, %v5910
        %v5934 = vadd.f32 %v5854, %v5911
        %v5935 = vadd.f32 %v5855, %v5903
        %v5936 = vmul.f32 %v702, %v5595
        %v5937 = vmul.f32 %v702, %v5599
        %v5938 = vmul.f32 %v702, %v5603
        %v5939 = vmul.f32 %v706, %v5595
        %v5940 = vmul.f32 %v706, %v5599
        %v5941 = vmul.f32 %v706, %v5603
        %v5942 = vmul.f32 %v710, %v5595
        %v5943 = vmul.f32 %v710, %v5599
        %v5944 = vmul.f32 %v710, %v5603
        %v5945 = vmul.f32 %v714, %v5595
        %v5946 = vmul.f32 %v714, %v5599
        %v5947 = vmul.f32 %v714, %v5603
        %5960 = vrot.lane.b32.xlu0 %v5936, 108
        %v5961 = vpop.permute.xlu0 %5960
        %5962 = vrot.lane.b32.xlu0 %v5937, 108
        %v5963 = vpop.permute.xlu0 %5962
        %5964 = vrot.lane.b32.xlu0 %v5938, 108
        %v5965 = vpop.permute.xlu0 %5964
        %5966 = vrot.lane.b32.xlu0 %v5939, 108
        %v5967 = vpop.permute.xlu0 %5966
        %5968 = vrot.lane.b32.xlu0 %v5940, 108
        %v5969 = vpop.permute.xlu0 %5968
        %5970 = vrot.lane.b32.xlu0 %v5941, 108
        %v5971 = vpop.permute.xlu0 %5970
        %5972 = vrot.lane.b32.xlu0 %v5942, 108
        %v5973 = vpop.permute.xlu0 %5972
        %5974 = vrot.lane.b32.xlu0 %v5943, 108
        %v5975 = vpop.permute.xlu0 %5974
        %5976 = vrot.lane.b32.xlu0 %v5944, 108
        %v5977 = vpop.permute.xlu0 %5976
        %5978 = vrot.lane.b32.xlu0 %v5945, 108
        %v5979 = vpop.permute.xlu0 %5978
        %5980 = vrot.lane.b32.xlu0 %v5946, 108
        %v5981 = vpop.permute.xlu0 %5980
        %5982 = vrot.lane.b32.xlu0 %v5947, 108
        %v5983 = vpop.permute.xlu0 %5982
        %v5984 = vsel %vm764, %v5961, %v5963
        %v5985 = vsel %vm764, %v5963, %v5965
        %v5986 = vsel %vm764, %v5967, %v5969
        %v5987 = vsel %vm764, %v5969, %v5971
        %v5988 = vsel %vm764, %v5973, %v5975
        %v5989 = vsel %vm764, %v5975, %v5977
        %v5990 = vsel %vm764, %v5979, %v5981
        %v5991 = vsel %vm764, %v5981, %v5983
        %v6004 = vadd.f32 %v5924, %v5984
        %v6005 = vadd.f32 %v5925, %v5985
        %v6006 = vadd.f32 %v5926, %v5965
        %v6007 = vadd.f32 %v5927, %v5986
        %v6008 = vadd.f32 %v5928, %v5987
        %v6009 = vadd.f32 %v5929, %v5971
        %v6010 = vadd.f32 %v5930, %v5988
        %v6011 = vadd.f32 %v5931, %v5989
        %v6012 = vadd.f32 %v5932, %v5977
        %v6013 = vadd.f32 %v5933, %v5990
        %v6014 = vadd.f32 %v5934, %v5991
        %v6015 = vadd.f32 %v5935, %v5983
        %v6016 = vmul.f32 %v799, %v5595
        %v6017 = vmul.f32 %v799, %v5599
        %v6018 = vmul.f32 %v799, %v5603
        %v6019 = vmul.f32 %v803, %v5595
        %v6020 = vmul.f32 %v803, %v5599
        %v6021 = vmul.f32 %v803, %v5603
        %v6022 = vmul.f32 %v807, %v5595
        %v6023 = vmul.f32 %v807, %v5599
        %v6024 = vmul.f32 %v807, %v5603
        %v6025 = vmul.f32 %v811, %v5595
        %v6026 = vmul.f32 %v811, %v5599
        %v6027 = vmul.f32 %v811, %v5603
        %6040 = vrot.lane.b32.xlu0 %v6016, 92
        %v6041 = vpop.permute.xlu0 %6040
        %6042 = vrot.lane.b32.xlu0 %v6017, 92
        %v6043 = vpop.permute.xlu0 %6042
        %6044 = vrot.lane.b32.xlu0 %v6018, 92
        %v6045 = vpop.permute.xlu0 %6044
        %6046 = vrot.lane.b32.xlu0 %v6019, 92
        %v6047 = vpop.permute.xlu0 %6046
        %6048 = vrot.lane.b32.xlu0 %v6020, 92
        %v6049 = vpop.permute.xlu0 %6048
        %6050 = vrot.lane.b32.xlu0 %v6021, 92
        %v6051 = vpop.permute.xlu0 %6050
        %6052 = vrot.lane.b32.xlu0 %v6022, 92
        %v6053 = vpop.permute.xlu0 %6052
        %6054 = vrot.lane.b32.xlu0 %v6023, 92
        %v6055 = vpop.permute.xlu0 %6054
        %6056 = vrot.lane.b32.xlu0 %v6024, 92
        %v6057 = vpop.permute.xlu0 %6056
        %6058 = vrot.lane.b32.xlu0 %v6025, 92
        %v6059 = vpop.permute.xlu0 %6058
        %6060 = vrot.lane.b32.xlu0 %v6026, 92
        %v6061 = vpop.permute.xlu0 %6060
        %6062 = vrot.lane.b32.xlu0 %v6027, 92
        %v6063 = vpop.permute.xlu0 %6062
        %v6064 = vsel %vm861, %v6041, %v6043
        %v6065 = vsel %vm861, %v6043, %v6045
        %v6066 = vsel %vm861, %v6047, %v6049
        %v6067 = vsel %vm861, %v6049, %v6051
        %v6068 = vsel %vm861, %v6053, %v6055
        %v6069 = vsel %vm861, %v6055, %v6057
        %v6070 = vsel %vm861, %v6059, %v6061
        %v6071 = vsel %vm861, %v6061, %v6063
        %v6084 = vadd.f32 %v6004, %v6064
        %v6085 = vadd.f32 %v6005, %v6065
        %v6086 = vadd.f32 %v6006, %v6045
        %v6087 = vadd.f32 %v6007, %v6066
        %v6088 = vadd.f32 %v6008, %v6067
        %v6089 = vadd.f32 %v6009, %v6051
        %v6090 = vadd.f32 %v6010, %v6068
        %v6091 = vadd.f32 %v6011, %v6069
        %v6092 = vadd.f32 %v6012, %v6057
        %v6093 = vadd.f32 %v6013, %v6070
        %v6094 = vadd.f32 %v6014, %v6071
        %v6095 = vadd.f32 %v6015, %v6063
        %v6096 = vmul.f32 %v896, %v5595
        %v6097 = vmul.f32 %v896, %v5599
        %v6098 = vmul.f32 %v896, %v5603
        %v6099 = vmul.f32 %v900, %v5595
        %v6100 = vmul.f32 %v900, %v5599
        %v6101 = vmul.f32 %v900, %v5603
        %v6102 = vmul.f32 %v904, %v5595
        %v6103 = vmul.f32 %v904, %v5599
        %v6104 = vmul.f32 %v904, %v5603
        %v6105 = vmul.f32 %v908, %v5595
        %v6106 = vmul.f32 %v908, %v5599
        %v6107 = vmul.f32 %v908, %v5603
        %6120 = vrot.lane.b32.xlu0 %v6096, 91
        %v6121 = vpop.permute.xlu0 %6120
        %6122 = vrot.lane.b32.xlu0 %v6097, 91
        %v6123 = vpop.permute.xlu0 %6122
        %6124 = vrot.lane.b32.xlu0 %v6098, 91
        %v6125 = vpop.permute.xlu0 %6124
        %6126 = vrot.lane.b32.xlu0 %v6099, 91
        %v6127 = vpop.permute.xlu0 %6126
        %6128 = vrot.lane.b32.xlu0 %v6100, 91
        %v6129 = vpop.permute.xlu0 %6128
        %6130 = vrot.lane.b32.xlu0 %v6101, 91
        %v6131 = vpop.permute.xlu0 %6130
        %6132 = vrot.lane.b32.xlu0 %v6102, 91
        %v6133 = vpop.permute.xlu0 %6132
        %6134 = vrot.lane.b32.xlu0 %v6103, 91
        %v6135 = vpop.permute.xlu0 %6134
        %6136 = vrot.lane.b32.xlu0 %v6104, 91
        %v6137 = vpop.permute.xlu0 %6136
        %6138 = vrot.lane.b32.xlu0 %v6105, 91
        %v6139 = vpop.permute.xlu0 %6138
        %6140 = vrot.lane.b32.xlu0 %v6106, 91
        %v6141 = vpop.permute.xlu0 %6140
        %6142 = vrot.lane.b32.xlu0 %v6107, 91
        %v6143 = vpop.permute.xlu0 %6142
        %v6144 = vsel %vm958, %v6121, %v6123
        %v6145 = vsel %vm958, %v6123, %v6125
        %v6146 = vsel %vm958, %v6127, %v6129
        %v6147 = vsel %vm958, %v6129, %v6131
        %v6148 = vsel %vm958, %v6133, %v6135
        %v6149 = vsel %vm958, %v6135, %v6137
        %v6150 = vsel %vm958, %v6139, %v6141
        %v6151 = vsel %vm958, %v6141, %v6143
        %v6164 = vadd.f32 %v6084, %v6144
        %v6165 = vadd.f32 %v6085, %v6145
        %v6166 = vadd.f32 %v6086, %v6125
        %v6167 = vadd.f32 %v6087, %v6146
        %v6168 = vadd.f32 %v6088, %v6147
        %v6169 = vadd.f32 %v6089, %v6131
        %v6170 = vadd.f32 %v6090, %v6148
        %v6171 = vadd.f32 %v6091, %v6149
        %v6172 = vadd.f32 %v6092, %v6137
        %v6173 = vadd.f32 %v6093, %v6150
        %v6174 = vadd.f32 %v6094, %v6151
        %v6175 = vadd.f32 %v6095, %v6143
        %v6176 = vmul.f32 %v993, %v5595
        %v6177 = vmul.f32 %v993, %v5599
        %v6178 = vmul.f32 %v993, %v5603
        %v6179 = vmul.f32 %v997, %v5595
        %v6180 = vmul.f32 %v997, %v5599
        %v6181 = vmul.f32 %v997, %v5603
        %v6182 = vmul.f32 %v1001, %v5595
        %v6183 = vmul.f32 %v1001, %v5599
        %v6184 = vmul.f32 %v1001, %v5603
        %v6185 = vmul.f32 %v1005, %v5595
        %v6186 = vmul.f32 %v1005, %v5599
        %v6187 = vmul.f32 %v1005, %v5603
        %6200 = vrot.lane.b32.xlu0 %v6176, 90
        %v6201 = vpop.permute.xlu0 %6200
        %6202 = vrot.lane.b32.xlu0 %v6177, 90
        %v6203 = vpop.permute.xlu0 %6202
        %6204 = vrot.lane.b32.xlu0 %v6178, 90
        %v6205 = vpop.permute.xlu0 %6204
        %6206 = vrot.lane.b32.xlu0 %v6179, 90
        %v6207 = vpop.permute.xlu0 %6206
        %6208 = vrot.lane.b32.xlu0 %v6180, 90
        %v6209 = vpop.permute.xlu0 %6208
        %6210 = vrot.lane.b32.xlu0 %v6181, 90
        %v6211 = vpop.permute.xlu0 %6210
        %6212 = vrot.lane.b32.xlu0 %v6182, 90
        %v6213 = vpop.permute.xlu0 %6212
        %6214 = vrot.lane.b32.xlu0 %v6183, 90
        %v6215 = vpop.permute.xlu0 %6214
        %6216 = vrot.lane.b32.xlu0 %v6184, 90
        %v6217 = vpop.permute.xlu0 %6216
        %6218 = vrot.lane.b32.xlu0 %v6185, 90
        %v6219 = vpop.permute.xlu0 %6218
        %6220 = vrot.lane.b32.xlu0 %v6186, 90
        %v6221 = vpop.permute.xlu0 %6220
        %6222 = vrot.lane.b32.xlu0 %v6187, 90
        %v6223 = vpop.permute.xlu0 %6222
        %v6224 = vsel %vm1055, %v6201, %v6203
        %v6225 = vsel %vm1055, %v6203, %v6205
        %v6226 = vsel %vm1055, %v6207, %v6209
        %v6227 = vsel %vm1055, %v6209, %v6211
        %v6228 = vsel %vm1055, %v6213, %v6215
        %v6229 = vsel %vm1055, %v6215, %v6217
        %v6230 = vsel %vm1055, %v6219, %v6221
        %v6231 = vsel %vm1055, %v6221, %v6223
        %v6244 = vadd.f32 %v6164, %v6224
        %v6245 = vadd.f32 %v6165, %v6225
        %v6246 = vadd.f32 %v6166, %v6205
        %v6247 = vadd.f32 %v6167, %v6226
        %v6248 = vadd.f32 %v6168, %v6227
        %v6249 = vadd.f32 %v6169, %v6211
        %v6250 = vadd.f32 %v6170, %v6228
        %v6251 = vadd.f32 %v6171, %v6229
        %v6252 = vadd.f32 %v6172, %v6217
        %v6253 = vadd.f32 %v6173, %v6230
        %v6254 = vadd.f32 %v6174, %v6231
        %v6255 = vadd.f32 %v6175, %v6223
        %v6256 = vadd.f32 %v6244, %v1091
        %v6257 = vadd.f32 %v6245, %v1091
        %v6258 = vadd.f32 %v6246, %v1091
        %v6259 = vadd.f32 %v6247, %v1096
        %v6260 = vadd.f32 %v6248, %v1096
        %v6261 = vadd.f32 %v6249, %v1096
        %v6262 = vadd.f32 %v6250, %v1101
        %v6263 = vadd.f32 %v6251, %v1101
        %v6264 = vadd.f32 %v6252, %v1101
        %v6265 = vadd.f32 %v6253, %v1106
        %v6266 = vadd.f32 %v6254, %v1106
        %v6267 = vadd.f32 %v6255, %v1106
        %v6268 = vmax.f32 %v6256, 0.0
        %v6269 = vmax.f32 %v6257, 0.0
        %v6270 = vmax.f32 %v6258, 0.0
        %v6271 = vmax.f32 %v6259, 0.0
        %v6272 = vmax.f32 %v6260, 0.0
        %v6273 = vmax.f32 %v6261, 0.0
        %v6274 = vmax.f32 %v6262, 0.0
        %v6275 = vmax.f32 %v6263, 0.0
        %v6276 = vmax.f32 %v6264, 0.0
        %v6277 = vmax.f32 %v6265, 0.0
        %v6278 = vmax.f32 %v6266, 0.0
        %v6279 = vmax.f32 %v6267, 0.0
        %v6280 = vmul.f32 %v6268, %v1136
        %v6281 = vmul.f32 %v6269, %v1140
        %v6282 = vmul.f32 %v6270, %v1144
        %v6283 = vmul.f32 %v6271, %v1136
        %v6284 = vmul.f32 %v6272, %v1140
        %v6285 = vmul.f32 %v6273, %v1144
        %v6286 = vmul.f32 %v6274, %v1136
        %v6287 = vmul.f32 %v6275, %v1140
        %v6288 = vmul.f32 %v6276, %v1144
        %v6289 = vmul.f32 %v6277, %v1136
        %v6290 = vmul.f32 %v6278, %v1140
        %v6291 = vmul.f32 %v6279, %v1144
        %v6292 = vadd.f32 %v6280, %v6281
        %v6293 = vsel %vm1161, %v6282, 0.0
        %v6294 = vadd.f32 %v6292, %v6293
        %6295 = vadd.xlane.f32.xlu0 %v6294
        %v6296 = vpop.xlane.xlu0 %6295
        %v6297 = vadd.f32 %v6283, %v6284
        %v6298 = vsel %vm1161, %v6285, 0.0
        %v6299 = vadd.f32 %v6297, %v6298
        %6300 = vadd.xlane.f32.xlu0 %v6299
        %v6301 = vpop.xlane.xlu0 %6300
        %v6302 = vadd.f32 %v6286, %v6287
        %v6303 = vsel %vm1161, %v6288, 0.0
        %v6304 = vadd.f32 %v6302, %v6303
        %6305 = vadd.xlane.f32.xlu0 %v6304
        %v6306 = vpop.xlane.xlu0 %6305
        %v6307 = vadd.f32 %v6289, %v6290
        %v6308 = vsel %vm1161, %v6291, 0.0
        %v6309 = vadd.f32 %v6307, %v6308
        %6310 = vadd.xlane.f32.xlu0 %v6309
        %v6311 = vpop.xlane.xlu0 %6310
        %v6312 = vmul.f32 %v6296, %v260
        %v6313 = vmul.f32 %v6301, %v261
        %v6314 = vmul.f32 %v6306, %v262
        %v6315 = vmul.f32 %v6311, %v263
        %v6316 = vadd.f32 %v6312, %v6313
        %v6317 = vadd.f32 %v6316, %v6314
        %v6318 = vadd.f32 %v6317, %v6315
        %v6319 = vrot.slane %v6318, 4
        %v6320 = vadd.f32 %v6318, %v6319
        %v6321 = vrot.slane %v6320, 2
        %v6322 = vadd.f32 %v6320, %v6321
        %v6323 = vrot.slane %v6322, 1
        %v6324 = vadd.f32 %v6322, %v6323
        %vm6325 = vcmask 1040384
        %v6326 = vsel %vm6325, %v1193, %v1926
        %vm6327 = vcmask 1041408
        %v6328 = vsel %vm6327, %v6326, %v2659
        %vm6329 = vcmask 1042432
        %v6330 = vsel %vm6329, %v6328, %v3392
        %vm6331 = vcmask 1043456
        %v6332 = vsel %vm6331, %v6330, %v4125
        %vm6333 = vcmask 1044480
        %v6334 = vsel %vm6333, %v6332, %v4858
        %vm6335 = vcmask 1045504
        %v6336 = vsel %vm6335, %v6334, %v5591
        %vm6337 = vcmask 1046528
        %v6338 = vsel %vm6337, %v6336, %v6324
        %v6339 = vld [vmem:[%s5] sm:$0x1]
        %v6341 = vlaneseq
        %v6342 = vshrl.u32 %v6341, 7
        %v6343 = vsub.s32 0, %v6342
        %v6344 = vrot.slane %v6339, %v6343
        %v6346 = vadd.f32 %v6338, %v6344
        %6347 = vst [vmem:[%s244] sm:$0xff] %v6346
        %s6348 = sand.u32 %s159, 1
        %s6349 = scalar_lea.sflag [#allocation3], %s6348
        %s6350 = sand.u32 %s159, 1
        %s6351 = smul.addr %s6350, 8
        %s6352 = scalar_lea.vmem [#allocation2], %s6351
        // Predicated region
        $region45: #{tpu_custom_call.1} parent=43 // pred_check
          %p6353 = pneg %p169
        $region46: #{tpu_custom_call.1} parent=43 // pred_check_branch
          %6355 = sbr.rel (%p6353) target = $region48
        $region47: #{tpu_custom_call.1} parent=43 // pred_region
          %s6357 = ssub.s32 128, 128
          %6358 = vsyncadd %s6349, %s6357
          %s6359 = smul.addr %s20, 128
          %s6360 = scalar_lea.hbm %s6, %s6359
          %s6362 = sshll.u32 %s6352, 4
          %s6363 = int_to_ptr.vmem [resolvable:$true] %s6362
          %6365 = dma.vmem_to_hbm [thread:$0]  %s6363, 128, %s6360, %s6349
        $region48: #{tpu_custom_call.1} parent=43 // pred_fallthru
          _
      $region44: #{tpu_custom_call.1} parent=5 // pred_fallthru
        _
      %p6366 = scmp.le.s32.totalorder 2, %s15
      // Predicated region
      $region49: #{tpu_custom_call.1} parent=5 // pred_check
        %p6367 = pneg %p6366
      $region50: #{tpu_custom_call.1} parent=5 // pred_check_branch
        %6369 = sbr.rel (%p6367) target = $region52
      $region51: #{tpu_custom_call.1} parent=5 // pred_region
        %s6370 = ssub.s32 %s15, 2
        // Predicated region
        $region53: #{tpu_custom_call.1} parent=51 // pred_check
          %p6371 = pneg %p175
        $region54: #{tpu_custom_call.1} parent=51 // pred_check_branch
          %6373 = sbr.rel (%p6371) target = $region56
        $region55: #{tpu_custom_call.1} parent=51 // pred_region
          %s6374 = sand.u32 %s160, 1
          %s6375 = scalar_lea.sflag [#allocation3], %s6374
          %s6376 = sand.u32 %s160, 1
          %s6377 = smul.addr %s6376, 8
          %s6378 = scalar_lea.vmem [#allocation2], %s6377
          %6379 = dma.done %s6375, 128
        $region56: #{tpu_custom_call.1} parent=51 // pred_fallthru
          _
      $region52: #{tpu_custom_call.1} parent=5 // pred_fallthru
        _
    $region6: #{tpu_custom_call.1} parent=1 // loop_footer
      %s19 = sadd.s32 1, %s15
    $region7: #{tpu_custom_call.1} parent=1 // loop_footer_branch
      %14 = sbr.rel target = $region3
    $region8: #{tpu_custom_call.1} parent=1 // loop_exit
      _
    %6380 = vsyncpa [#allocation3], 1
    %s6381 = scalar_lea.sflag [#allocation3], 1
    %6382 = vsyncpa %s6381, 1

</llo_original>
